<compile_context>
chip_gen: v5e
topology: v5e:2x2
jax: 0.10.0
libtpu: 0.0.40
codegen_flags: <defaults>
</compile_context>

<pallas_src>
import functools
from dataclasses import dataclass

import jax
import jax.numpy as jnp
from jax.experimental import pallas as pl
from jax.experimental.pallas import tpu as pltpu


# ----------------------------- model config ------------------------------------------
@dataclass(frozen=True)
class ModelArgs:
    dim: int = 64
    inter_dim: int = 128
    n_heads: int = 4
    q_lora_rank: int = 32
    kv_lora_rank: int = 32
    qk_nope_head_dim: int = 32
    qk_rope_head_dim: int = 16
    v_head_dim: int = 32
    rope_theta: float = 10000.0
    rms_eps: float = 1e-6

    @property
    def qk_head_dim(self) -> int:
        return self.qk_nope_head_dim + self.qk_rope_head_dim


# ----------------------------- BlockSpec helpers --------------------------------------
def _full_spec(shape):
    n = len(shape)
    return pl.BlockSpec(shape, lambda b: (0,) * n)


def _row_spec(rows, cols):
    return pl.BlockSpec((rows, cols), lambda b: (b, 0))


def _bh_spec(rows, cols):
    # [B, T, n] array, one batch per grid step; last two block dims == full dims.
    return pl.BlockSpec((1, rows, cols), lambda b: (b, 0, 0))


def _rms(x, w, eps):
    ms = jnp.mean(x * x, axis=-1, keepdims=True)
    return x * jax.lax.rsqrt(ms + eps) * w


# ----------------------------- kernel A: fused MLA projections ------------------------
def _proj_kernel(x_ref, anw_ref, wa_ref, qnw_ref, wqb_ref, kvnw_ref, wkvb_ref,
                 qn_ref, qpe_ref, kn_ref, kpe_ref, v_ref, *, eps, rq, rkv):
    x = x_ref[...].astype(jnp.float32)                                   # [T, D]
    h = _rms(x, anw_ref[...].astype(jnp.float32), eps).astype(jnp.bfloat16)

    # fused "down" projection: [wq_a | wkv_a]  ->  [T, rq + rkv + rope]
    a = jnp.dot(h, wa_ref[...], preferred_element_type=jnp.float32)
    qa = a[:, :rq]
    kvc = a[:, rq:rq + rkv]
    kpe_ref[0] = a[:, rq + rkv:].astype(kpe_ref.dtype)                   # shared rope keys

    # q branch: q_norm -> wq_b
    qa = _rms(qa, qnw_ref[...].astype(jnp.float32), eps).astype(jnp.bfloat16)
    q = jnp.dot(qa, wqb_ref[...], preferred_element_type=jnp.float32)    # [T, H*(nope+rope)]
    n_qn = qn_ref.shape[-1]
    qn_ref[0] = q[:, :n_qn].astype(qn_ref.dtype)
    qpe_ref[0] = q[:, n_qn:].astype(qpe_ref.dtype)

    # kv branch: kv_norm -> wkv_b
    kvc = _rms(kvc, kvnw_ref[...].astype(jnp.float32), eps).astype(jnp.bfloat16)
    kv = jnp.dot(kvc, wkvb_ref[...], preferred_element_type=jnp.float32)  # [T, H*(nope+dv)]
    n_kn = kn_ref.shape[-1]
    kn_ref[0] = kv[:, :n_kn].astype(kn_ref.dtype)
    v_ref[0] = kv[:, n_kn:].astype(v_ref.dtype)


# ----------------------------- kernel B: attention + wo + residual --------------------
def _attn_kernel(qn_ref, qpe_ref, kn_ref, kpe_ref, v_ref, cos_ref, sin_ref,
                 res_ref, wo_ref, o_ref, *, n_heads, nope, rope, v_dim, scale):
    T = res_ref.shape[0]
    half = rope // 2
    cos = cos_ref[...]                                                   # [T, rope//2] f32
    sin = sin_ref[...]

    def rotate(pe):  # rotary in de-interleaved (even|odd) layout == rotate-half
        e, o = pe[:, :half], pe[:, half:]
        return jnp.concatenate([e * cos - o * sin, e * sin + o * cos], axis=-1)

    k_pe = rotate(kpe_ref[0].astype(jnp.float32)).astype(jnp.bfloat16)   # [T, rope], shared

    row = jax.lax.broadcasted_iota(jnp.int32, (T, T), 0)
    col = jax.lax.broadcasted_iota(jnp.int32, (T, T), 1)
    causal = col <= row                                                  # in-kernel causal mask

    qn = qn_ref[0]                                                       # [T, H*nope] bf16
    kn = kn_ref[0]
    qpe = qpe_ref[0].astype(jnp.float32)                                 # [T, H*rope]
    v = v_ref[0]                                                         # [T, H*v_dim] bf16

    heads = []
    for h in range(n_heads):
        qn_h = qn[:, h * nope:(h + 1) * nope]
        kn_h = kn[:, h * nope:(h + 1) * nope]
        qpe_h = rotate(qpe[:, h * rope:(h + 1) * rope]).astype(jnp.bfloat16)
        s = jax.lax.dot_general(qn_h, kn_h, (((1,), (1,)), ((), ())),
                                preferred_element_type=jnp.float32)
        s = s + jax.lax.dot_general(qpe_h, k_pe, (((1,), (1,)), ((), ())),
                                    preferred_element_type=jnp.float32)
        s = jnp.where(causal, s * scale, -1e30)
        m = jnp.max(s, axis=-1, keepdims=True)
        p = jnp.exp(s - m)
        p = p * pl.reciprocal(jnp.sum(p, axis=-1, keepdims=True), approx=True)
        heads.append(jnp.dot(p.astype(jnp.bfloat16), v[:, h * v_dim:(h + 1) * v_dim],
                             preferred_element_type=jnp.float32))
    o = jnp.concatenate(heads, axis=-1).astype(jnp.bfloat16)             # [T, H*v_dim] lane-dense
    y = jnp.dot(o, wo_ref[...], preferred_element_type=jnp.float32)      # wo projection
    o_ref[...] = res_ref[...] + y                                        # residual add in f32


# ----------------------------- kernel C: ffn_norm + MLP + residual --------------------
def _ffn_kernel(x_ref, fnw_ref, w1_ref, w3_ref, w2_ref, o_ref, *, eps):
    x = x_ref[...]                                                       # f32 [T, D]
    h = _rms(x, fnw_ref[...].astype(jnp.float32), eps).astype(jnp.bfloat16)
    h1 = jnp.dot(h, w1_ref[...], preferred_element_type=jnp.float32)
    h3 = jnp.dot(h, w3_ref[...], preferred_element_type=jnp.float32)
    g = (h1 * jax.nn.sigmoid(h1)) * h3                                   # silu(w1 x) * w3 x
    y = jnp.dot(g.astype(jnp.bfloat16), w2_ref[...], preferred_element_type=jnp.float32)
    o_ref[...] = x + y                                                   # residual add in f32


# ----------------------------- weight preprocessing (one-time) ------------------------
def preprocess_params(p, cfg: ModelArgs):
    H, nope, rope, dv = cfg.n_heads, cfg.qk_nope_head_dim, cfg.qk_rope_head_dim, cfg.v_head_dim
    rq, rkv = cfg.q_lora_rank, cfg.kv_lora_rank
    dq = nope + rope
    half = rope // 2

    def deint(base):  # de-interleave rope pairs: even original indices first, then odd
        return [base + 2 * j for j in range(half)] + [base + 2 * j + 1 for j in range(half)]

    # wq_b: all heads' nope columns first, then all heads' (de-interleaved) rope columns.
    q_perm = [h * dq + j for h in range(H) for j in range(nope)]
    for h in range(H):
        q_perm += deint(h * dq + nope)
    # wkv_a: kv_c columns unchanged, rope columns de-interleaved.
    kva_perm = list(range(rkv)) + deint(rkv)
    # wkv_b: all heads' k_nope columns first, then all heads' v columns.
    kvb_perm = [h * (nope + dv) + j for h in range(H) for j in range(nope)]
    kvb_perm += [h * (nope + dv) + nope + j for h in range(H) for j in range(dv)]

    bf16 = jnp.bfloat16
    wkv_a = p["wkv_a"][:, jnp.asarray(kva_perm)]
    return dict(
        attn_norm_w=p["attn_norm_w"].reshape(1, -1),
        ffn_norm_w=p["ffn_norm_w"].reshape(1, -1),
        q_norm_w=p["q_norm_w"].reshape(1, -1),
        kv_norm_w=p["kv_norm_w"].reshape(1, -1),
        w_a=jnp.concatenate([p["wq_a"], wkv_a], axis=1).astype(bf16),    # fused [D, rq+rkv+rope]
        wq_b=p["wq_b"][:, jnp.asarray(q_perm)].astype(bf16),
        wkv_b=p["wkv_b"][:, jnp.asarray(kvb_perm)].astype(bf16),
        wo=p["wo"].astype(bf16),
        w1=p["w1"].astype(bf16),
        w2=p["w2"].astype(bf16),
        w3=p["w3"].astype(bf16),
    )


# ----------------------------- Block forward (Pallas path) ----------------------------
def block_forward(x, pp, cos, sin, cfg: ModelArgs):
    B, T, D = x.shape
    H = cfg.n_heads
    nope, rope, dv = cfg.qk_nope_head_dim, cfg.qk_rope_head_dim, cfg.v_head_dim
    rq, rkv = cfg.q_lora_rank, cfg.kv_lora_rank
    M = B * T
    x2d = x.reshape(M, D)
    w_down = rq + rkv + rope

    # ---- A: fused MLA projections --------------------------------------------------
    q_nope, q_pe, k_nope, k_pe, v = pl.pallas_call(
        functools.partial(_proj_kernel, eps=cfg.rms_eps, rq=rq, rkv=rkv),
        out_shape=(
            jax.ShapeDtypeStruct((B, T, H * nope), jnp.bfloat16),
            jax.ShapeDtypeStruct((B, T, H * rope), jnp.bfloat16),
            jax.ShapeDtypeStruct((B, T, H * nope), jnp.bfloat16),
            jax.ShapeDtypeStruct((B, T, rope), jnp.bfloat16),
            jax.ShapeDtypeStruct((B, T, H * dv), jnp.bfloat16),
        ),
        grid=(B,),
        in_specs=[
            _row_spec(T, D),
            _full_spec((1, D)),
            _full_spec((D, w_down)),
            _full_spec((1, rq)),
            _full_spec((rq, H * (nope + rope))),
            _full_spec((1, rkv)),
            _full_spec((rkv, H * (nope + dv))),
        ],
        out_specs=(
            _bh_spec(T, H * nope), _bh_spec(T, H * rope),
            _bh_spec(T, H * nope), _bh_spec(T, rope), _bh_spec(T, H * dv),
        ),
        compiler_params=pltpu.CompilerParams(dimension_semantics=("parallel",)),
        cost_estimate=pl.CostEstimate(
            flops=int(2 * M * (D * w_down + rq * H * (nope + rope) + rkv * H * (nope + dv))),
            transcendentals=int(3 * M),
            bytes_accessed=int(4 * M * D
                               + 2 * (D * w_down + rq * H * (nope + rope) + rkv * H * (nope + dv))
                               + 2 * M * (2 * H * nope + H * rope + rope + H * dv)),
        ),
    )(x2d, pp["attn_norm_w"], pp["w_a"], pp["q_norm_w"], pp["wq_b"],
      pp["kv_norm_w"], pp["wkv_b"])

    # ---- B: attention (rope + causal softmax) + wo + residual ----------------------
    scale = float(cfg.qk_head_dim) ** -0.5
    x_attn = pl.pallas_call(
        functools.partial(_attn_kernel, n_heads=H, nope=nope, rope=rope,
                          v_dim=dv, scale=scale),
        out_shape=jax.ShapeDtypeStruct((M, D), jnp.float32),
        grid=(B,),
        in_specs=[
            _bh_spec(T, H * nope), _bh_spec(T, H * rope),
            _bh_spec(T, H * nope), _bh_spec(T, rope), _bh_spec(T, H * dv),
            _full_spec((T, rope // 2)), _full_spec((T, rope // 2)),
            _row_spec(T, D), _full_spec((H * dv, D)),
        ],
        out_specs=_row_spec(T, D),
        compiler_params=pltpu.CompilerParams(dimension_semantics=("parallel",)),
        cost_estimate=pl.CostEstimate(
            flops=int(2 * B * H * T * T * (nope + rope + dv) + 2 * M * H * dv * D),
            transcendentals=int(B * H * T * (T + 1)),
            bytes_accessed=int(2 * M * (2 * H * nope + H * rope + rope + H * dv)
                               + 2 * H * dv * D + 8 * M * D + 4 * T * rope),
        ),
    )(q_nope, q_pe, k_nope, k_pe, v, cos, sin, x2d, pp["wo"])

    # ---- C: ffn_norm + MLP + residual ----------------------------------------------
    inter = pp["w1"].shape[1]
    out2d = pl.pallas_call(
        functools.partial(_ffn_kernel, eps=cfg.rms_eps),
        out_shape=jax.ShapeDtypeStruct((M, D), jnp.float32),
        grid=(B,),
        in_specs=[
            _row_spec(T, D), _full_spec((1, D)),
            _full_spec((D, inter)), _full_spec((D, inter)), _full_spec((inter, D)),
        ],
        out_specs=_row_spec(T, D),
        compiler_params=pltpu.CompilerParams(dimension_semantics=("parallel",)),
        cost_estimate=pl.CostEstimate(
            flops=int(6 * M * D * inter),
            transcendentals=int(M * (inter + 1)),
            bytes_accessed=int(8 * M * D + 6 * D * inter + 4 * D),
        ),
    )(x_attn, pp["ffn_norm_w"], pp["w1"], pp["w3"], pp["w2"])

    return out2d.reshape(B, T, D)


# ----------------------------- rotary / params glue -----------------------------------
def precompute_freqs(rope_dim, seqlen, theta):
    inv = 1.0 / (theta ** (jnp.arange(0, rope_dim, 2, dtype=jnp.float32) / rope_dim))
    t = jnp.arange(seqlen, dtype=jnp.float32)
    freqs = jnp.outer(t, inv)                              # [T, rope_dim//2]
    return jnp.cos(freqs), jnp.sin(freqs)


def apply_rotary(x, cos, sin):
    # x: [B, T, H, rope_dim]; interleaved complex pairs (reference semantics)
    B, T, H, Dr = x.shape
    xr = x.reshape(B, T, H, Dr // 2, 2)
    x0, x1 = xr[..., 0], xr[..., 1]
    c = cos[None, :, None, :]
    s = sin[None, :, None, :]
    o0 = x0 * c - x1 * s
    o1 = x0 * s + x1 * c
    return jnp.stack([o0, o1], axis=-1).reshape(B, T, H, Dr)


def init_params(key, cfg: ModelArgs):
    ks = jax.random.split(key, 8)
    std = 0.02

    def w(k, shape):
        return jax.random.normal(k, shape, jnp.float32) * std

    return dict(
        attn_norm_w=jnp.ones((cfg.dim,), jnp.float32),
        ffn_norm_w=jnp.ones((cfg.dim,), jnp.float32),
        wq_a=w(ks[0], (cfg.dim, cfg.q_lora_rank)),
        q_norm_w=jnp.ones((cfg.q_lora_rank,), jnp.float32),
        wq_b=w(ks[1], (cfg.q_lora_rank, cfg.n_heads * cfg.qk_head_dim)),
        wkv_a=w(ks[2], (cfg.dim, cfg.kv_lora_rank + cfg.qk_rope_head_dim)),
        kv_norm_w=jnp.ones((cfg.kv_lora_rank,), jnp.float32),
        wkv_b=w(ks[3], (cfg.kv_lora_rank,
                        cfg.n_heads * (cfg.qk_nope_head_dim + cfg.v_head_dim))),
        wo=w(ks[4], (cfg.n_heads * cfg.v_head_dim, cfg.dim)),
        w1=w(ks[5], (cfg.dim, cfg.inter_dim)),
        w2=w(ks[6], (cfg.inter_dim, cfg.dim)),
        w3=w(ks[7], (cfg.dim, cfg.inter_dim)),
    )


# ----------------------------- pure-JAX reference --------------------------------------
def block_reference(x, p, cos, sin, mask, cfg: ModelArgs):
    eps = cfg.rms_eps

    def rms(a, w):
        ms = jnp.mean(a * a, axis=-1, keepdims=True)
        return a * jax.lax.rsqrt(ms + eps) * w

    B, T, D = x.shape
    H = cfg.n_heads
    h = rms(x, p["attn_norm_w"])
    q = rms(h @ p["wq_a"], p["q_norm_w"]) @ p["wq_b"]
    q = q.reshape(B, T, H, cfg.qk_head_dim)
    q_nope = q[..., : cfg.qk_nope_head_dim]
    q_pe = apply_rotary(q[..., cfg.qk_nope_head_dim:], cos, sin)
    kv_a = h @ p["wkv_a"]
    kv_c, k_pe_in = kv_a[..., : cfg.kv_lora_rank], kv_a[..., cfg.kv_lora_rank:]
    k_pe = apply_rotary(k_pe_in[:, :, None, :], cos, sin)
    kv = (rms(kv_c, p["kv_norm_w"]) @ p["wkv_b"]).reshape(
        B, T, H, cfg.qk_nope_head_dim + cfg.v_head_dim
    )
    k_nope, v = kv[..., : cfg.qk_nope_head_dim], kv[..., cfg.qk_nope_head_dim:]
    qf = jnp.concatenate([q_nope, q_pe], -1)
    kf = jnp.concatenate(
        [k_nope, jnp.broadcast_to(k_pe, (B, T, H, cfg.qk_rope_head_dim))], -1
    )
    scale = cfg.qk_head_dim ** -0.5
    scores = jnp.einsum("bshd,bthd->bsht", qf, kf) * scale + mask[:, None, :]
    attnw = jax.nn.softmax(scores, axis=-1)
    o = jnp.einsum("bsht,bthd->bshd", attnw, v).reshape(B, T, H * cfg.v_head_dim)
    xa = x + o @ p["wo"]
    h2 = rms(xa, p["ffn_norm_w"])
    return xa + (jax.nn.silu(h2 @ p["w1"]) * (h2 @ p["w3"])) @ p["w2"]


# ----------------------------- main ----------------------------------------------------
if __name__ == "__main__":
    cfg = ModelArgs()
    B, T = 2, 8

    key = jax.random.PRNGKey(0)
    kx, kp = jax.random.split(key)
    x = jax.random.normal(kx, (B, T, cfg.dim), jnp.float32)
    params = init_params(kp, cfg)
    pp = preprocess_params(params, cfg)          # one-time weight permutation + bf16 cast
    cos, sin = precompute_freqs(cfg.qk_rope_head_dim, T, cfg.rope_theta)

    fwd = jax.jit(lambda xx, pr, c, s: block_forward(xx, pr, c, s, cfg))
    out = jax.block_until_ready(fwd(x, pp, cos, sin))

    rows = jnp.arange(T)
    mask = jnp.where(rows[None, :] > rows[:, None], -jnp.inf, 0.0).astype(jnp.float32)
    with jax.default_matmul_precision("float32"):
        ref = jax.block_until_ready(block_reference(x, params, cos, sin, mask, cfg))

    assert out.shape == x.shape and out.dtype == jnp.float32
    assert bool(jnp.isfinite(out).all())
    max_err = float(jnp.max(jnp.abs(out - ref)))
    assert max_err < 5e-3, f"mismatch vs f32 reference: {max_err}"
    print("KERNEL_OK")
</pallas_src>

<mosaic_0001>
module attributes {stable_mosaic.version = 11 : i64} {
  func.func @_ffn_kernel(%arg0: i32, %arg1: memref<8x64xf32, #tpu.memory_space<vmem>>, %arg2: memref<1x64xf32, #tpu.memory_space<vmem>>, %arg3: memref<64x128xbf16, #tpu.memory_space<vmem>>, %arg4: memref<64x128xbf16, #tpu.memory_space<vmem>>, %arg5: memref<128x64xbf16, #tpu.memory_space<vmem>>, %arg6: memref<8x64xf32, #tpu.memory_space<vmem>>) attributes {dimension_semantics = [#tpu.dimension_semantics<parallel>], iteration_bounds = array<i64: 2>, scalar_prefetch = 0 : i64, scratch_operands = 0 : i64, tpu.core_type = #tpu.core_type<tc>, window_params = [{transform_indices = @transform_0, window_bounds = array<i64: 8, 64>}, {pipeline_mode = #tpu.pipeline_mode<synchronous>, transform_indices = @transform_1, window_bounds = array<i64: 1, 64>}, {pipeline_mode = #tpu.pipeline_mode<synchronous>, transform_indices = @transform_2, window_bounds = array<i64: 64, 128>}, {pipeline_mode = #tpu.pipeline_mode<synchronous>, transform_indices = @transform_3, window_bounds = array<i64: 64, 128>}, {pipeline_mode = #tpu.pipeline_mode<synchronous>, transform_indices = @transform_4, window_bounds = array<i64: 128, 64>}, {transform_indices = @transform_5, window_bounds = array<i64: 8, 64>}]} {
    %c0 = arith.constant 0 : index
    %c0_0 = arith.constant 0 : index
    %0 = vector.load %arg1[%c0, %c0_0] : memref<8x64xf32, #tpu.memory_space<vmem>>, vector<8x64xf32>
    %c0_1 = arith.constant 0 : index
    %c0_2 = arith.constant 0 : index
    %1 = vector.load %arg2[%c0_1, %c0_2] : memref<1x64xf32, #tpu.memory_space<vmem>>, vector<1x64xf32>
    %2 = arith.mulf %0, %0 : vector<8x64xf32>
    %cst = arith.constant dense<0.000000e+00> : vector<8xf32>
    %3 = vector.multi_reduction <add>, %2, %cst [1] : vector<8x64xf32> to vector<8xf32>
    %4 = vector.shape_cast %3 : vector<8xf32> to vector<8x1xf32>
    %cst_3 = arith.constant 6.400000e+01 : f32
    %5 = vector.broadcast %cst_3 : f32 to vector<8x1xf32>
    %6 = arith.divf %4, %5 : vector<8x1xf32>
    %cst_4 = arith.constant 9.99999997E-7 : f32
    %7 = vector.broadcast %cst_4 : f32 to vector<8x1xf32>
    %8 = arith.addf %6, %7 : vector<8x1xf32>
    %9 = math.rsqrt %8 : vector<8x1xf32>
    %10 = vector.broadcast %9 : vector<8x1xf32> to vector<8x64xf32>
    %11 = arith.mulf %0, %10 : vector<8x64xf32>
    %12 = vector.broadcast %1 : vector<1x64xf32> to vector<8x64xf32>
    %13 = arith.mulf %11, %12 : vector<8x64xf32>
    %14 = arith.truncf %13 : vector<8x64xf32> to vector<8x64xbf16>
    %c0_5 = arith.constant 0 : index
    %c0_6 = arith.constant 0 : index
    %15 = vector.load %arg3[%c0_5, %c0_6] : memref<64x128xbf16, #tpu.memory_space<vmem>>, vector<64x128xbf16>
    %cst_7 = arith.constant dense<0.000000e+00> : vector<8x128xf32>
    %16 = tpu.matmul %14, %15, %cst_7 {dimension_numbers = #tpu.dot_dimension_numbers<[1], [0], [0], [1], [0, 0, 1, 1], [], []>} : vector<8x64xbf16>, vector<64x128xbf16>, vector<8x128xf32> -> vector<8x128xf32>
    %c0_8 = arith.constant 0 : index
    %c0_9 = arith.constant 0 : index
    %17 = vector.load %arg4[%c0_8, %c0_9] : memref<64x128xbf16, #tpu.memory_space<vmem>>, vector<64x128xbf16>
    %cst_10 = arith.constant dense<0.000000e+00> : vector<8x128xf32>
    %18 = tpu.matmul %14, %17, %cst_10 {dimension_numbers = #tpu.dot_dimension_numbers<[1], [0], [0], [1], [0, 0, 1, 1], [], []>} : vector<8x64xbf16>, vector<64x128xbf16>, vector<8x128xf32> -> vector<8x128xf32>
    %19 = arith.negf %16 : vector<8x128xf32>
    %20 = math.exp %19 : vector<8x128xf32>
    %cst_11 = arith.constant 1.000000e+00 : f32
    %21 = vector.broadcast %cst_11 : f32 to vector<8x128xf32>
    %22 = arith.addf %21, %20 : vector<8x128xf32>
    %23 = arith.divf %21, %22 : vector<8x128xf32>
    %24 = arith.mulf %16, %23 : vector<8x128xf32>
    %25 = arith.mulf %24, %18 : vector<8x128xf32>
    %26 = arith.truncf %25 : vector<8x128xf32> to vector<8x128xbf16>
    %c0_12 = arith.constant 0 : index
    %c0_13 = arith.constant 0 : index
    %27 = vector.load %arg5[%c0_12, %c0_13] : memref<128x64xbf16, #tpu.memory_space<vmem>>, vector<128x64xbf16>
    %cst_14 = arith.constant dense<0.000000e+00> : vector<8x64xf32>
    %28 = tpu.matmul %26, %27, %cst_14 {dimension_numbers = #tpu.dot_dimension_numbers<[1], [0], [0], [1], [0, 0, 1, 1], [], []>} : vector<8x128xbf16>, vector<128x64xbf16>, vector<8x64xf32> -> vector<8x64xf32>
    %29 = arith.addf %0, %28 : vector<8x64xf32>
    %c0_15 = arith.constant 0 : index
    %c0_16 = arith.constant 0 : index
    %30 = vector.load %arg6[%c0_15, %c0_16] : memref<8x64xf32, #tpu.memory_space<vmem>>, vector<8x64xf32>
    tpu.vector_store %arg6[%c0_15, %c0_16], %29 {strides = array<i32>} : memref<8x64xf32, #tpu.memory_space<vmem>>, vector<8x64xf32>,
    return
  }
  func.func @transform_0(%arg0: i32) -> (i32, i32) {
    %c0_i32 = arith.constant 0 : i32
    %c0_i32_0 = arith.constant 0 : i32
    return %arg0, %c0_i32 : i32, i32
  }
  func.func @transform_1(%arg0: i32) -> (i32, i32) {
    %c0_i32 = arith.constant 0 : i32
    %c0_i32_0 = arith.constant 0 : i32
    %c0_i32_1 = arith.constant 0 : i32
    return %c0_i32, %c0_i32_0 : i32, i32
  }
  func.func @transform_2(%arg0: i32) -> (i32, i32) {
    %c0_i32 = arith.constant 0 : i32
    %c0_i32_0 = arith.constant 0 : i32
    %c0_i32_1 = arith.constant 0 : i32
    return %c0_i32, %c0_i32_0 : i32, i32
  }
  func.func @transform_3(%arg0: i32) -> (i32, i32) {
    %c0_i32 = arith.constant 0 : i32
    %c0_i32_0 = arith.constant 0 : i32
    %c0_i32_1 = arith.constant 0 : i32
    return %c0_i32, %c0_i32_0 : i32, i32
  }
  func.func @transform_4(%arg0: i32) -> (i32, i32) {
    %c0_i32 = arith.constant 0 : i32
    %c0_i32_0 = arith.constant 0 : i32
    %c0_i32_1 = arith.constant 0 : i32
    return %c0_i32, %c0_i32_0 : i32, i32
  }
  func.func @transform_5(%arg0: i32) -> (i32, i32) {
    %c0_i32 = arith.constant 0 : i32
    %c0_i32_0 = arith.constant 0 : i32
    return %arg0, %c0_i32 : i32, i32
  }
}

module attributes {stable_mosaic.version = 11 : i64} {
  func.func @_proj_kernel(%arg0: i32, %arg1: memref<8x64xf32, #tpu.memory_space<vmem>>, %arg2: memref<1x64xf32, #tpu.memory_space<vmem>>, %arg3: memref<64x80xbf16, #tpu.memory_space<vmem>>, %arg4: memref<1x32xf32, #tpu.memory_space<vmem>>, %arg5: memref<32x192xbf16, #tpu.memory_space<vmem>>, %arg6: memref<1x32xf32, #tpu.memory_space<vmem>>, %arg7: memref<32x256xbf16, #tpu.memory_space<vmem>>, %arg8: memref<1x8x128xbf16, #tpu.memory_space<vmem>>, %arg9: memref<1x8x64xbf16, #tpu.memory_space<vmem>>, %arg10: memref<1x8x128xbf16, #tpu.memory_space<vmem>>, %arg11: memref<1x8x16xbf16, #tpu.memory_space<vmem>>, %arg12: memref<1x8x128xbf16, #tpu.memory_space<vmem>>) attributes {dimension_semantics = [#tpu.dimension_semantics<parallel>], iteration_bounds = array<i64: 2>, scalar_prefetch = 0 : i64, scratch_operands = 0 : i64, tpu.core_type = #tpu.core_type<tc>, window_params = [{transform_indices = @transform_0, window_bounds = array<i64: 8, 64>}, {pipeline_mode = #tpu.pipeline_mode<synchronous>, transform_indices = @transform_1, window_bounds = array<i64: 1, 64>}, {pipeline_mode = #tpu.pipeline_mode<synchronous>, transform_indices = @transform_2, window_bounds = array<i64: 64, 80>}, {pipeline_mode = #tpu.pipeline_mode<synchronous>, transform_indices = @transform_3, window_bounds = array<i64: 1, 32>}, {pipeline_mode = #tpu.pipeline_mode<synchronous>, transform_indices = @transform_4, window_bounds = array<i64: 32, 192>}, {pipeline_mode = #tpu.pipeline_mode<synchronous>, transform_indices = @transform_5, window_bounds = array<i64: 1, 32>}, {pipeline_mode = #tpu.pipeline_mode<synchronous>, transform_indices = @transform_6, window_bounds = array<i64: 32, 256>}, {transform_indices = @transform_7, window_bounds = array<i64: 1, 8, 128>}, {transform_indices = @transform_8, window_bounds = array<i64: 1, 8, 64>}, {transform_indices = @transform_9, window_bounds = array<i64: 1, 8, 128>}, {transform_indices = @transform_10, window_bounds = array<i64: 1, 8, 16>}, {transform_indices = @transform_11, window_bounds = array<i64: 1, 8, 128>}]} {
    %c0 = arith.constant 0 : index
    %c0_0 = arith.constant 0 : index
    %0 = vector.load %arg1[%c0, %c0_0] : memref<8x64xf32, #tpu.memory_space<vmem>>, vector<8x64xf32>
    %c0_1 = arith.constant 0 : index
    %c0_2 = arith.constant 0 : index
    %1 = vector.load %arg2[%c0_1, %c0_2] : memref<1x64xf32, #tpu.memory_space<vmem>>, vector<1x64xf32>
    %2 = arith.mulf %0, %0 : vector<8x64xf32>
    %cst = arith.constant dense<0.000000e+00> : vector<8xf32>
    %3 = vector.multi_reduction <add>, %2, %cst [1] : vector<8x64xf32> to vector<8xf32>
    %4 = vector.shape_cast %3 : vector<8xf32> to vector<8x1xf32>
    %cst_3 = arith.constant 6.400000e+01 : f32
    %5 = vector.broadcast %cst_3 : f32 to vector<8x1xf32>
    %6 = arith.divf %4, %5 : vector<8x1xf32>
    %cst_4 = arith.constant 9.99999997E-7 : f32
    %7 = vector.broadcast %cst_4 : f32 to vector<8x1xf32>
    %8 = arith.addf %6, %7 : vector<8x1xf32>
    %9 = math.rsqrt %8 : vector<8x1xf32>
    %10 = vector.broadcast %9 : vector<8x1xf32> to vector<8x64xf32>
    %11 = arith.mulf %0, %10 : vector<8x64xf32>
    %12 = vector.broadcast %1 : vector<1x64xf32> to vector<8x64xf32>
    %13 = arith.mulf %11, %12 : vector<8x64xf32>
    %14 = arith.truncf %13 : vector<8x64xf32> to vector<8x64xbf16>
    %c0_5 = arith.constant 0 : index
    %c0_6 = arith.constant 0 : index
    %15 = vector.load %arg3[%c0_5, %c0_6] : memref<64x80xbf16, #tpu.memory_space<vmem>>, vector<64x80xbf16>
    %cst_7 = arith.constant dense<0.000000e+00> : vector<8x80xf32>
    %16 = tpu.matmul %14, %15, %cst_7 {dimension_numbers = #tpu.dot_dimension_numbers<[1], [0], [0], [1], [0, 0, 1, 1], [], []>} : vector<8x64xbf16>, vector<64x80xbf16>, vector<8x80xf32> -> vector<8x80xf32>
    %17 = vector.extract_strided_slice %16 {offsets = [0, 0], sizes = [8, 32], strides = [1, 1]} : vector<8x80xf32> to vector<8x32xf32>
    %18 = vector.extract_strided_slice %16 {offsets = [0, 32], sizes = [8, 32], strides = [1, 1]} : vector<8x80xf32> to vector<8x32xf32>
    %19 = vector.extract_strided_slice %16 {offsets = [0, 64], sizes = [8, 16], strides = [1, 1]} : vector<8x80xf32> to vector<8x16xf32>
    %20 = arith.truncf %19 : vector<8x16xf32> to vector<8x16xbf16>
    %c0_8 = arith.constant 0 : index
    %c0_9 = arith.constant 0 : index
    %c0_10 = arith.constant 0 : index
    %21 = vector.load %arg11[%c0_8, %c0_9, %c0_10] : memref<1x8x16xbf16, #tpu.memory_space<vmem>>, vector<1x8x16xbf16>
    %22 = vector.shape_cast %21 : vector<1x8x16xbf16> to vector<8x16xbf16>
    %23 = vector.shape_cast %20 : vector<8x16xbf16> to vector<1x8x16xbf16>
    tpu.vector_store %arg11[%c0_8, %c0_9, %c0_10], %23 {strides = array<i32>} : memref<1x8x16xbf16, #tpu.memory_space<vmem>>, vector<1x8x16xbf16>,
    %c0_11 = arith.constant 0 : index
    %c0_12 = arith.constant 0 : index
    %24 = vector.load %arg4[%c0_11, %c0_12] : memref<1x32xf32, #tpu.memory_space<vmem>>, vector<1x32xf32>
    %25 = arith.mulf %17, %17 : vector<8x32xf32>
    %cst_13 = arith.constant dense<0.000000e+00> : vector<8xf32>
    %26 = vector.multi_reduction <add>, %25, %cst_13 [1] : vector<8x32xf32> to vector<8xf32>
    %27 = vector.shape_cast %26 : vector<8xf32> to vector<8x1xf32>
    %cst_14 = arith.constant 3.200000e+01 : f32
    %28 = vector.broadcast %cst_14 : f32 to vector<8x1xf32>
    %29 = arith.divf %27, %28 : vector<8x1xf32>
    %cst_15 = arith.constant 9.99999997E-7 : f32
    %30 = vector.broadcast %cst_15 : f32 to vector<8x1xf32>
    %31 = arith.addf %29, %30 : vector<8x1xf32>
    %32 = math.rsqrt %31 : vector<8x1xf32>
    %33 = vector.broadcast %32 : vector<8x1xf32> to vector<8x32xf32>
    %34 = arith.mulf %17, %33 : vector<8x32xf32>
    %35 = vector.broadcast %24 : vector<1x32xf32> to vector<8x32xf32>
    %36 = arith.mulf %34, %35 : vector<8x32xf32>
    %37 = arith.truncf %36 : vector<8x32xf32> to vector<8x32xbf16>
    %c0_16 = arith.constant 0 : index
    %c0_17 = arith.constant 0 : index
    %38 = vector.load %arg5[%c0_16, %c0_17] : memref<32x192xbf16, #tpu.memory_space<vmem>>, vector<32x192xbf16>
    %cst_18 = arith.constant dense<0.000000e+00> : vector<8x192xf32>
    %39 = tpu.matmul %37, %38, %cst_18 {dimension_numbers = #tpu.dot_dimension_numbers<[1], [0], [0], [1], [0, 0, 1, 1], [], []>} : vector<8x32xbf16>, vector<32x192xbf16>, vector<8x192xf32> -> vector<8x192xf32>
    %40 = vector.extract_strided_slice %39 {offsets = [0, 0], sizes = [8, 128], strides = [1, 1]} : vector<8x192xf32> to vector<8x128xf32>
    %41 = arith.truncf %40 : vector<8x128xf32> to vector<8x128xbf16>
    %c0_19 = arith.constant 0 : index
    %c0_20 = arith.constant 0 : index
    %c0_21 = arith.constant 0 : index
    %42 = vector.load %arg8[%c0_19, %c0_20, %c0_21] : memref<1x8x128xbf16, #tpu.memory_space<vmem>>, vector<1x8x128xbf16>
    %43 = vector.shape_cast %42 : vector<1x8x128xbf16> to vector<8x128xbf16>
    %44 = vector.shape_cast %41 : vector<8x128xbf16> to vector<1x8x128xbf16>
    tpu.vector_store %arg8[%c0_19, %c0_20, %c0_21], %44 {strides = array<i32>} : memref<1x8x128xbf16, #tpu.memory_space<vmem>>, vector<1x8x128xbf16>,
    %45 = vector.extract_strided_slice %39 {offsets = [0, 128], sizes = [8, 64], strides = [1, 1]} : vector<8x192xf32> to vector<8x64xf32>
    %46 = arith.truncf %45 : vector<8x64xf32> to vector<8x64xbf16>
    %c0_22 = arith.constant 0 : index
    %c0_23 = arith.constant 0 : index
    %c0_24 = arith.constant 0 : index
    %47 = vector.load %arg9[%c0_22, %c0_23, %c0_24] : memref<1x8x64xbf16, #tpu.memory_space<vmem>>, vector<1x8x64xbf16>
    %48 = vector.shape_cast %47 : vector<1x8x64xbf16> to vector<8x64xbf16>
    %49 = vector.shape_cast %46 : vector<8x64xbf16> to vector<1x8x64xbf16>
    tpu.vector_store %arg9[%c0_22, %c0_23, %c0_24], %49 {strides = array<i32>} : memref<1x8x64xbf16, #tpu.memory_space<vmem>>, vector<1x8x64xbf16>,
    %c0_25 = arith.constant 0 : index
    %c0_26 = arith.constant 0 : index
    %50 = vector.load %arg6[%c0_25, %c0_26] : memref<1x32xf32, #tpu.memory_space<vmem>>, vector<1x32xf32>
    %51 = arith.mulf %18, %18 : vector<8x32xf32>
    %cst_27 = arith.constant dense<0.000000e+00> : vector<8xf32>
    %52 = vector.multi_reduction <add>, %51, %cst_27 [1] : vector<8x32xf32> to vector<8xf32>
    %53 = vector.shape_cast %52 : vector<8xf32> to vector<8x1xf32>
    %cst_28 = arith.constant 3.200000e+01 : f32
    %54 = vector.broadcast %cst_28 : f32 to vector<8x1xf32>
    %55 = arith.divf %53, %54 : vector<8x1xf32>
    %cst_29 = arith.constant 9.99999997E-7 : f32
    %56 = vector.broadcast %cst_29 : f32 to vector<8x1xf32>
    %57 = arith.addf %55, %56 : vector<8x1xf32>
    %58 = math.rsqrt %57 : vector<8x1xf32>
    %59 = vector.broadcast %58 : vector<8x1xf32> to vector<8x32xf32>
    %60 = arith.mulf %18, %59 : vector<8x32xf32>
    %61 = vector.broadcast %50 : vector<1x32xf32> to vector<8x32xf32>
    %62 = arith.mulf %60, %61 : vector<8x32xf32>
    %63 = arith.truncf %62 : vector<8x32xf32> to vector<8x32xbf16>
    %c0_30 = arith.constant 0 : index
    %c0_31 = arith.constant 0 : index
    %64 = vector.load %arg7[%c0_30, %c0_31] : memref<32x256xbf16, #tpu.memory_space<vmem>>, vector<32x256xbf16>
    %cst_32 = arith.constant dense<0.000000e+00> : vector<8x256xf32>
    %65 = tpu.matmul %63, %64, %cst_32 {dimension_numbers = #tpu.dot_dimension_numbers<[1], [0], [0], [1], [0, 0, 1, 1], [], []>} : vector<8x32xbf16>, vector<32x256xbf16>, vector<8x256xf32> -> vector<8x256xf32>
    %66 = vector.extract_strided_slice %65 {offsets = [0, 0], sizes = [8, 128], strides = [1, 1]} : vector<8x256xf32> to vector<8x128xf32>
    %67 = arith.truncf %66 : vector<8x128xf32> to vector<8x128xbf16>
    %c0_33 = arith.constant 0 : index
    %c0_34 = arith.constant 0 : index
    %c0_35 = arith.constant 0 : index
    %68 = vector.load %arg10[%c0_33, %c0_34, %c0_35] : memref<1x8x128xbf16, #tpu.memory_space<vmem>>, vector<1x8x128xbf16>
    %69 = vector.shape_cast %68 : vector<1x8x128xbf16> to vector<8x128xbf16>
    %70 = vector.shape_cast %67 : vector<8x128xbf16> to vector<1x8x128xbf16>
    tpu.vector_store %arg10[%c0_33, %c0_34, %c0_35], %70 {strides = array<i32>} : memref<1x8x128xbf16, #tpu.memory_space<vmem>>, vector<1x8x128xbf16>,
    %71 = vector.extract_strided_slice %65 {offsets = [0, 128], sizes = [8, 128], strides = [1, 1]} : vector<8x256xf32> to vector<8x128xf32>
    %72 = arith.truncf %71 : vector<8x128xf32> to vector<8x128xbf16>
    %c0_36 = arith.constant 0 : index
    %c0_37 = arith.constant 0 : index
    %c0_38 = arith.constant 0 : index
    %73 = vector.load %arg12[%c0_36, %c0_37, %c0_38] : memref<1x8x128xbf16, #tpu.memory_space<vmem>>, vector<1x8x128xbf16>
    %74 = vector.shape_cast %73 : vector<1x8x128xbf16> to vector<8x128xbf16>
    %75 = vector.shape_cast %72 : vector<8x128xbf16> to vector<1x8x128xbf16>
    tpu.vector_store %arg12[%c0_36, %c0_37, %c0_38], %75 {strides = array<i32>} : memref<1x8x128xbf16, #tpu.memory_space<vmem>>, vector<1x8x128xbf16>,
    return
  }
  func.func @transform_0(%arg0: i32) -> (i32, i32) {
    %c0_i32 = arith.constant 0 : i32
    %c0_i32_0 = arith.constant 0 : i32
    return %arg0, %c0_i32 : i32, i32
  }
  func.func @transform_1(%arg0: i32) -> (i32, i32) {
    %c0_i32 = arith.constant 0 : i32
    %c0_i32_0 = arith.constant 0 : i32
    %c0_i32_1 = arith.constant 0 : i32
    return %c0_i32, %c0_i32_0 : i32, i32
  }
  func.func @transform_2(%arg0: i32) -> (i32, i32) {
    %c0_i32 = arith.constant 0 : i32
    %c0_i32_0 = arith.constant 0 : i32
    %c0_i32_1 = arith.constant 0 : i32
    return %c0_i32, %c0_i32_0 : i32, i32
  }
  func.func @transform_3(%arg0: i32) -> (i32, i32) {
    %c0_i32 = arith.constant 0 : i32
    %c0_i32_0 = arith.constant 0 : i32
    %c0_i32_1 = arith.constant 0 : i32
    return %c0_i32, %c0_i32_0 : i32, i32
  }
  func.func @transform_4(%arg0: i32) -> (i32, i32) {
    %c0_i32 = arith.constant 0 : i32
    %c0_i32_0 = arith.constant 0 : i32
    %c0_i32_1 = arith.constant 0 : i32
    return %c0_i32, %c0_i32_0 : i32, i32
  }
  func.func @transform_5(%arg0: i32) -> (i32, i32) {
    %c0_i32 = arith.constant 0 : i32
    %c0_i32_0 = arith.constant 0 : i32
    %c0_i32_1 = arith.constant 0 : i32
    return %c0_i32, %c0_i32_0 : i32, i32
  }
  func.func @transform_6(%arg0: i32) -> (i32, i32) {
    %c0_i32 = arith.constant 0 : i32
    %c0_i32_0 = arith.constant 0 : i32
    %c0_i32_1 = arith.constant 0 : i32
    return %c0_i32, %c0_i32_0 : i32, i32
  }
  func.func @transform_7(%arg0: i32) -> (i32, i32, i32) {
    %c0_i32 = arith.constant 0 : i32
    %c0_i32_0 = arith.constant 0 : i32
    %c0_i32_1 = arith.constant 0 : i32
    return %arg0, %c0_i32, %c0_i32_0 : i32, i32, i32
  }
  func.func @transform_8(%arg0: i32) -> (i32, i32, i32) {
    %c0_i32 = arith.constant 0 : i32
    %c0_i32_0 = arith.constant 0 : i32
    %c0_i32_1 = arith.constant 0 : i32
    return %arg0, %c0_i32, %c0_i32_0 : i32, i32, i32
  }
  func.func @transform_9(%arg0: i32) -> (i32, i32, i32) {
    %c0_i32 = arith.constant 0 : i32
    %c0_i32_0 = arith.constant 0 : i32
    %c0_i32_1 = arith.constant 0 : i32
    return %arg0, %c0_i32, %c0_i32_0 : i32, i32, i32
  }
  func.func @transform_10(%arg0: i32) -> (i32, i32, i32) {
    %c0_i32 = arith.constant 0 : i32
    %c0_i32_0 = arith.constant 0 : i32
    %c0_i32_1 = arith.constant 0 : i32
    return %arg0, %c0_i32, %c0_i32_0 : i32, i32, i32
  }
  func.func @transform_11(%arg0: i32) -> (i32, i32, i32) {
    %c0_i32 = arith.constant 0 : i32
    %c0_i32_0 = arith.constant 0 : i32
    %c0_i32_1 = arith.constant 0 : i32
    return %arg0, %c0_i32, %c0_i32_0 : i32, i32, i32
  }
}

module attributes {stable_mosaic.version = 11 : i64} {
  func.func @_attn_kernel(%arg0: i32, %arg1: memref<1x8x128xbf16, #tpu.memory_space<vmem>>, %arg2: memref<1x8x64xbf16, #tpu.memory_space<vmem>>, %arg3: memref<1x8x128xbf16, #tpu.memory_space<vmem>>, %arg4: memref<1x8x16xbf16, #tpu.memory_space<vmem>>, %arg5: memref<1x8x128xbf16, #tpu.memory_space<vmem>>, %arg6: memref<8x8xf32, #tpu.memory_space<vmem>>, %arg7: memref<8x8xf32, #tpu.memory_space<vmem>>, %arg8: memref<8x64xf32, #tpu.memory_space<vmem>>, %arg9: memref<128x64xbf16, #tpu.memory_space<vmem>>, %arg10: memref<8x64xf32, #tpu.memory_space<vmem>>) attributes {dimension_semantics = [#tpu.dimension_semantics<parallel>], iteration_bounds = array<i64: 2>, scalar_prefetch = 0 : i64, scratch_operands = 0 : i64, tpu.core_type = #tpu.core_type<tc>, window_params = [{transform_indices = @transform_0, window_bounds = array<i64: 1, 8, 128>}, {transform_indices = @transform_1, window_bounds = array<i64: 1, 8, 64>}, {transform_indices = @transform_2, window_bounds = array<i64: 1, 8, 128>}, {transform_indices = @transform_3, window_bounds = array<i64: 1, 8, 16>}, {transform_indices = @transform_4, window_bounds = array<i64: 1, 8, 128>}, {pipeline_mode = #tpu.pipeline_mode<synchronous>, transform_indices = @transform_5, window_bounds = array<i64: 8, 8>}, {pipeline_mode = #tpu.pipeline_mode<synchronous>, transform_indices = @transform_6, window_bounds = array<i64: 8, 8>}, {transform_indices = @transform_7, window_bounds = array<i64: 8, 64>}, {pipeline_mode = #tpu.pipeline_mode<synchronous>, transform_indices = @transform_8, window_bounds = array<i64: 128, 64>}, {transform_indices = @transform_9, window_bounds = array<i64: 8, 64>}]} {
    %c0 = arith.constant 0 : index
    %c0_0 = arith.constant 0 : index
    %0 = vector.load %arg6[%c0, %c0_0] : memref<8x8xf32, #tpu.memory_space<vmem>>, vector<8x8xf32>
    %c0_1 = arith.constant 0 : index
    %c0_2 = arith.constant 0 : index
    %1 = vector.load %arg7[%c0_1, %c0_2] : memref<8x8xf32, #tpu.memory_space<vmem>>, vector<8x8xf32>
    %c0_3 = arith.constant 0 : index
    %c0_4 = arith.constant 0 : index
    %c0_5 = arith.constant 0 : index
    %2 = vector.load %arg4[%c0_3, %c0_4, %c0_5] : memref<1x8x16xbf16, #tpu.memory_space<vmem>>, vector<1x8x16xbf16>
    %3 = vector.shape_cast %2 : vector<1x8x16xbf16> to vector<8x16xbf16>
    %4 = arith.extf %3 : vector<8x16xbf16> to vector<8x16xf32>
    %5 = vector.extract_strided_slice %4 {offsets = [0, 0], sizes = [8, 8], strides = [1, 1]} : vector<8x16xf32> to vector<8x8xf32>
    %6 = vector.extract_strided_slice %4 {offsets = [0, 8], sizes = [8, 8], strides = [1, 1]} : vector<8x16xf32> to vector<8x8xf32>
    %7 = arith.mulf %5, %0 : vector<8x8xf32>
    %8 = arith.mulf %6, %1 : vector<8x8xf32>
    %9 = arith.subf %7, %8 : vector<8x8xf32>
    %10 = arith.mulf %5, %1 : vector<8x8xf32>
    %11 = arith.mulf %6, %0 : vector<8x8xf32>
    %12 = arith.addf %10, %11 : vector<8x8xf32>
    %13 = tpu.concatenate %9, %12 in 1 : vector<8x8xf32>, vector<8x8xf32> -> vector<8x16xf32>
    %14 = arith.truncf %13 : vector<8x16xf32> to vector<8x16xbf16>
    %15 = tpu.iota {dimensions = array<i32: 0>} : vector<8x8xi32>
    %16 = tpu.iota {dimensions = array<i32: 1>} : vector<8x8xi32>
    %17 = arith.cmpi sle, %16, %15 : vector<8x8xi32>
    %c0_6 = arith.constant 0 : index
    %c0_7 = arith.constant 0 : index
    %c0_8 = arith.constant 0 : index
    %18 = vector.load %arg1[%c0_6, %c0_7, %c0_8] : memref<1x8x128xbf16, #tpu.memory_space<vmem>>, vector<1x8x128xbf16>
    %19 = vector.shape_cast %18 : vector<1x8x128xbf16> to vector<8x128xbf16>
    %c0_9 = arith.constant 0 : index
    %c0_10 = arith.constant 0 : index
    %c0_11 = arith.constant 0 : index
    %20 = vector.load %arg3[%c0_9, %c0_10, %c0_11] : memref<1x8x128xbf16, #tpu.memory_space<vmem>>, vector<1x8x128xbf16>
    %21 = vector.shape_cast %20 : vector<1x8x128xbf16> to vector<8x128xbf16>
    %c0_12 = arith.constant 0 : index
    %c0_13 = arith.constant 0 : index
    %c0_14 = arith.constant 0 : index
    %22 = vector.load %arg2[%c0_12, %c0_13, %c0_14] : memref<1x8x64xbf16, #tpu.memory_space<vmem>>, vector<1x8x64xbf16>
    %23 = vector.shape_cast %22 : vector<1x8x64xbf16> to vector<8x64xbf16>
    %24 = arith.extf %23 : vector<8x64xbf16> to vector<8x64xf32>
    %c0_15 = arith.constant 0 : index
    %c0_16 = arith.constant 0 : index
    %c0_17 = arith.constant 0 : index
    %25 = vector.load %arg5[%c0_15, %c0_16, %c0_17] : memref<1x8x128xbf16, #tpu.memory_space<vmem>>, vector<1x8x128xbf16>
    %26 = vector.shape_cast %25 : vector<1x8x128xbf16> to vector<8x128xbf16>
    %27 = vector.extract_strided_slice %19 {offsets = [0, 0], sizes = [8, 32], strides = [1, 1]} : vector<8x128xbf16> to vector<8x32xbf16>
    %28 = vector.extract_strided_slice %21 {offsets = [0, 0], sizes = [8, 32], strides = [1, 1]} : vector<8x128xbf16> to vector<8x32xbf16>
    %29 = vector.extract_strided_slice %24 {offsets = [0, 0], sizes = [8, 16], strides = [1, 1]} : vector<8x64xf32> to vector<8x16xf32>
    %30 = vector.extract_strided_slice %29 {offsets = [0, 0], sizes = [8, 8], strides = [1, 1]} : vector<8x16xf32> to vector<8x8xf32>
    %31 = vector.extract_strided_slice %29 {offsets = [0, 8], sizes = [8, 8], strides = [1, 1]} : vector<8x16xf32> to vector<8x8xf32>
    %32 = arith.mulf %30, %0 : vector<8x8xf32>
    %33 = arith.mulf %31, %1 : vector<8x8xf32>
    %34 = arith.subf %32, %33 : vector<8x8xf32>
    %35 = arith.mulf %30, %1 : vector<8x8xf32>
    %36 = arith.mulf %31, %0 : vector<8x8xf32>
    %37 = arith.addf %35, %36 : vector<8x8xf32>
    %38 = tpu.concatenate %34, %37 in 1 : vector<8x8xf32>, vector<8x8xf32> -> vector<8x16xf32>
    %39 = arith.truncf %38 : vector<8x16xf32> to vector<8x16xbf16>
    %cst = arith.constant dense<0.000000e+00> : vector<8x8xf32>
    %40 = tpu.matmul %27, %28, %cst {dimension_numbers = #tpu.dot_dimension_numbers<[1], [1], [0], [0], [0, 0, 1, 0], [], []>} : vector<8x32xbf16>, vector<8x32xbf16>, vector<8x8xf32> -> vector<8x8xf32>
    %cst_18 = arith.constant dense<0.000000e+00> : vector<8x8xf32>
    %41 = tpu.matmul %39, %14, %cst_18 {dimension_numbers = #tpu.dot_dimension_numbers<[1], [1], [0], [0], [0, 0, 1, 0], [], []>} : vector<8x16xbf16>, vector<8x16xbf16>, vector<8x8xf32> -> vector<8x8xf32>
    %42 = arith.addf %40, %41 : vector<8x8xf32>
    %cst_19 = arith.constant 0.144337565 : f32
    %43 = vector.broadcast %cst_19 : f32 to vector<8x8xf32>
    %44 = arith.mulf %42, %43 : vector<8x8xf32>
    %cst_20 = arith.constant -1.000000e+30 : f32
    %45 = vector.broadcast %cst_20 : f32 to vector<8x8xf32>
    %46 = arith.select %17, %44, %45 : vector<8x8xi1>, vector<8x8xf32>
    %cst_21 = arith.constant dense<0xFF800000> : vector<8xf32>
    %47 = vector.multi_reduction <maximumf>, %46, %cst_21 [1] : vector<8x8xf32> to vector<8xf32>
    %48 = vector.shape_cast %47 : vector<8xf32> to vector<8x1xf32>
    %49 = vector.broadcast %48 : vector<8x1xf32> to vector<8x8xf32>
    %50 = arith.subf %46, %49 : vector<8x8xf32>
    %51 = math.exp %50 : vector<8x8xf32>
    %cst_22 = arith.constant dense<0.000000e+00> : vector<8xf32>
    %52 = vector.multi_reduction <add>, %51, %cst_22 [1] : vector<8x8xf32> to vector<8xf32>
    %53 = vector.shape_cast %52 : vector<8xf32> to vector<8x1xf32>
    %54 = tpu.reciprocal %53 {approx = true} : vector<8x1xf32> -> vector<8x1xf32>
    %55 = vector.broadcast %54 : vector<8x1xf32> to vector<8x8xf32>
    %56 = arith.mulf %51, %55 : vector<8x8xf32>
    %57 = arith.truncf %56 : vector<8x8xf32> to vector<8x8xbf16>
    %58 = vector.extract_strided_slice %26 {offsets = [0, 0], sizes = [8, 32], strides = [1, 1]} : vector<8x128xbf16> to vector<8x32xbf16>
    %cst_23 = arith.constant dense<0.000000e+00> : vector<8x32xf32>
    %59 = tpu.matmul %57, %58, %cst_23 {dimension_numbers = #tpu.dot_dimension_numbers<[1], [0], [0], [1], [0, 0, 1, 1], [], []>} : vector<8x8xbf16>, vector<8x32xbf16>, vector<8x32xf32> -> vector<8x32xf32>
    %60 = vector.extract_strided_slice %19 {offsets = [0, 32], sizes = [8, 32], strides = [1, 1]} : vector<8x128xbf16> to vector<8x32xbf16>
    %61 = vector.extract_strided_slice %21 {offsets = [0, 32], sizes = [8, 32], strides = [1, 1]} : vector<8x128xbf16> to vector<8x32xbf16>
    %62 = vector.extract_strided_slice %24 {offsets = [0, 16], sizes = [8, 16], strides = [1, 1]} : vector<8x64xf32> to vector<8x16xf32>
    %63 = vector.extract_strided_slice %62 {offsets = [0, 0], sizes = [8, 8], strides = [1, 1]} : vector<8x16xf32> to vector<8x8xf32>
    %64 = vector.extract_strided_slice %62 {offsets = [0, 8], sizes = [8, 8], strides = [1, 1]} : vector<8x16xf32> to vector<8x8xf32>
    %65 = arith.mulf %63, %0 : vector<8x8xf32>
    %66 = arith.mulf %64, %1 : vector<8x8xf32>
    %67 = arith.subf %65, %66 : vector<8x8xf32>
    %68 = arith.mulf %63, %1 : vector<8x8xf32>
    %69 = arith.mulf %64, %0 : vector<8x8xf32>
    %70 = arith.addf %68, %69 : vector<8x8xf32>
    %71 = tpu.concatenate %67, %70 in 1 : vector<8x8xf32>, vector<8x8xf32> -> vector<8x16xf32>
    %72 = arith.truncf %71 : vector<8x16xf32> to vector<8x16xbf16>
    %cst_24 = arith.constant dense<0.000000e+00> : vector<8x8xf32>
    %73 = tpu.matmul %60, %61, %cst_24 {dimension_numbers = #tpu.dot_dimension_numbers<[1], [1], [0], [0], [0, 0, 1, 0], [], []>} : vector<8x32xbf16>, vector<8x32xbf16>, vector<8x8xf32> -> vector<8x8xf32>
    %cst_25 = arith.constant dense<0.000000e+00> : vector<8x8xf32>
    %74 = tpu.matmul %72, %14, %cst_25 {dimension_numbers = #tpu.dot_dimension_numbers<[1], [1], [0], [0], [0, 0, 1, 0], [], []>} : vector<8x16xbf16>, vector<8x16xbf16>, vector<8x8xf32> -> vector<8x8xf32>
    %75 = arith.addf %73, %74 : vector<8x8xf32>
    %cst_26 = arith.constant 0.144337565 : f32
    %76 = vector.broadcast %cst_26 : f32 to vector<8x8xf32>
    %77 = arith.mulf %75, %76 : vector<8x8xf32>
    %cst_27 = arith.constant -1.000000e+30 : f32
    %78 = vector.broadcast %cst_27 : f32 to vector<8x8xf32>
    %79 = arith.select %17, %77, %78 : vector<8x8xi1>, vector<8x8xf32>
    %cst_28 = arith.constant dense<0xFF800000> : vector<8xf32>
    %80 = vector.multi_reduction <maximumf>, %79, %cst_28 [1] : vector<8x8xf32> to vector<8xf32>
    %81 = vector.shape_cast %80 : vector<8xf32> to vector<8x1xf32>
    %82 = vector.broadcast %81 : vector<8x1xf32> to vector<8x8xf32>
    %83 = arith.subf %79, %82 : vector<8x8xf32>
    %84 = math.exp %83 : vector<8x8xf32>
    %cst_29 = arith.constant dense<0.000000e+00> : vector<8xf32>
    %85 = vector.multi_reduction <add>, %84, %cst_29 [1] : vector<8x8xf32> to vector<8xf32>
    %86 = vector.shape_cast %85 : vector<8xf32> to vector<8x1xf32>
    %87 = tpu.reciprocal %86 {approx = true} : vector<8x1xf32> -> vector<8x1xf32>
    %88 = vector.broadcast %87 : vector<8x1xf32> to vector<8x8xf32>
    %89 = arith.mulf %84, %88 : vector<8x8xf32>
    %90 = arith.truncf %89 : vector<8x8xf32> to vector<8x8xbf16>
    %91 = vector.extract_strided_slice %26 {offsets = [0, 32], sizes = [8, 32], strides = [1, 1]} : vector<8x128xbf16> to vector<8x32xbf16>
    %cst_30 = arith.constant dense<0.000000e+00> : vector<8x32xf32>
    %92 = tpu.matmul %90, %91, %cst_30 {dimension_numbers = #tpu.dot_dimension_numbers<[1], [0], [0], [1], [0, 0, 1, 1], [], []>} : vector<8x8xbf16>, vector<8x32xbf16>, vector<8x32xf32> -> vector<8x32xf32>
    %93 = vector.extract_strided_slice %19 {offsets = [0, 64], sizes = [8, 32], strides = [1, 1]} : vector<8x128xbf16> to vector<8x32xbf16>
    %94 = vector.extract_strided_slice %21 {offsets = [0, 64], sizes = [8, 32], strides = [1, 1]} : vector<8x128xbf16> to vector<8x32xbf16>
    %95 = vector.extract_strided_slice %24 {offsets = [0, 32], sizes = [8, 16], strides = [1, 1]} : vector<8x64xf32> to vector<8x16xf32>
    %96 = vector.extract_strided_slice %95 {offsets = [0, 0], sizes = [8, 8], strides = [1, 1]} : vector<8x16xf32> to vector<8x8xf32>
    %97 = vector.extract_strided_slice %95 {offsets = [0, 8], sizes = [8, 8], strides = [1, 1]} : vector<8x16xf32> to vector<8x8xf32>
    %98 = arith.mulf %96, %0 : vector<8x8xf32>
    %99 = arith.mulf %97, %1 : vector<8x8xf32>
    %100 = arith.subf %98, %99 : vector<8x8xf32>
    %101 = arith.mulf %96, %1 : vector<8x8xf32>
    %102 = arith.mulf %97, %0 : vector<8x8xf32>
    %103 = arith.addf %101, %102 : vector<8x8xf32>
    %104 = tpu.concatenate %100, %103 in 1 : vector<8x8xf32>, vector<8x8xf32> -> vector<8x16xf32>
    %105 = arith.truncf %104 : vector<8x16xf32> to vector<8x16xbf16>
    %cst_31 = arith.constant dense<0.000000e+00> : vector<8x8xf32>
    %106 = tpu.matmul %93, %94, %cst_31 {dimension_numbers = #tpu.dot_dimension_numbers<[1], [1], [0], [0], [0, 0, 1, 0], [], []>} : vector<8x32xbf16>, vector<8x32xbf16>, vector<8x8xf32> -> vector<8x8xf32>
    %cst_32 = arith.constant dense<0.000000e+00> : vector<8x8xf32>
    %107 = tpu.matmul %105, %14, %cst_32 {dimension_numbers = #tpu.dot_dimension_numbers<[1], [1], [0], [0], [0, 0, 1, 0], [], []>} : vector<8x16xbf16>, vector<8x16xbf16>, vector<8x8xf32> -> vector<8x8xf32>
    %108 = arith.addf %106, %107 : vector<8x8xf32>
    %cst_33 = arith.constant 0.144337565 : f32
    %109 = vector.broadcast %cst_33 : f32 to vector<8x8xf32>
    %110 = arith.mulf %108, %109 : vector<8x8xf32>
    %cst_34 = arith.constant -1.000000e+30 : f32
    %111 = vector.broadcast %cst_34 : f32 to vector<8x8xf32>
    %112 = arith.select %17, %110, %111 : vector<8x8xi1>, vector<8x8xf32>
    %cst_35 = arith.constant dense<0xFF800000> : vector<8xf32>
    %113 = vector.multi_reduction <maximumf>, %112, %cst_35 [1] : vector<8x8xf32> to vector<8xf32>
    %114 = vector.shape_cast %113 : vector<8xf32> to vector<8x1xf32>
    %115 = vector.broadcast %114 : vector<8x1xf32> to vector<8x8xf32>
    %116 = arith.subf %112, %115 : vector<8x8xf32>
    %117 = math.exp %116 : vector<8x8xf32>
    %cst_36 = arith.constant dense<0.000000e+00> : vector<8xf32>
    %118 = vector.multi_reduction <add>, %117, %cst_36 [1] : vector<8x8xf32> to vector<8xf32>
    %119 = vector.shape_cast %118 : vector<8xf32> to vector<8x1xf32>
    %120 = tpu.reciprocal %119 {approx = true} : vector<8x1xf32> -> vector<8x1xf32>
    %121 = vector.broadcast %120 : vector<8x1xf32> to vector<8x8xf32>
    %122 = arith.mulf %117, %121 : vector<8x8xf32>
    %123 = arith.truncf %122 : vector<8x8xf32> to vector<8x8xbf16>
    %124 = vector.extract_strided_slice %26 {offsets = [0, 64], sizes = [8, 32], strides = [1, 1]} : vector<8x128xbf16> to vector<8x32xbf16>
    %cst_37 = arith.constant dense<0.000000e+00> : vector<8x32xf32>
    %125 = tpu.matmul %123, %124, %cst_37 {dimension_numbers = #tpu.dot_dimension_numbers<[1], [0], [0], [1], [0, 0, 1, 1], [], []>} : vector<8x8xbf16>, vector<8x32xbf16>, vector<8x32xf32> -> vector<8x32xf32>
    %126 = vector.extract_strided_slice %19 {offsets = [0, 96], sizes = [8, 32], strides = [1, 1]} : vector<8x128xbf16> to vector<8x32xbf16>
    %127 = vector.extract_strided_slice %21 {offsets = [0, 96], sizes = [8, 32], strides = [1, 1]} : vector<8x128xbf16> to vector<8x32xbf16>
    %128 = vector.extract_strided_slice %24 {offsets = [0, 48], sizes = [8, 16], strides = [1, 1]} : vector<8x64xf32> to vector<8x16xf32>
    %129 = vector.extract_strided_slice %128 {offsets = [0, 0], sizes = [8, 8], strides = [1, 1]} : vector<8x16xf32> to vector<8x8xf32>
    %130 = vector.extract_strided_slice %128 {offsets = [0, 8], sizes = [8, 8], strides = [1, 1]} : vector<8x16xf32> to vector<8x8xf32>
    %131 = arith.mulf %129, %0 : vector<8x8xf32>
    %132 = arith.mulf %130, %1 : vector<8x8xf32>
    %133 = arith.subf %131, %132 : vector<8x8xf32>
    %134 = arith.mulf %129, %1 : vector<8x8xf32>
    %135 = arith.mulf %130, %0 : vector<8x8xf32>
    %136 = arith.addf %134, %135 : vector<8x8xf32>
    %137 = tpu.concatenate %133, %136 in 1 : vector<8x8xf32>, vector<8x8xf32> -> vector<8x16xf32>
    %138 = arith.truncf %137 : vector<8x16xf32> to vector<8x16xbf16>
    %cst_38 = arith.constant dense<0.000000e+00> : vector<8x8xf32>
    %139 = tpu.matmul %126, %127, %cst_38 {dimension_numbers = #tpu.dot_dimension_numbers<[1], [1], [0], [0], [0, 0, 1, 0], [], []>} : vector<8x32xbf16>, vector<8x32xbf16>, vector<8x8xf32> -> vector<8x8xf32>
    %cst_39 = arith.constant dense<0.000000e+00> : vector<8x8xf32>
    %140 = tpu.matmul %138, %14, %cst_39 {dimension_numbers = #tpu.dot_dimension_numbers<[1], [1], [0], [0], [0, 0, 1, 0], [], []>} : vector<8x16xbf16>, vector<8x16xbf16>, vector<8x8xf32> -> vector<8x8xf32>
    %141 = arith.addf %139, %140 : vector<8x8xf32>
    %cst_40 = arith.constant 0.144337565 : f32
    %142 = vector.broadcast %cst_40 : f32 to vector<8x8xf32>
    %143 = arith.mulf %141, %142 : vector<8x8xf32>
    %cst_41 = arith.constant -1.000000e+30 : f32
    %144 = vector.broadcast %cst_41 : f32 to vector<8x8xf32>
    %145 = arith.select %17, %143, %144 : vector<8x8xi1>, vector<8x8xf32>
    %cst_42 = arith.constant dense<0xFF800000> : vector<8xf32>
    %146 = vector.multi_reduction <maximumf>, %145, %cst_42 [1] : vector<8x8xf32> to vector<8xf32>
    %147 = vector.shape_cast %146 : vector<8xf32> to vector<8x1xf32>
    %148 = vector.broadcast %147 : vector<8x1xf32> to vector<8x8xf32>
    %149 = arith.subf %145, %148 : vector<8x8xf32>
    %150 = math.exp %149 : vector<8x8xf32>
    %cst_43 = arith.constant dense<0.000000e+00> : vector<8xf32>
    %151 = vector.multi_reduction <add>, %150, %cst_43 [1] : vector<8x8xf32> to vector<8xf32>
    %152 = vector.shape_cast %151 : vector<8xf32> to vector<8x1xf32>
    %153 = tpu.reciprocal %152 {approx = true} : vector<8x1xf32> -> vector<8x1xf32>
    %154 = vector.broadcast %153 : vector<8x1xf32> to vector<8x8xf32>
    %155 = arith.mulf %150, %154 : vector<8x8xf32>
    %156 = arith.truncf %155 : vector<8x8xf32> to vector<8x8xbf16>
    %157 = vector.extract_strided_slice %26 {offsets = [0, 96], sizes = [8, 32], strides = [1, 1]} : vector<8x128xbf16> to vector<8x32xbf16>
    %cst_44 = arith.constant dense<0.000000e+00> : vector<8x32xf32>
    %158 = tpu.matmul %156, %157, %cst_44 {dimension_numbers = #tpu.dot_dimension_numbers<[1], [0], [0], [1], [0, 0, 1, 1], [], []>} : vector<8x8xbf16>, vector<8x32xbf16>, vector<8x32xf32> -> vector<8x32xf32>
    %159 = tpu.concatenate %59, %92, %125, %158 in 1 : vector<8x32xf32>, vector<8x32xf32>, vector<8x32xf32>, vector<8x32xf32> -> vector<8x128xf32>
    %160 = arith.truncf %159 : vector<8x128xf32> to vector<8x128xbf16>
    %c0_45 = arith.constant 0 : index
    %c0_46 = arith.constant 0 : index
    %161 = vector.load %arg9[%c0_45, %c0_46] : memref<128x64xbf16, #tpu.memory_space<vmem>>, vector<128x64xbf16>
    %cst_47 = arith.constant dense<0.000000e+00> : vector<8x64xf32>
    %162 = tpu.matmul %160, %161, %cst_47 {dimension_numbers = #tpu.dot_dimension_numbers<[1], [0], [0], [1], [0, 0, 1, 1], [], []>} : vector<8x128xbf16>, vector<128x64xbf16>, vector<8x64xf32> -> vector<8x64xf32>
    %c0_48 = arith.constant 0 : index
    %c0_49 = arith.constant 0 : index
    %163 = vector.load %arg8[%c0_48, %c0_49] : memref<8x64xf32, #tpu.memory_space<vmem>>, vector<8x64xf32>
    %164 = arith.addf %163, %162 : vector<8x64xf32>
    %c0_50 = arith.constant 0 : index
    %c0_51 = arith.constant 0 : index
    %165 = vector.load %arg10[%c0_50, %c0_51] : memref<8x64xf32, #tpu.memory_space<vmem>>, vector<8x64xf32>
    tpu.vector_store %arg10[%c0_50, %c0_51], %164 {strides = array<i32>} : memref<8x64xf32, #tpu.memory_space<vmem>>, vector<8x64xf32>,
    return
  }
  func.func @transform_0(%arg0: i32) -> (i32, i32, i32) {
    %c0_i32 = arith.constant 0 : i32
    %c0_i32_0 = arith.constant 0 : i32
    %c0_i32_1 = arith.constant 0 : i32
    return %arg0, %c0_i32, %c0_i32_0 : i32, i32, i32
  }
  func.func @transform_1(%arg0: i32) -> (i32, i32, i32) {
    %c0_i32 = arith.constant 0 : i32
    %c0_i32_0 = arith.constant 0 : i32
    %c0_i32_1 = arith.constant 0 : i32
    return %arg0, %c0_i32, %c0_i32_0 : i32, i32, i32
  }
  func.func @transform_2(%arg0: i32) -> (i32, i32, i32) {
    %c0_i32 = arith.constant 0 : i32
    %c0_i32_0 = arith.constant 0 : i32
    %c0_i32_1 = arith.constant 0 : i32
    return %arg0, %c0_i32, %c0_i32_0 : i32, i32, i32
  }
  func.func @transform_3(%arg0: i32) -> (i32, i32, i32) {
    %c0_i32 = arith.constant 0 : i32
    %c0_i32_0 = arith.constant 0 : i32
    %c0_i32_1 = arith.constant 0 : i32
    return %arg0, %c0_i32, %c0_i32_0 : i32, i32, i32
  }
  func.func @transform_4(%arg0: i32) -> (i32, i32, i32) {
    %c0_i32 = arith.constant 0 : i32
    %c0_i32_0 = arith.constant 0 : i32
    %c0_i32_1 = arith.constant 0 : i32
    return %arg0, %c0_i32, %c0_i32_0 : i32, i32, i32
  }
  func.func @transform_5(%arg0: i32) -> (i32, i32) {
    %c0_i32 = arith.constant 0 : i32
    %c0_i32_0 = arith.constant 0 : i32
    %c0_i32_1 = arith.constant 0 : i32
    return %c0_i32, %c0_i32_0 : i32, i32
  }
  func.func @transform_6(%arg0: i32) -> (i32, i32) {
    %c0_i32 = arith.constant 0 : i32
    %c0_i32_0 = arith.constant 0 : i32
    %c0_i32_1 = arith.constant 0 : i32
    return %c0_i32, %c0_i32_0 : i32, i32
  }
  func.func @transform_7(%arg0: i32) -> (i32, i32) {
    %c0_i32 = arith.constant 0 : i32
    %c0_i32_0 = arith.constant 0 : i32
    return %arg0, %c0_i32 : i32, i32
  }
  func.func @transform_8(%arg0: i32) -> (i32, i32) {
    %c0_i32 = arith.constant 0 : i32
    %c0_i32_0 = arith.constant 0 : i32
    %c0_i32_1 = arith.constant 0 : i32
    return %c0_i32, %c0_i32_0 : i32, i32
  }
  func.func @transform_9(%arg0: i32) -> (i32, i32) {
    %c0_i32 = arith.constant 0 : i32
    %c0_i32_0 = arith.constant 0 : i32
    return %arg0, %c0_i32 : i32, i32
  }
}

</mosaic_0001>

<llo_original>
// kernel: _lambda_.5
$region0: #{_lambda_.5}
  #allocation0 [shape = 'u32[]', space=smem, size = 0x4, offset = 0x4, fixed_abs, tag = 'smem constant byte address 0x4 - core index']
  #allocation1 [shape = 'u32[72,128]{1,0:T(1,128)}', space=vmem, size = 0x9000, scoped, tag = 'internal scratch']
  %s0 = inlined_call_operand.vmem [shape: f32[16,64], index: 0, kind: input, shape index: {}]
  %s1 = inlined_call_operand.vmem [shape: f32[1,64], index: 1, kind: input, shape index: {}]
  %s2 = inlined_call_operand.vmem [shape: bf16[64,128], index: 2, kind: input, shape index: {}]
  %s3 = inlined_call_operand.vmem [shape: bf16[64,128], index: 3, kind: input, shape index: {}]
  %s4 = inlined_call_operand.vmem [shape: bf16[128,64], index: 4, kind: input, shape index: {}]
  %s5 = inlined_call_operand.hbm [shape: f32[16,64], index: 5, kind: output, shape index: {}]
  %s6 = sld [smem:[#allocation0]]
  $region53: #{_lambda_.5} parent=0
    _
  %s8 = ssub.s32 1, %s6
  %s9 = scalar_select 0, %s8, %s6
  $region1: #{_lambda_.5} parent=0
    #allocation2 [shape = 'u8[8192]{0}', space=vmem, size = 0x2000, scoped, tag = 'output window, operand 0']
    #allocation3 [shape = 's32[2]{0}', space=sflag, size = 0x8, scoped, tag = 'scoped memory for _lambda_.5']
    %10 = vsyncpa [#allocation3], 0
    %s11 = scalar_lea.sflag [#allocation3], 1
    %12 = vsyncpa %s11, 0
    loop: start=0, step=1, limit=4
    $region2: #{_lambda_.5} parent=1 // loop_pre_header
      _
    $region3: #{_lambda_.5} parent=1 // loop_header
      %s14 = sphi 0, %s18
      %p15 = scmp.ge.s32.totalorder %s14, 4
      %s24 = sphi 0, %s26
      %s27 = sphi 0, %s24
      %s28 = sphi 0, %s27
      %s44 = sphi 0, %s28
      %s48 = sphi 0, %s48
      %s50 = sphi 0, %s48
      %s51 = sphi 0, %s50
      %s65 = sphi 0, %s51
      %s69 = sphi 0, %s69
      %s71 = sphi 0, %s69
      %s72 = sphi 0, %s71
      %s86 = sphi 0, %s72
      %s90 = sphi 0, %s90
      %s92 = sphi 0, %s90
      %s93 = sphi 0, %s92
      %s107 = sphi 0, %s93
      %s111 = sphi 0, %s111
      %s113 = sphi 0, %s111
      %s114 = sphi 0, %s113
      %s128 = sphi 0, %s114
      %s134 = sphi 0, %s136
      %s137 = sphi 0, %s134
      %s138 = sphi 0, %s137
      %s154 = sphi 0, %s138
    $region4: #{_lambda_.5} parent=1 // loop_header_branch
      %17 = sbr.rel (%p15) target = $region8
    $region5: #{_lambda_.5} parent=1 // loop_body
      %s19 = ssub.s32 %s14, 1
      %s20 = ssub.s32 %s14, 2
      %s21 = sadd.s32 %s14, 1
      %s22 = ssub.s32 %s14, %s21
      %p23 = scmp.eq.s32.totalorder %s22, 0
      %s25 = sadd.s32 %s24, 1
      %s26 = scalar_select %p23, %s24, %s25
      %p29 = pneg %p23
      %p30 = scmp.eq.s32.totalorder %s14, 1
      %p31 = por %p29, %p30
      %p32 = scmp.ne.s32.totalorder %s24, %s27
      %p33 = scmp.eq.s32.totalorder %s14, 0
      %p34 = por %p32, %p33
      %p35 = scmp.ne.s32.totalorder %s24, %s27
      %p36 = scmp.eq.s32.totalorder %s19, 1
      %p37 = por %p35, %p36
      %p38 = scmp.ne.s32.totalorder %s27, %s28
      %p39 = scmp.eq.s32.totalorder %s19, 0
      %p40 = por %p38, %p39
      %p41 = scmp.ne.s32.totalorder %s27, %s28
      %p42 = scmp.eq.s32.totalorder %s20, 1
      %p43 = por %p41, %p42
      %p45 = scmp.ne.s32.totalorder %s28, %s44
      %p46 = scmp.eq.s32.totalorder %s20, 0
      %p47 = por %p45, %p46
      %s49 = sadd.s32 %s48, 1
      %p52 = scmp.eq.s32.totalorder %s14, 1
      %p53 = scmp.ne.s32.totalorder %s48, %s50
      %p54 = scmp.eq.s32.totalorder %s14, 0
      %p55 = por %p53, %p54
      %p56 = scmp.ne.s32.totalorder %s48, %s50
      %p57 = scmp.eq.s32.totalorder %s19, 1
      %p58 = por %p56, %p57
      %p59 = scmp.ne.s32.totalorder %s50, %s51
      %p60 = scmp.eq.s32.totalorder %s19, 0
      %p61 = por %p59, %p60
      %p62 = scmp.ne.s32.totalorder %s50, %s51
      %p63 = scmp.eq.s32.totalorder %s20, 1
      %p64 = por %p62, %p63
      %p66 = scmp.ne.s32.totalorder %s51, %s65
      %p67 = scmp.eq.s32.totalorder %s20, 0
      %p68 = por %p66, %p67
      %s70 = sadd.s32 %s69, 1
      %p73 = scmp.eq.s32.totalorder %s14, 1
      %p74 = scmp.ne.s32.totalorder %s69, %s71
      %p75 = scmp.eq.s32.totalorder %s14, 0
      %p76 = por %p74, %p75
      %p77 = scmp.ne.s32.totalorder %s69, %s71
      %p78 = scmp.eq.s32.totalorder %s19, 1
      %p79 = por %p77, %p78
      %p80 = scmp.ne.s32.totalorder %s71, %s72
      %p81 = scmp.eq.s32.totalorder %s19, 0
      %p82 = por %p80, %p81
      %p83 = scmp.ne.s32.totalorder %s71, %s72
      %p84 = scmp.eq.s32.totalorder %s20, 1
      %p85 = por %p83, %p84
      %p87 = scmp.ne.s32.totalorder %s72, %s86
      %p88 = scmp.eq.s32.totalorder %s20, 0
      %p89 = por %p87, %p88
      %s91 = sadd.s32 %s90, 1
      %p94 = scmp.eq.s32.totalorder %s14, 1
      %p95 = scmp.ne.s32.totalorder %s90, %s92
      %p96 = scmp.eq.s32.totalorder %s14, 0
      %p97 = por %p95, %p96
      %p98 = scmp.ne.s32.totalorder %s90, %s92
      %p99 = scmp.eq.s32.totalorder %s19, 1
      %p100 = por %p98, %p99
      %p101 = scmp.ne.s32.totalorder %s92, %s93
      %p102 = scmp.eq.s32.totalorder %s19, 0
      %p103 = por %p101, %p102
      %p104 = scmp.ne.s32.totalorder %s92, %s93
      %p105 = scmp.eq.s32.totalorder %s20, 1
      %p106 = por %p104, %p105
      %p108 = scmp.ne.s32.totalorder %s93, %s107
      %p109 = scmp.eq.s32.totalorder %s20, 0
      %p110 = por %p108, %p109
      %s112 = sadd.s32 %s111, 1
      %p115 = scmp.eq.s32.totalorder %s14, 1
      %p116 = scmp.ne.s32.totalorder %s111, %s113
      %p117 = scmp.eq.s32.totalorder %s14, 0
      %p118 = por %p116, %p117
      %p119 = scmp.ne.s32.totalorder %s111, %s113
      %p120 = scmp.eq.s32.totalorder %s19, 1
      %p121 = por %p119, %p120
      %p122 = scmp.ne.s32.totalorder %s113, %s114
      %p123 = scmp.eq.s32.totalorder %s19, 0
      %p124 = por %p122, %p123
      %p125 = scmp.ne.s32.totalorder %s113, %s114
      %p126 = scmp.eq.s32.totalorder %s20, 1
      %p127 = por %p125, %p126
      %p129 = scmp.ne.s32.totalorder %s114, %s128
      %p130 = scmp.eq.s32.totalorder %s20, 0
      %p131 = por %p129, %p130
      %s132 = ssub.s32 %s14, %s21
      %p133 = scmp.eq.s32.totalorder %s132, 0
      %s135 = sadd.s32 %s134, 1
      %s136 = scalar_select %p133, %s134, %s135
      %p139 = pneg %p133
      %p140 = scmp.eq.s32.totalorder %s14, 1
      %p141 = por %p139, %p140
      %p142 = scmp.ne.s32.totalorder %s134, %s137
      %p143 = scmp.eq.s32.totalorder %s14, 0
      %p144 = por %p142, %p143
      %p145 = scmp.ne.s32.totalorder %s134, %s137
      %p146 = scmp.eq.s32.totalorder %s19, 1
      %p147 = por %p145, %p146
      %p148 = scmp.ne.s32.totalorder %s137, %s138
      %p149 = scmp.eq.s32.totalorder %s19, 0
      %p150 = por %p148, %p149
      %p151 = scmp.ne.s32.totalorder %s137, %s138
      %p152 = scmp.eq.s32.totalorder %s20, 1
      %p153 = por %p151, %p152
      %p155 = scmp.ne.s32.totalorder %s138, %s154
      %p156 = scmp.eq.s32.totalorder %s20, 0
      %p157 = por %p155, %p156
      %p158 = scmp.le.s32.totalorder 1, %s14
      %p159 = scmp.lt.s32.totalorder %s14, 3
      %p160 = pnand %p158, %p159
      %p161 = pneg %p160
      // Predicated region
      $region9: #{_lambda_.5} parent=5 // pred_check
        _
      $region10: #{_lambda_.5} parent=5 // pred_check_branch
        %163 = sbr.rel (%p160) target = $region12
      $region11: #{_lambda_.5} parent=5 // pred_region
        %s164 = ssub.s32 %s14, 1
        // Predicated region
        $region13: #{_lambda_.5} parent=11 // pred_check
          %p165 = pneg %p61
        $region14: #{_lambda_.5} parent=11 // pred_check_branch
          %167 = sbr.rel (%p165) target = $region16
        $region15: #{_lambda_.5} parent=11 // pred_region
          _
        $region16: #{_lambda_.5} parent=11 // pred_fallthru
          _
        // Predicated region
        $region17: #{_lambda_.5} parent=11 // pred_check
          %p168 = pneg %p82
        $region18: #{_lambda_.5} parent=11 // pred_check_branch
          %170 = sbr.rel (%p168) target = $region20
        $region19: #{_lambda_.5} parent=11 // pred_region
          _
        $region20: #{_lambda_.5} parent=11 // pred_fallthru
          _
        // Predicated region
        $region21: #{_lambda_.5} parent=11 // pred_check
          %p171 = pneg %p103
        $region22: #{_lambda_.5} parent=11 // pred_check_branch
          %173 = sbr.rel (%p171) target = $region24
        $region23: #{_lambda_.5} parent=11 // pred_region
          _
        $region24: #{_lambda_.5} parent=11 // pred_fallthru
          _
        // Predicated region
        $region25: #{_lambda_.5} parent=11 // pred_check
          %p174 = pneg %p124
        $region26: #{_lambda_.5} parent=11 // pred_check_branch
          %176 = sbr.rel (%p174) target = $region28
        $region27: #{_lambda_.5} parent=11 // pred_region
          _
        $region28: #{_lambda_.5} parent=11 // pred_fallthru
          _
      $region12: #{_lambda_.5} parent=5 // pred_fallthru
        _
      %p177 = scmp.lt.s32.totalorder %s14, 2
      // Predicated region
      $region29: #{_lambda_.5} parent=5 // pred_check
        %p178 = pneg %p177
      $region30: #{_lambda_.5} parent=5 // pred_check_branch
        %180 = sbr.rel (%p178) target = $region32
      $region31: #{_lambda_.5} parent=5 // pred_region
        // Predicated region
        $region33: #{_lambda_.5} parent=31 // pred_check
          %p181 = pneg %p34
        $region34: #{_lambda_.5} parent=31 // pred_check_branch
          %183 = sbr.rel (%p181) target = $region36
        $region35: #{_lambda_.5} parent=31 // pred_region
          %p184 = scmp.lt.s32.totalorder %s14, 1
          %s185 = scalar_select %p184, %s14, 1
          %s186 = smul.addr %s185, 8
          %s187 = scalar_lea.vmem %s0, %s186
        $region36: #{_lambda_.5} parent=31 // pred_fallthru
          _
      $region32: #{_lambda_.5} parent=5 // pred_fallthru
        _
      %p188 = scmp.le.s32.totalorder 1, %s14
      %p189 = scmp.lt.s32.totalorder %s14, 3
      %p190 = pnand %p188, %p189
      %p191 = pneg %p190
      // Predicated region
      $region37: #{_lambda_.5} parent=5 // pred_check
        _
      $region38: #{_lambda_.5} parent=5 // pred_check_branch
        %193 = sbr.rel (%p190) target = $region40
      $region39: #{_lambda_.5} parent=5 // pred_region
        %s194 = ssub.s32 %s14, 1
        %p195 = scmp.lt.s32.totalorder %s19, 1
        %s196 = scalar_select %p195, %s19, 1
        %s197 = smul.addr %s196, 8
        %s198 = scalar_lea.vmem %s0, %s197
        %p199 = pneg %p40
        %p200 = pneg %p37
        %p201 = pneg %p61
        %p202 = pneg %p58
        %p203 = pneg %p82
        %p204 = pneg %p79
        %p205 = pneg %p103
        %p206 = pneg %p100
        %p207 = pneg %p124
        %p208 = pneg %p121
        %p209 = pneg %p150
        %p210 = pneg %p147
        %s211 = sand.u32 %s137, 1
        %s212 = scalar_lea.sflag [#allocation3], %s211
        %s213 = sand.u32 %s137, 1
        %s214 = smul.addr %s213, 8
        %s215 = scalar_lea.vmem [#allocation2], %s214
        %p216 = scmp.lt.s32.totalorder %s19, 1
        %s217 = scalar_select %p216, %s19, 1
        %s218 = smul.addr %s217, 8
        %s219 = scalar_lea.vmem %s0, %s218
        %v221 = vld [vmem:[%s219] sm:$0xff]
        %v222 = vld [vmem:[%s1] sm:$0x1]
        %v223 = vmul.f32 %v221, %v221
        %vm224 = vcmask 523264
        %v225 = vsel %vm224, %v223, 0.0
        %226 = vadd.xlane.f32.xlu0 %v225
        %v227 = vpop.xlane.xlu0 %226
        %v228 = vrcp.pop 64.0
        %v229 = vmul.f32 64.0, %v228
        %v230 = vsub.f32 1.0, %v229
        %v231 = vmul.f32 %v228, %v230
        %v232 = vadd.f32 %v228, %v231
        %vm233 = vweird.f32 %v228
        %v234 = vsel %vm233, %v228, %v232
        %v235 = vmul.f32 %v227, %v234
        %v236 = vadd.f32 %v235, 1e-06
        %v237 = vrsqrt.pop %v236
        %v238 = vmul.f32 %v237, %v236
        %v239 = vmul.f32 %v238, %v237
        %v240 = vmul.f32 0.5, %v239
        %v241 = vsub.f32 1.5, %v240
        %v242 = vmul.f32 %v237, %v241
        %vm243 = vweird.f32 %v236
        %vm244 = vweird.f32 %v237
        %vm245 = vmor %vm243, %vm244
        %v246 = vsel %vm245, %v237, %v242
        %v247 = vmul.f32 %v221, %v246
        %v249 = vperm.slane %v222, 0
        %v251 = vmul.f32 %v247, %v249
        %v252 = vpack.c.bf16 %v251, %v251
        %v253 = vld [vmem:[%s2] sm:$0xf]
        %v254 = vld [vmem:[%s2 + $0x4] sm:$0xf]
        %v255 = vld [vmem:[%s2 + $0x8] sm:$0xf]
        %v256 = vld [vmem:[%s2 + $0xc] sm:$0xf]
        %v257 = vld [vmem:[%s2 + $0x10] sm:$0xf]
        %v258 = vld [vmem:[%s2 + $0x14] sm:$0xf]
        %v259 = vld [vmem:[%s2 + $0x18] sm:$0xf]
        %v260 = vld [vmem:[%s2 + $0x1c] sm:$0xf]
        %v269 = vunpack.c.l.b16 %v253
        %v270 = vunpack.c.l.b16 %v254
        %v271 = vunpack.c.l.b16 %v255
        %v272 = vunpack.c.l.b16 %v256
        %v273 = vunpack.c.l.b16 %v257
        %v274 = vunpack.c.l.b16 %v258
        %v275 = vunpack.c.l.b16 %v259
        %v276 = vunpack.c.l.b16 %v260
        %v277 = vpack.c.b16 %v270, %v269
        %v278 = vpack.c.b16 %v272, %v271
        %v279 = vpack.c.b16 %v274, %v273
        %v280 = vpack.c.b16 %v276, %v275
        %v286 = vsel %vm224, %v252, 0
        %288 = vmatpush.bf16.msra.mxu0 0
        %289 = vmatpush.bf16.msra.mxu0 0
        %290 = vmatpush.bf16.msra.mxu0 0
        %291 = vmatpush.bf16.msra.mxu0 0
        %292 = vmatpush.bf16.msra.mxu0 %v280
        %293 = vmatpush.bf16.msra.mxu0 %v279
        %294 = vmatpush.bf16.msra.mxu0 %v278
        %295 = vmatpush.bf16.msra.mxu0 %v277
        %296 = vmatmul.bf16.gmra.mxu0 %v286
        %v297 = vpop.f32.mrf.mxu0
        %v298 = vadd.f32 0.0, %v297
        %v299 = vpop.f32.mrf.mxu0
        %300 = vdwg.mxu0
        %v301 = vld [vmem:[%s3] sm:$0xf]
        %v302 = vld [vmem:[%s3 + $0x4] sm:$0xf]
        %v303 = vld [vmem:[%s3 + $0x8] sm:$0xf]
        %v304 = vld [vmem:[%s3 + $0xc] sm:$0xf]
        %v305 = vld [vmem:[%s3 + $0x10] sm:$0xf]
        %v306 = vld [vmem:[%s3 + $0x14] sm:$0xf]
        %v307 = vld [vmem:[%s3 + $0x18] sm:$0xf]
        %v308 = vld [vmem:[%s3 + $0x1c] sm:$0xf]
        %v317 = vunpack.c.l.b16 %v301
        %v318 = vunpack.c.l.b16 %v302
        %v319 = vunpack.c.l.b16 %v303
        %v320 = vunpack.c.l.b16 %v304
        %v321 = vunpack.c.l.b16 %v305
        %v322 = vunpack.c.l.b16 %v306
        %v323 = vunpack.c.l.b16 %v307
        %v324 = vunpack.c.l.b16 %v308
        %v325 = vpack.c.b16 %v318, %v317
        %v326 = vpack.c.b16 %v320, %v319
        %v327 = vpack.c.b16 %v322, %v321
        %v328 = vpack.c.b16 %v324, %v323
        %333 = vmatpush.bf16.msra.mxu0 0
        %334 = vmatpush.bf16.msra.mxu0 0
        %335 = vmatpush.bf16.msra.mxu0 0
        %336 = vmatpush.bf16.msra.mxu0 0
        %337 = vmatpush.bf16.msra.mxu0 %v328
        %338 = vmatpush.bf16.msra.mxu0 %v327
        %339 = vmatpush.bf16.msra.mxu0 %v326
        %340 = vmatpush.bf16.msra.mxu0 %v325
        %341 = vmatmul.bf16.gmra.mxu0 %v286
        %v342 = vpop.f32.mrf.mxu0
        %v343 = vadd.f32 0.0, %v342
        %v344 = vpop.f32.mrf.mxu0
        %345 = vdwg.mxu0
        %v346 = vxor.u32 %v298, 2147483648
        %v347 = vmul.f32 %v346, 1.442695
        %v348 = vpow.pop %v347
        %v349 = vadd.f32 %v348, 1.0
        %v350 = vrcp.pop %v349
        %v351 = vmul.f32 %v349, %v350
        %v352 = vsub.f32 1.0, %v351
        %v353 = vmul.f32 %v350, %v352
        %v354 = vadd.f32 %v350, %v353
        %vm355 = vweird.f32 %v349
        %vm356 = vweird.f32 %v350
        %vm357 = vmor %vm355, %vm356
        %v358 = vsel %vm357, %v350, %v354
        %v359 = vand.u32 2147483647, %v349
        %vm360 = vcmp.eq.f32.partialorder %v359, 8.507059e+37
        %v361 = vand.u32 %v349, 2147483648
        %v362 = vor.u32 1.1754944e-38, %v361
        %v363 = vsel %vm360, %v362, %v358
        %v364 = vmul.f32 1.0, %v363
        %v365 = vmul.f32 %v298, %v364
        %v366 = vmul.f32 %v365, %v343
        %v367 = vpack.c.bf16 %v366, %v366
        %v368 = vld [vmem:[%s4] sm:$0xf]
        %v369 = vld [vmem:[%s4 + $0x4] sm:$0xf]
        %v370 = vld [vmem:[%s4 + $0x8] sm:$0xf]
        %v371 = vld [vmem:[%s4 + $0xc] sm:$0xf]
        %v372 = vld [vmem:[%s4 + $0x10] sm:$0xf]
        %v373 = vld [vmem:[%s4 + $0x14] sm:$0xf]
        %v374 = vld [vmem:[%s4 + $0x18] sm:$0xf]
        %v375 = vld [vmem:[%s4 + $0x1c] sm:$0xf]
        %v376 = vld [vmem:[%s4 + $0x20] sm:$0xf]
        %v377 = vld [vmem:[%s4 + $0x24] sm:$0xf]
        %v378 = vld [vmem:[%s4 + $0x28] sm:$0xf]
        %v379 = vld [vmem:[%s4 + $0x2c] sm:$0xf]
        %v380 = vld [vmem:[%s4 + $0x30] sm:$0xf]
        %v381 = vld [vmem:[%s4 + $0x34] sm:$0xf]
        %v382 = vld [vmem:[%s4 + $0x38] sm:$0xf]
        %v383 = vld [vmem:[%s4 + $0x3c] sm:$0xf]
        %v400 = vunpack.c.l.b16 %v368
        %v401 = vunpack.c.l.b16 %v369
        %v402 = vunpack.c.l.b16 %v370
        %v403 = vunpack.c.l.b16 %v371
        %v404 = vunpack.c.l.b16 %v372
        %v405 = vunpack.c.l.b16 %v373
        %v406 = vunpack.c.l.b16 %v374
        %v407 = vunpack.c.l.b16 %v375
        %v408 = vunpack.c.l.b16 %v376
        %v409 = vunpack.c.l.b16 %v377
        %v410 = vunpack.c.l.b16 %v378
        %v411 = vunpack.c.l.b16 %v379
        %v412 = vunpack.c.l.b16 %v380
        %v413 = vunpack.c.l.b16 %v381
        %v414 = vunpack.c.l.b16 %v382
        %v415 = vunpack.c.l.b16 %v383
        %v416 = vpack.c.b16 %v401, %v400
        %v417 = vpack.c.b16 %v403, %v402
        %v418 = vpack.c.b16 %v405, %v404
        %v419 = vpack.c.b16 %v407, %v406
        %v420 = vpack.c.b16 %v409, %v408
        %v421 = vpack.c.b16 %v411, %v410
        %v422 = vpack.c.b16 %v413, %v412
        %v423 = vpack.c.b16 %v415, %v414
        %432 = vmatpush.bf16.msra.mxu0 %v423
        %433 = vmatpush.bf16.msra.mxu0 %v422
        %434 = vmatpush.bf16.msra.mxu0 %v421
        %435 = vmatpush.bf16.msra.mxu0 %v420
        %436 = vmatpush.bf16.msra.mxu0 %v419
        %437 = vmatpush.bf16.msra.mxu0 %v418
        %438 = vmatpush.bf16.msra.mxu0 %v417
        %439 = vmatpush.bf16.msra.mxu0 %v416
        %440 = vmatmul.bf16.gmra.mxu0 %v367
        %v441 = vpop.f32.mrf.mxu0
        %v442 = vadd.f32 0.0, %v441
        %v443 = vpop.f32.mrf.mxu0
        %444 = vdwg.mxu0
        %v445 = vadd.f32 %v221, %v442
        %446 = vst.msk [vmem:[%s215] sm:$0xff] %vm224, %v445
        %s447 = sand.u32 %s137, 1
        %s448 = scalar_lea.sflag [#allocation3], %s447
        %s449 = sand.u32 %s137, 1
        %s450 = smul.addr %s449, 8
        %s451 = scalar_lea.vmem [#allocation2], %s450
        // Predicated region
        $region41: #{_lambda_.5} parent=39 // pred_check
          %p452 = pneg %p147
        $region42: #{_lambda_.5} parent=39 // pred_check_branch
          %454 = sbr.rel (%p452) target = $region44
        $region43: #{_lambda_.5} parent=39 // pred_region
          %456 = vsyncadd %s448, 0
          %s457 = smul.addr %s19, 8
          %s458 = scalar_lea.hbm %s5, %s457
          %s460 = sshll.u32 %s451, 4
          %s461 = int_to_ptr.vmem [resolvable:$true] %s460
          %s462 = sshll.u32 %s458, 4
          %s463 = int_to_ptr.hbm [resolvable:$true] %s462
          %465 = dma.vmem_to_hbm [thread:$0]  %s461, 128, %s463, %s448
        $region44: #{_lambda_.5} parent=39 // pred_fallthru
          _
      $region40: #{_lambda_.5} parent=5 // pred_fallthru
        _
      %p466 = scmp.le.s32.totalorder 2, %s14
      // Predicated region
      $region45: #{_lambda_.5} parent=5 // pred_check
        %p467 = pneg %p466
      $region46: #{_lambda_.5} parent=5 // pred_check_branch
        %469 = sbr.rel (%p467) target = $region48
      $region47: #{_lambda_.5} parent=5 // pred_region
        %s470 = ssub.s32 %s14, 2
        // Predicated region
        $region49: #{_lambda_.5} parent=47 // pred_check
          %p471 = pneg %p153
        $region50: #{_lambda_.5} parent=47 // pred_check_branch
          %473 = sbr.rel (%p471) target = $region52
        $region51: #{_lambda_.5} parent=47 // pred_region
          %s474 = sand.u32 %s138, 1
          %s475 = scalar_lea.sflag [#allocation3], %s474
          %s476 = sand.u32 %s138, 1
          %s477 = smul.addr %s476, 8
          %s478 = scalar_lea.vmem [#allocation2], %s477
          %480 = dma.done %s475, 128
        $region52: #{_lambda_.5} parent=47 // pred_fallthru
          _
      $region48: #{_lambda_.5} parent=5 // pred_fallthru
        _
    $region6: #{_lambda_.5} parent=1 // loop_footer
      %s18 = sadd.s32 1, %s14
    $region7: #{_lambda_.5} parent=1 // loop_footer_branch
      %13 = sbr.rel target = $region3
    $region8: #{_lambda_.5} parent=1 // loop_exit
      _
    %481 = vsyncpa [#allocation3], 1
    %s482 = scalar_lea.sflag [#allocation3], 1
    %483 = vsyncpa %s482, 1

// kernel: _lambda_.3
$region0: #{_lambda_.3}
  #allocation0 [shape = 'u32[]', space=smem, size = 0x4, offset = 0x4, fixed_abs, tag = 'smem constant byte address 0x4 - core index']
  #allocation1 [shape = 'u32[72,128]{1,0:T(1,128)}', space=vmem, size = 0x9000, scoped, tag = 'internal scratch']
  %s0 = inlined_call_operand.hbm [shape: f32[16,64], index: 0, kind: input, shape index: {}]
  %s1 = inlined_call_operand.vmem [shape: f32[1,64], index: 1, kind: input, shape index: {}]
  %s2 = inlined_call_operand.hbm [shape: bf16[64,80], index: 2, kind: input, shape index: {}]
  %s3 = inlined_call_operand.vmem [shape: f32[1,32], index: 3, kind: input, shape index: {}]
  %s4 = inlined_call_operand.hbm [shape: bf16[32,192], index: 4, kind: input, shape index: {}]
  %s5 = inlined_call_operand.vmem [shape: f32[1,32], index: 5, kind: input, shape index: {}]
  %s6 = inlined_call_operand.hbm [shape: bf16[32,256], index: 6, kind: input, shape index: {}]
  %s7 = inlined_call_operand.vmem [shape: bf16[2,8,128], index: 7, kind: output, shape index: {0}]
  %s8 = inlined_call_operand.vmem [shape: bf16[2,8,64], index: 8, kind: output, shape index: {1}]
  %s9 = inlined_call_operand.vmem [shape: bf16[2,8,128], index: 9, kind: output, shape index: {2}]
  %s10 = inlined_call_operand.vmem [shape: bf16[2,8,16], index: 10, kind: output, shape index: {3}]
  %s11 = inlined_call_operand.vmem [shape: bf16[2,8,128], index: 11, kind: output, shape index: {4}]
  %12 = xla_tuple %s7, %s8, %s9, %s10, %s11
  %s13 = sld [smem:[#allocation0]]
  $region109: #{_lambda_.3} parent=0
    _
  %s15 = ssub.s32 1, %s13
  %s16 = scalar_select 0, %s15, %s13
  $region1: #{_lambda_.3} parent=0
    #allocation2 [shape = 'u8[8192]{0}', space=vmem, size = 0x2000, scoped, tag = 'input window, operand 0']
    #allocation3 [shape = 's32[2]{0}', space=sflag, size = 0x8, scoped, tag = 'scoped memory for _lambda_.3']
    #allocation4 [shape = 'u8[16384]{0}', space=vmem, size = 0x4000, scoped, tag = 'input window, operand 2, single buffered']
    #allocation5 [shape = 's32[1]{0}', space=sflag, size = 0x4, scoped, tag = 'scoped memory for _lambda_.3']
    #allocation6 [shape = 'u8[16384]{0}', space=vmem, size = 0x4000, scoped, tag = 'input window, operand 4, single buffered']
    #allocation7 [shape = 'u8[16384]{0}', space=vmem, size = 0x4000, scoped, tag = 'input window, operand 6, single buffered']
    #allocation8 [shape = 's32[1]{0}', space=sflag, size = 0x4, scoped, tag = 'scoped memory for _lambda_.3']
    %17 = vsyncpa [#allocation3], 0
    %s18 = scalar_lea.sflag [#allocation3], 1
    %19 = vsyncpa %s18, 0
    %20 = vsyncpa [#allocation5], 0
    %21 = vsyncpa [#allocation8], 0
    loop: start=0, step=1, limit=4
    $region2: #{_lambda_.3} parent=1 // loop_pre_header
      _
    $region3: #{_lambda_.3} parent=1 // loop_header
      %s23 = sphi 0, %s27
      %p24 = scmp.ge.s32.totalorder %s23, 4
      %s33 = sphi 0, %s35
      %s36 = sphi 0, %s33
      %s37 = sphi 0, %s36
      %s53 = sphi 0, %s37
      %s57 = sphi 0, %s57
      %s59 = sphi 0, %s57
      %s60 = sphi 0, %s59
      %s74 = sphi 0, %s60
      %s78 = sphi 0, %s78
      %s80 = sphi 0, %s78
      %s81 = sphi 0, %s80
      %s95 = sphi 0, %s81
      %s99 = sphi 0, %s99
      %s101 = sphi 0, %s99
      %s102 = sphi 0, %s101
      %s116 = sphi 0, %s102
      %s120 = sphi 0, %s120
      %s122 = sphi 0, %s120
      %s123 = sphi 0, %s122
      %s137 = sphi 0, %s123
      %s141 = sphi 0, %s141
      %s143 = sphi 0, %s141
      %s144 = sphi 0, %s143
      %s158 = sphi 0, %s144
      %s162 = sphi 0, %s162
      %s164 = sphi 0, %s162
      %s165 = sphi 0, %s164
      %s179 = sphi 0, %s165
      %s185 = sphi 0, %s187
      %s188 = sphi 0, %s185
      %s189 = sphi 0, %s188
      %s205 = sphi 0, %s189
      %s211 = sphi 0, %s213
      %s214 = sphi 0, %s211
      %s215 = sphi 0, %s214
      %s231 = sphi 0, %s215
      %s237 = sphi 0, %s239
      %s240 = sphi 0, %s237
      %s241 = sphi 0, %s240
      %s257 = sphi 0, %s241
      %s263 = sphi 0, %s265
      %s266 = sphi 0, %s263
      %s267 = sphi 0, %s266
      %s283 = sphi 0, %s267
      %s289 = sphi 0, %s291
      %s292 = sphi 0, %s289
      %s293 = sphi 0, %s292
      %s309 = sphi 0, %s293
    $region4: #{_lambda_.3} parent=1 // loop_header_branch
      %26 = sbr.rel (%p24) target = $region8
    $region5: #{_lambda_.3} parent=1 // loop_body
      %s28 = ssub.s32 %s23, 1
      %s29 = ssub.s32 %s23, 2
      %s30 = sadd.s32 %s23, 1
      %s31 = ssub.s32 %s23, %s30
      %p32 = scmp.eq.s32.totalorder %s31, 0
      %s34 = sadd.s32 %s33, 1
      %s35 = scalar_select %p32, %s33, %s34
      %p38 = pneg %p32
      %p39 = scmp.eq.s32.totalorder %s23, 1
      %p40 = por %p38, %p39
      %p41 = scmp.ne.s32.totalorder %s33, %s36
      %p42 = scmp.eq.s32.totalorder %s23, 0
      %p43 = por %p41, %p42
      %p44 = scmp.ne.s32.totalorder %s33, %s36
      %p45 = scmp.eq.s32.totalorder %s28, 1
      %p46 = por %p44, %p45
      %p47 = scmp.ne.s32.totalorder %s36, %s37
      %p48 = scmp.eq.s32.totalorder %s28, 0
      %p49 = por %p47, %p48
      %p50 = scmp.ne.s32.totalorder %s36, %s37
      %p51 = scmp.eq.s32.totalorder %s29, 1
      %p52 = por %p50, %p51
      %p54 = scmp.ne.s32.totalorder %s37, %s53
      %p55 = scmp.eq.s32.totalorder %s29, 0
      %p56 = por %p54, %p55
      %s58 = sadd.s32 %s57, 1
      %p61 = scmp.eq.s32.totalorder %s23, 1
      %p62 = scmp.ne.s32.totalorder %s57, %s59
      %p63 = scmp.eq.s32.totalorder %s23, 0
      %p64 = por %p62, %p63
      %p65 = scmp.ne.s32.totalorder %s57, %s59
      %p66 = scmp.eq.s32.totalorder %s28, 1
      %p67 = por %p65, %p66
      %p68 = scmp.ne.s32.totalorder %s59, %s60
      %p69 = scmp.eq.s32.totalorder %s28, 0
      %p70 = por %p68, %p69
      %p71 = scmp.ne.s32.totalorder %s59, %s60
      %p72 = scmp.eq.s32.totalorder %s29, 1
      %p73 = por %p71, %p72
      %p75 = scmp.ne.s32.totalorder %s60, %s74
      %p76 = scmp.eq.s32.totalorder %s29, 0
      %p77 = por %p75, %p76
      %s79 = sadd.s32 %s78, 1
      %p82 = scmp.eq.s32.totalorder %s23, 1
      %p83 = scmp.ne.s32.totalorder %s78, %s80
      %p84 = scmp.eq.s32.totalorder %s23, 0
      %p85 = por %p83, %p84
      %p86 = scmp.ne.s32.totalorder %s78, %s80
      %p87 = scmp.eq.s32.totalorder %s28, 1
      %p88 = por %p86, %p87
      %p89 = scmp.ne.s32.totalorder %s80, %s81
      %p90 = scmp.eq.s32.totalorder %s28, 0
      %p91 = por %p89, %p90
      %p92 = scmp.ne.s32.totalorder %s80, %s81
      %p93 = scmp.eq.s32.totalorder %s29, 1
      %p94 = por %p92, %p93
      %p96 = scmp.ne.s32.totalorder %s81, %s95
      %p97 = scmp.eq.s32.totalorder %s29, 0
      %p98 = por %p96, %p97
      %s100 = sadd.s32 %s99, 1
      %p103 = scmp.eq.s32.totalorder %s23, 1
      %p104 = scmp.ne.s32.totalorder %s99, %s101
      %p105 = scmp.eq.s32.totalorder %s23, 0
      %p106 = por %p104, %p105
      %p107 = scmp.ne.s32.totalorder %s99, %s101
      %p108 = scmp.eq.s32.totalorder %s28, 1
      %p109 = por %p107, %p108
      %p110 = scmp.ne.s32.totalorder %s101, %s102
      %p111 = scmp.eq.s32.totalorder %s28, 0
      %p112 = por %p110, %p111
      %p113 = scmp.ne.s32.totalorder %s101, %s102
      %p114 = scmp.eq.s32.totalorder %s29, 1
      %p115 = por %p113, %p114
      %p117 = scmp.ne.s32.totalorder %s102, %s116
      %p118 = scmp.eq.s32.totalorder %s29, 0
      %p119 = por %p117, %p118
      %s121 = sadd.s32 %s120, 1
      %p124 = scmp.eq.s32.totalorder %s23, 1
      %p125 = scmp.ne.s32.totalorder %s120, %s122
      %p126 = scmp.eq.s32.totalorder %s23, 0
      %p127 = por %p125, %p126
      %p128 = scmp.ne.s32.totalorder %s120, %s122
      %p129 = scmp.eq.s32.totalorder %s28, 1
      %p130 = por %p128, %p129
      %p131 = scmp.ne.s32.totalorder %s122, %s123
      %p132 = scmp.eq.s32.totalorder %s28, 0
      %p133 = por %p131, %p132
      %p134 = scmp.ne.s32.totalorder %s122, %s123
      %p135 = scmp.eq.s32.totalorder %s29, 1
      %p136 = por %p134, %p135
      %p138 = scmp.ne.s32.totalorder %s123, %s137
      %p139 = scmp.eq.s32.totalorder %s29, 0
      %p140 = por %p138, %p139
      %s142 = sadd.s32 %s141, 1
      %p145 = scmp.eq.s32.totalorder %s23, 1
      %p146 = scmp.ne.s32.totalorder %s141, %s143
      %p147 = scmp.eq.s32.totalorder %s23, 0
      %p148 = por %p146, %p147
      %p149 = scmp.ne.s32.totalorder %s141, %s143
      %p150 = scmp.eq.s32.totalorder %s28, 1
      %p151 = por %p149, %p150
      %p152 = scmp.ne.s32.totalorder %s143, %s144
      %p153 = scmp.eq.s32.totalorder %s28, 0
      %p154 = por %p152, %p153
      %p155 = scmp.ne.s32.totalorder %s143, %s144
      %p156 = scmp.eq.s32.totalorder %s29, 1
      %p157 = por %p155, %p156
      %p159 = scmp.ne.s32.totalorder %s144, %s158
      %p160 = scmp.eq.s32.totalorder %s29, 0
      %p161 = por %p159, %p160
      %s163 = sadd.s32 %s162, 1
      %p166 = scmp.eq.s32.totalorder %s23, 1
      %p167 = scmp.ne.s32.totalorder %s162, %s164
      %p168 = scmp.eq.s32.totalorder %s23, 0
      %p169 = por %p167, %p168
      %p170 = scmp.ne.s32.totalorder %s162, %s164
      %p171 = scmp.eq.s32.totalorder %s28, 1
      %p172 = por %p170, %p171
      %p173 = scmp.ne.s32.totalorder %s164, %s165
      %p174 = scmp.eq.s32.totalorder %s28, 0
      %p175 = por %p173, %p174
      %p176 = scmp.ne.s32.totalorder %s164, %s165
      %p177 = scmp.eq.s32.totalorder %s29, 1
      %p178 = por %p176, %p177
      %p180 = scmp.ne.s32.totalorder %s165, %s179
      %p181 = scmp.eq.s32.totalorder %s29, 0
      %p182 = por %p180, %p181
      %s183 = ssub.s32 %s23, %s30
      %p184 = scmp.eq.s32.totalorder %s183, 0
      %s186 = sadd.s32 %s185, 1
      %s187 = scalar_select %p184, %s185, %s186
      %p190 = pneg %p184
      %p191 = scmp.eq.s32.totalorder %s23, 1
      %p192 = por %p190, %p191
      %p193 = scmp.ne.s32.totalorder %s185, %s188
      %p194 = scmp.eq.s32.totalorder %s23, 0
      %p195 = por %p193, %p194
      %p196 = scmp.ne.s32.totalorder %s185, %s188
      %p197 = scmp.eq.s32.totalorder %s28, 1
      %p198 = por %p196, %p197
      %p199 = scmp.ne.s32.totalorder %s188, %s189
      %p200 = scmp.eq.s32.totalorder %s28, 0
      %p201 = por %p199, %p200
      %p202 = scmp.ne.s32.totalorder %s188, %s189
      %p203 = scmp.eq.s32.totalorder %s29, 1
      %p204 = por %p202, %p203
      %p206 = scmp.ne.s32.totalorder %s189, %s205
      %p207 = scmp.eq.s32.totalorder %s29, 0
      %p208 = por %p206, %p207
      %s209 = ssub.s32 %s23, %s30
      %p210 = scmp.eq.s32.totalorder %s209, 0
      %s212 = sadd.s32 %s211, 1
      %s213 = scalar_select %p210, %s211, %s212
      %p216 = pneg %p210
      %p217 = scmp.eq.s32.totalorder %s23, 1
      %p218 = por %p216, %p217
      %p219 = scmp.ne.s32.totalorder %s211, %s214
      %p220 = scmp.eq.s32.totalorder %s23, 0
      %p221 = por %p219, %p220
      %p222 = scmp.ne.s32.totalorder %s211, %s214
      %p223 = scmp.eq.s32.totalorder %s28, 1
      %p224 = por %p222, %p223
      %p225 = scmp.ne.s32.totalorder %s214, %s215
      %p226 = scmp.eq.s32.totalorder %s28, 0
      %p227 = por %p225, %p226
      %p228 = scmp.ne.s32.totalorder %s214, %s215
      %p229 = scmp.eq.s32.totalorder %s29, 1
      %p230 = por %p228, %p229
      %p232 = scmp.ne.s32.totalorder %s215, %s231
      %p233 = scmp.eq.s32.totalorder %s29, 0
      %p234 = por %p232, %p233
      %s235 = ssub.s32 %s23, %s30
      %p236 = scmp.eq.s32.totalorder %s235, 0
      %s238 = sadd.s32 %s237, 1
      %s239 = scalar_select %p236, %s237, %s238
      %p242 = pneg %p236
      %p243 = scmp.eq.s32.totalorder %s23, 1
      %p244 = por %p242, %p243
      %p245 = scmp.ne.s32.totalorder %s237, %s240
      %p246 = scmp.eq.s32.totalorder %s23, 0
      %p247 = por %p245, %p246
      %p248 = scmp.ne.s32.totalorder %s237, %s240
      %p249 = scmp.eq.s32.totalorder %s28, 1
      %p250 = por %p248, %p249
      %p251 = scmp.ne.s32.totalorder %s240, %s241
      %p252 = scmp.eq.s32.totalorder %s28, 0
      %p253 = por %p251, %p252
      %p254 = scmp.ne.s32.totalorder %s240, %s241
      %p255 = scmp.eq.s32.totalorder %s29, 1
      %p256 = por %p254, %p255
      %p258 = scmp.ne.s32.totalorder %s241, %s257
      %p259 = scmp.eq.s32.totalorder %s29, 0
      %p260 = por %p258, %p259
      %s261 = ssub.s32 %s23, %s30
      %p262 = scmp.eq.s32.totalorder %s261, 0
      %s264 = sadd.s32 %s263, 1
      %s265 = scalar_select %p262, %s263, %s264
      %p268 = pneg %p262
      %p269 = scmp.eq.s32.totalorder %s23, 1
      %p270 = por %p268, %p269
      %p271 = scmp.ne.s32.totalorder %s263, %s266
      %p272 = scmp.eq.s32.totalorder %s23, 0
      %p273 = por %p271, %p272
      %p274 = scmp.ne.s32.totalorder %s263, %s266
      %p275 = scmp.eq.s32.totalorder %s28, 1
      %p276 = por %p274, %p275
      %p277 = scmp.ne.s32.totalorder %s266, %s267
      %p278 = scmp.eq.s32.totalorder %s28, 0
      %p279 = por %p277, %p278
      %p280 = scmp.ne.s32.totalorder %s266, %s267
      %p281 = scmp.eq.s32.totalorder %s29, 1
      %p282 = por %p280, %p281
      %p284 = scmp.ne.s32.totalorder %s267, %s283
      %p285 = scmp.eq.s32.totalorder %s29, 0
      %p286 = por %p284, %p285
      %s287 = ssub.s32 %s23, %s30
      %p288 = scmp.eq.s32.totalorder %s287, 0
      %s290 = sadd.s32 %s289, 1
      %s291 = scalar_select %p288, %s289, %s290
      %p294 = pneg %p288
      %p295 = scmp.eq.s32.totalorder %s23, 1
      %p296 = por %p294, %p295
      %p297 = scmp.ne.s32.totalorder %s289, %s292
      %p298 = scmp.eq.s32.totalorder %s23, 0
      %p299 = por %p297, %p298
      %p300 = scmp.ne.s32.totalorder %s289, %s292
      %p301 = scmp.eq.s32.totalorder %s28, 1
      %p302 = por %p300, %p301
      %p303 = scmp.ne.s32.totalorder %s292, %s293
      %p304 = scmp.eq.s32.totalorder %s28, 0
      %p305 = por %p303, %p304
      %p306 = scmp.ne.s32.totalorder %s292, %s293
      %p307 = scmp.eq.s32.totalorder %s29, 1
      %p308 = por %p306, %p307
      %p310 = scmp.ne.s32.totalorder %s293, %s309
      %p311 = scmp.eq.s32.totalorder %s29, 0
      %p312 = por %p310, %p311
      %p313 = scmp.le.s32.totalorder 1, %s23
      %p314 = scmp.lt.s32.totalorder %s23, 3
      %p315 = pnand %p313, %p314
      %p316 = pneg %p315
      // Predicated region
      $region9: #{_lambda_.3} parent=5 // pred_check
        _
      $region10: #{_lambda_.3} parent=5 // pred_check_branch
        %318 = sbr.rel (%p315) target = $region12
      $region11: #{_lambda_.3} parent=5 // pred_region
        %s319 = ssub.s32 %s23, 1
        // Predicated region
        $region13: #{_lambda_.3} parent=11 // pred_check
          %p320 = pneg %p70
        $region14: #{_lambda_.3} parent=11 // pred_check_branch
          %322 = sbr.rel (%p320) target = $region16
        $region15: #{_lambda_.3} parent=11 // pred_region
          _
        $region16: #{_lambda_.3} parent=11 // pred_fallthru
          _
        // Predicated region
        $region17: #{_lambda_.3} parent=11 // pred_check
          %p323 = pneg %p91
        $region18: #{_lambda_.3} parent=11 // pred_check_branch
          %325 = sbr.rel (%p323) target = $region20
        $region19: #{_lambda_.3} parent=11 // pred_region
          %327 = vsyncadd [#allocation5], 0
          %s328 = sshll.u32 %s2, 4
          %s329 = int_to_ptr.hbm [resolvable:$true] %s328
          %s330 = sshll.u32 [#allocation4], 4
          %s331 = int_to_ptr.vmem [resolvable:$true] %s330
          %336 = dma.hbm_to_vmem [thread:$0]  %s329, 512, %s331, [#allocation5], 64, 64, 4
        $region20: #{_lambda_.3} parent=11 // pred_fallthru
          _
        // Predicated region
        $region21: #{_lambda_.3} parent=11 // pred_check
          %p337 = pneg %p112
        $region22: #{_lambda_.3} parent=11 // pred_check_branch
          %339 = sbr.rel (%p337) target = $region24
        $region23: #{_lambda_.3} parent=11 // pred_region
          _
        $region24: #{_lambda_.3} parent=11 // pred_fallthru
          _
        // Predicated region
        $region25: #{_lambda_.3} parent=11 // pred_check
          %p340 = pneg %p133
        $region26: #{_lambda_.3} parent=11 // pred_check_branch
          %342 = sbr.rel (%p340) target = $region28
        $region27: #{_lambda_.3} parent=11 // pred_region
          %344 = vsyncadd [#allocation5], 0
          %s345 = sshll.u32 %s4, 4
          %s346 = int_to_ptr.hbm [resolvable:$true] %s345
          %s347 = sshll.u32 [#allocation6], 4
          %s348 = int_to_ptr.vmem [resolvable:$true] %s347
          %353 = dma.hbm_to_vmem [thread:$0]  %s346, 512, %s348, [#allocation5], 128, 128, 8
        $region28: #{_lambda_.3} parent=11 // pred_fallthru
          _
        // Predicated region
        $region29: #{_lambda_.3} parent=11 // pred_check
          %p354 = pneg %p154
        $region30: #{_lambda_.3} parent=11 // pred_check_branch
          %356 = sbr.rel (%p354) target = $region32
        $region31: #{_lambda_.3} parent=11 // pred_region
          _
        $region32: #{_lambda_.3} parent=11 // pred_fallthru
          _
        // Predicated region
        $region33: #{_lambda_.3} parent=11 // pred_check
          %p357 = pneg %p175
        $region34: #{_lambda_.3} parent=11 // pred_check_branch
          %359 = sbr.rel (%p357) target = $region36
        $region35: #{_lambda_.3} parent=11 // pred_region
          %361 = vsyncadd [#allocation8], 0
          %s362 = sshll.u32 %s6, 4
          %s363 = int_to_ptr.hbm [resolvable:$true] %s362
          %s364 = sshll.u32 [#allocation7], 4
          %s365 = int_to_ptr.vmem [resolvable:$true] %s364
          %370 = dma.hbm_to_vmem [thread:$0]  %s363, 512, %s365, [#allocation8], 128, 128, 8
        $region36: #{_lambda_.3} parent=11 // pred_fallthru
          _
      $region12: #{_lambda_.3} parent=5 // pred_fallthru
        _
      %p371 = scmp.lt.s32.totalorder %s23, 2
      // Predicated region
      $region37: #{_lambda_.3} parent=5 // pred_check
        %p372 = pneg %p371
      $region38: #{_lambda_.3} parent=5 // pred_check_branch
        %374 = sbr.rel (%p372) target = $region40
      $region39: #{_lambda_.3} parent=5 // pred_region
        // Predicated region
        $region41: #{_lambda_.3} parent=39 // pred_check
          %p375 = pneg %p43
        $region42: #{_lambda_.3} parent=39 // pred_check_branch
          %377 = sbr.rel (%p375) target = $region44
        $region43: #{_lambda_.3} parent=39 // pred_region
          %s378 = sand.u32 %s33, 1
          %s379 = scalar_lea.sflag [#allocation3], %s378
          %s380 = sand.u32 %s33, 1
          %s381 = smul.addr %s380, 8
          %s382 = scalar_lea.vmem [#allocation2], %s381
          %384 = vsyncadd %s379, 0
          %s385 = smul.addr %s23, 8
          %s386 = scalar_lea.hbm %s0, %s385
          %s388 = sshll.u32 %s386, 4
          %s389 = int_to_ptr.hbm [resolvable:$true] %s388
          %s390 = sshll.u32 %s382, 4
          %s391 = int_to_ptr.vmem [resolvable:$true] %s390
          %393 = dma.hbm_to_vmem [thread:$0]  %s389, 128, %s391, %s379
        $region44: #{_lambda_.3} parent=39 // pred_fallthru
          _
      $region40: #{_lambda_.3} parent=5 // pred_fallthru
        _
      %p394 = scmp.le.s32.totalorder 1, %s23
      %p395 = scmp.lt.s32.totalorder %s23, 3
      %p396 = pnand %p394, %p395
      %p397 = pneg %p396
      // Predicated region
      $region45: #{_lambda_.3} parent=5 // pred_check
        _
      $region46: #{_lambda_.3} parent=5 // pred_check_branch
        %399 = sbr.rel (%p396) target = $region48
      $region47: #{_lambda_.3} parent=5 // pred_region
        %s400 = ssub.s32 %s23, 1
        %s401 = sand.u32 %s36, 1
        %s402 = scalar_lea.sflag [#allocation3], %s401
        %s403 = sand.u32 %s36, 1
        %s404 = smul.addr %s403, 8
        %s405 = scalar_lea.vmem [#allocation2], %s404
        // Predicated region
        $region49: #{_lambda_.3} parent=47 // pred_check
          %p406 = pneg %p49
        $region50: #{_lambda_.3} parent=47 // pred_check_branch
          %408 = sbr.rel (%p406) target = $region52
        $region51: #{_lambda_.3} parent=47 // pred_region
          %410 = dma.done %s402, 128
        $region52: #{_lambda_.3} parent=47 // pred_fallthru
          _
        // Predicated region
        $region53: #{_lambda_.3} parent=47 // pred_check
          %p411 = pneg %p91
        $region54: #{_lambda_.3} parent=47 // pred_check_branch
          %413 = sbr.rel (%p411) target = $region56
        $region55: #{_lambda_.3} parent=47 // pred_region
          %415 = dma.done [#allocation5], 512
        $region56: #{_lambda_.3} parent=47 // pred_fallthru
          _
        // Predicated region
        $region57: #{_lambda_.3} parent=47 // pred_check
          %p416 = pneg %p133
        $region58: #{_lambda_.3} parent=47 // pred_check_branch
          %418 = sbr.rel (%p416) target = $region60
        $region59: #{_lambda_.3} parent=47 // pred_region
          %420 = dma.done [#allocation5], 512
        $region60: #{_lambda_.3} parent=47 // pred_fallthru
          _
        // Predicated region
        $region61: #{_lambda_.3} parent=47 // pred_check
          %p421 = pneg %p175
        $region62: #{_lambda_.3} parent=47 // pred_check_branch
          %423 = sbr.rel (%p421) target = $region64
        $region63: #{_lambda_.3} parent=47 // pred_region
          %425 = dma.done [#allocation8], 512
        $region64: #{_lambda_.3} parent=47 // pred_fallthru
          _
        %s426 = sand.u32 %s36, 1
        %s427 = scalar_lea.sflag [#allocation3], %s426
        %s428 = sand.u32 %s36, 1
        %s429 = smul.addr %s428, 8
        %s430 = scalar_lea.vmem [#allocation2], %s429
        %p431 = pneg %p49
        %p432 = pneg %p46
        %p433 = pneg %p70
        %p434 = pneg %p67
        %p435 = pneg %p91
        %p436 = pneg %p88
        %p437 = pneg %p112
        %p438 = pneg %p109
        %p439 = pneg %p133
        %p440 = pneg %p130
        %p441 = pneg %p154
        %p442 = pneg %p151
        %p443 = pneg %p175
        %p444 = pneg %p172
        %p445 = pneg %p201
        %p446 = pneg %p198
        %p447 = scmp.lt.s32.totalorder %s28, 1
        %s448 = scalar_select %p447, %s28, 1
        %s449 = smul.addr %s448, 4
        %s450 = scalar_lea.vmem %s7, %s449
        %p451 = pneg %p227
        %p452 = pneg %p224
        %p453 = scmp.lt.s32.totalorder %s28, 1
        %s454 = scalar_select %p453, %s28, 1
        %s455 = smul.addr %s454, 4
        %s456 = scalar_lea.vmem %s8, %s455
        %p457 = pneg %p253
        %p458 = pneg %p250
        %p459 = scmp.lt.s32.totalorder %s28, 1
        %s460 = scalar_select %p459, %s28, 1
        %s461 = smul.addr %s460, 4
        %s462 = scalar_lea.vmem %s9, %s461
        %p463 = pneg %p279
        %p464 = pneg %p276
        %p465 = scmp.lt.s32.totalorder %s28, 1
        %s466 = scalar_select %p465, %s28, 1
        %s467 = smul.addr %s466, 4
        %s468 = scalar_lea.vmem %s10, %s467
        %p469 = pneg %p305
        %p470 = pneg %p302
        %p471 = scmp.lt.s32.totalorder %s28, 1
        %s472 = scalar_select %p471, %s28, 1
        %s473 = smul.addr %s472, 4
        %s474 = scalar_lea.vmem %s11, %s473
        %p475 = scmp.lt.s32.totalorder %s28, 1
        %s476 = scalar_select %p475, %s28, 1
        %s477 = smul.addr %s476, 4
        %s478 = scalar_lea.vmem %s7, %s477
        %p479 = scmp.lt.s32.totalorder %s28, 1
        %s480 = scalar_select %p479, %s28, 1
        %s481 = smul.addr %s480, 4
        %s482 = scalar_lea.vmem %s8, %s481
        %p483 = scmp.lt.s32.totalorder %s28, 1
        %s484 = scalar_select %p483, %s28, 1
        %s485 = smul.addr %s484, 4
        %s486 = scalar_lea.vmem %s9, %s485
        %p487 = scmp.lt.s32.totalorder %s28, 1
        %s488 = scalar_select %p487, %s28, 1
        %s489 = smul.addr %s488, 4
        %s490 = scalar_lea.vmem %s10, %s489
        %p491 = scmp.lt.s32.totalorder %s28, 1
        %s492 = scalar_select %p491, %s28, 1
        %s493 = smul.addr %s492, 4
        %s494 = scalar_lea.vmem %s11, %s493
        %v496 = vld [vmem:[%s405] sm:$0xff]
        %v497 = vld [vmem:[%s1] sm:$0x1]
        %v498 = vmul.f32 %v496, %v496
        %vm499 = vcmask 523264
        %v500 = vsel %vm499, %v498, 0.0
        %501 = vadd.xlane.f32.xlu0 %v500
        %v502 = vpop.xlane.xlu0 %501
        %v503 = vrcp.pop 64.0
        %v504 = vmul.f32 64.0, %v503
        %v505 = vsub.f32 1.0, %v504
        %v506 = vmul.f32 %v503, %v505
        %v507 = vadd.f32 %v503, %v506
        %vm508 = vweird.f32 %v503
        %v509 = vsel %vm508, %v503, %v507
        %v510 = vmul.f32 %v502, %v509
        %v511 = vadd.f32 %v510, 1e-06
        %v512 = vrsqrt.pop %v511
        %v513 = vmul.f32 %v512, %v511
        %v514 = vmul.f32 %v513, %v512
        %v515 = vmul.f32 0.5, %v514
        %v516 = vsub.f32 1.5, %v515
        %v517 = vmul.f32 %v512, %v516
        %vm518 = vweird.f32 %v511
        %vm519 = vweird.f32 %v512
        %vm520 = vmor %vm518, %vm519
        %v521 = vsel %vm520, %v512, %v517
        %v522 = vmul.f32 %v496, %v521
        %v524 = vperm.slane %v497, 0
        %v526 = vmul.f32 %v522, %v524
        %v527 = vpack.c.bf16 %v526, %v526
        %v528 = vld [vmem:[#allocation4] sm:$0xf]
        %v529 = vld [vmem:[#allocation4 + $0x4] sm:$0xf]
        %v530 = vld [vmem:[#allocation4 + $0x8] sm:$0xf]
        %v531 = vld [vmem:[#allocation4 + $0xc] sm:$0xf]
        %v532 = vld [vmem:[#allocation4 + $0x10] sm:$0xf]
        %v533 = vld [vmem:[#allocation4 + $0x14] sm:$0xf]
        %v534 = vld [vmem:[#allocation4 + $0x18] sm:$0xf]
        %v535 = vld [vmem:[#allocation4 + $0x1c] sm:$0xf]
        %v544 = vunpack.c.l.b16 %v528
        %v545 = vunpack.c.l.b16 %v529
        %v546 = vunpack.c.l.b16 %v530
        %v547 = vunpack.c.l.b16 %v531
        %v548 = vunpack.c.l.b16 %v532
        %v549 = vunpack.c.l.b16 %v533
        %v550 = vunpack.c.l.b16 %v534
        %v551 = vunpack.c.l.b16 %v535
        %v552 = vpack.c.b16 %v545, %v544
        %v553 = vpack.c.b16 %v547, %v546
        %v554 = vpack.c.b16 %v549, %v548
        %v555 = vpack.c.b16 %v551, %v550
        %v561 = vsel %vm499, %v527, 0
        %563 = vmatpush.bf16.msra.mxu0 0
        %564 = vmatpush.bf16.msra.mxu0 0
        %565 = vmatpush.bf16.msra.mxu0 0
        %566 = vmatpush.bf16.msra.mxu0 0
        %567 = vmatpush.bf16.msra.mxu0 %v555
        %568 = vmatpush.bf16.msra.mxu0 %v554
        %569 = vmatpush.bf16.msra.mxu0 %v553
        %570 = vmatpush.bf16.msra.mxu0 %v552
        %571 = vmatmul.bf16.gmra.mxu0 %v561
        %v572 = vpop.f32.mrf.mxu0
        %v573 = vadd.f32 0.0, %v572
        %v574 = vpop.f32.mrf.mxu0
        %575 = vdwg.mxu0
        %v576 = vpack.c.bf16 %v573, %v573
        %578 = vrot.lane.b32.xlu0 %v576, 64
        %v579 = vpop.permute.xlu0 %578
        %vm581 = vcmask 125952
        %582 = vst.msk [vmem:[%s490] sm:$0xf] %vm581, %v579
        %v583 = vld [vmem:[%s3] sm:$0x1]
        %v584 = vmul.f32 %v573, %v573
        %vm585 = vcmask 261120
        %v586 = vsel %vm585, %v584, 0.0
        %587 = vadd.xlane.f32.xlu0 %v586
        %v588 = vpop.xlane.xlu0 %587
        %v589 = vrcp.pop 32.0
        %v590 = vmul.f32 32.0, %v589
        %v591 = vsub.f32 1.0, %v590
        %v592 = vmul.f32 %v589, %v591
        %v593 = vadd.f32 %v589, %v592
        %vm594 = vweird.f32 %v589
        %v595 = vsel %vm594, %v589, %v593
        %v596 = vmul.f32 %v588, %v595
        %v597 = vadd.f32 %v596, 1e-06
        %v598 = vrsqrt.pop %v597
        %v599 = vmul.f32 %v598, %v597
        %v600 = vmul.f32 %v599, %v598
        %v601 = vmul.f32 0.5, %v600
        %v602 = vsub.f32 1.5, %v601
        %v603 = vmul.f32 %v598, %v602
        %vm604 = vweird.f32 %v597
        %vm605 = vweird.f32 %v598
        %vm606 = vmor %vm604, %vm605
        %v607 = vsel %vm606, %v598, %v603
        %v608 = vmul.f32 %v573, %v607
        %v610 = vperm.slane %v583, 0
        %v612 = vmul.f32 %v608, %v610
        %v613 = vpack.c.bf16 %v612, %v612
        %v614 = vld [vmem:[#allocation6] sm:$0xff]
        %v615 = vld [vmem:[#allocation6 + $0x8] sm:$0xff]
        %v616 = vld [vmem:[#allocation6 + $0x10] sm:$0xff]
        %v617 = vld [vmem:[#allocation6 + $0x18] sm:$0xff]
        %v622 = vunpack.c.l.b16 %v614
        %v623 = vunpack.c.h.b16 %v614
        %v624 = vunpack.c.l.b16 %v615
        %v625 = vunpack.c.h.b16 %v615
        %v626 = vunpack.c.l.b16 %v616
        %v627 = vunpack.c.h.b16 %v616
        %v628 = vunpack.c.l.b16 %v617
        %v629 = vunpack.c.h.b16 %v617
        %v630 = vpack.c.b16 %v624, %v622
        %v631 = vpack.c.b16 %v625, %v623
        %v632 = vpack.c.b16 %v628, %v626
        %v633 = vpack.c.b16 %v629, %v627
        %v639 = vsel %vm585, %v613, 0
        %641 = vmatpush.bf16.msra.mxu0 0
        %642 = vmatpush.bf16.msra.mxu0 0
        %643 = vmatpush.bf16.msra.mxu0 0
        %644 = vmatpush.bf16.msra.mxu0 0
        %645 = vmatpush.bf16.msra.mxu0 0
        %646 = vmatpush.bf16.msra.mxu0 0
        %647 = vmatpush.bf16.msra.mxu0 %v632
        %648 = vmatpush.bf16.msra.mxu0 %v630
        %649 = vmatmul.bf16.gmra.mxu0 %v639
        %v650 = vpop.f32.mrf.mxu0
        %v651 = vadd.f32 0.0, %v650
        %v652 = vpop.f32.mrf.mxu0
        %653 = vdwg.mxu0
        %654 = vmatpush.bf16.msra.mxu0 0
        %655 = vmatpush.bf16.msra.mxu0 0
        %656 = vmatpush.bf16.msra.mxu0 0
        %657 = vmatpush.bf16.msra.mxu0 0
        %658 = vmatpush.bf16.msra.mxu0 0
        %659 = vmatpush.bf16.msra.mxu0 0
        %660 = vmatpush.bf16.msra.mxu0 %v633
        %661 = vmatpush.bf16.msra.mxu0 %v631
        %662 = vmatmul.bf16.gmra.mxu0 %v639
        %v663 = vpop.f32.mrf.mxu0
        %v664 = vadd.f32 0.0, %v663
        %v665 = vpop.f32.mrf.mxu0
        %666 = vdwg.mxu0
        %v667 = vpack.c.bf16 %v651, %v651
        %668 = vst [vmem:[%s478] sm:$0xf] %v667
        %v669 = vpack.c.bf16 %v664, %v664
        %vm670 = vcmask 519168
        %671 = vst.msk [vmem:[%s482] sm:$0xf] %vm670, %v669
        %v672 = vld [vmem:[%s5] sm:$0x1]
        %674 = vrot.lane.b32.xlu0 %v584, 96
        %v675 = vpop.permute.xlu0 %674
        %v677 = vsel %vm585, %v675, 0.0
        %678 = vadd.xlane.f32.xlu0 %v677
        %v679 = vpop.xlane.xlu0 %678
        %v680 = vmul.f32 %v679, %v595
        %v681 = vadd.f32 %v680, 1e-06
        %v682 = vrsqrt.pop %v681
        %v683 = vmul.f32 %v682, %v681
        %v684 = vmul.f32 %v683, %v682
        %v685 = vmul.f32 0.5, %v684
        %v686 = vsub.f32 1.5, %v685
        %v687 = vmul.f32 %v682, %v686
        %vm688 = vweird.f32 %v681
        %vm689 = vweird.f32 %v682
        %vm690 = vmor %vm688, %vm689
        %v691 = vsel %vm690, %v682, %v687
        %v692 = vmul.f32 %v573, %v691
        %v694 = vperm.slane %v672, 0
        %695 = vrot.lane.b32.xlu0 %v694, 32
        %v696 = vpop.permute.xlu0 %695
        %v698 = vmul.f32 %v692, %v696
        %v699 = vpack.c.bf16 %v698, %v698
        %v700 = vld [vmem:[#allocation7] sm:$0xff]
        %v701 = vld [vmem:[#allocation7 + $0x8] sm:$0xff]
        %v702 = vld [vmem:[#allocation7 + $0x10] sm:$0xff]
        %v703 = vld [vmem:[#allocation7 + $0x18] sm:$0xff]
        %705 = vrot.lane.b32.xlu0 %v699, 96
        %v706 = vpop.permute.xlu0 %705
        %v711 = vunpack.c.l.b16 %v700
        %v712 = vunpack.c.h.b16 %v700
        %v713 = vunpack.c.l.b16 %v701
        %v714 = vunpack.c.h.b16 %v701
        %v715 = vunpack.c.l.b16 %v702
        %v716 = vunpack.c.h.b16 %v702
        %v717 = vunpack.c.l.b16 %v703
        %v718 = vunpack.c.h.b16 %v703
        %v719 = vpack.c.b16 %v713, %v711
        %v720 = vpack.c.b16 %v714, %v712
        %v721 = vpack.c.b16 %v717, %v715
        %v722 = vpack.c.b16 %v718, %v716
        %v728 = vsel %vm585, %v706, 0
        %730 = vmatpush.bf16.msra.mxu0 0
        %731 = vmatpush.bf16.msra.mxu0 0
        %732 = vmatpush.bf16.msra.mxu0 0
        %733 = vmatpush.bf16.msra.mxu0 0
        %734 = vmatpush.bf16.msra.mxu0 0
        %735 = vmatpush.bf16.msra.mxu0 0
        %736 = vmatpush.bf16.msra.mxu0 %v721
        %737 = vmatpush.bf16.msra.mxu0 %v719
        %738 = vmatmul.bf16.gmra.mxu0 %v728
        %v739 = vpop.f32.mrf.mxu0
        %v740 = vadd.f32 0.0, %v739
        %v741 = vpop.f32.mrf.mxu0
        %742 = vdwg.mxu0
        %743 = vmatpush.bf16.msra.mxu0 0
        %744 = vmatpush.bf16.msra.mxu0 0
        %745 = vmatpush.bf16.msra.mxu0 0
        %746 = vmatpush.bf16.msra.mxu0 0
        %747 = vmatpush.bf16.msra.mxu0 0
        %748 = vmatpush.bf16.msra.mxu0 0
        %749 = vmatpush.bf16.msra.mxu0 %v722
        %750 = vmatpush.bf16.msra.mxu0 %v720
        %751 = vmatmul.bf16.gmra.mxu0 %v728
        %v752 = vpop.f32.mrf.mxu0
        %v753 = vadd.f32 0.0, %v752
        %v754 = vpop.f32.mrf.mxu0
        %755 = vdwg.mxu0
        %v756 = vpack.c.bf16 %v740, %v740
        %757 = vst [vmem:[%s486] sm:$0xf] %v756
        %v758 = vpack.c.bf16 %v753, %v753
        %759 = vst [vmem:[%s494] sm:$0xf] %v758
        %p760 = scmp.lt.s32.totalorder %s28, 1
        %s761 = scalar_select %p760, %s28, 1
        %s762 = smul.addr %s761, 4
        %s763 = scalar_lea.vmem %s7, %s762
        %p764 = scmp.lt.s32.totalorder %s28, 1
        %s765 = scalar_select %p764, %s28, 1
        %s766 = smul.addr %s765, 4
        %s767 = scalar_lea.vmem %s8, %s766
        %p768 = scmp.lt.s32.totalorder %s28, 1
        %s769 = scalar_select %p768, %s28, 1
        %s770 = smul.addr %s769, 4
        %s771 = scalar_lea.vmem %s9, %s770
        %p772 = scmp.lt.s32.totalorder %s28, 1
        %s773 = scalar_select %p772, %s28, 1
        %s774 = smul.addr %s773, 4
        %s775 = scalar_lea.vmem %s10, %s774
        %p776 = scmp.lt.s32.totalorder %s28, 1
        %s777 = scalar_select %p776, %s28, 1
        %s778 = smul.addr %s777, 4
        %s779 = scalar_lea.vmem %s11, %s778
        // Predicated region
        $region65: #{_lambda_.3} parent=47 // pred_check
          %p780 = pneg %p198
        $region66: #{_lambda_.3} parent=47 // pred_check_branch
          %782 = sbr.rel (%p780) target = $region68
        $region67: #{_lambda_.3} parent=47 // pred_region
          _
        $region68: #{_lambda_.3} parent=47 // pred_fallthru
          _
        // Predicated region
        $region69: #{_lambda_.3} parent=47 // pred_check
          %p783 = pneg %p224
        $region70: #{_lambda_.3} parent=47 // pred_check_branch
          %785 = sbr.rel (%p783) target = $region72
        $region71: #{_lambda_.3} parent=47 // pred_region
          _
        $region72: #{_lambda_.3} parent=47 // pred_fallthru
          _
        // Predicated region
        $region73: #{_lambda_.3} parent=47 // pred_check
          %p786 = pneg %p250
        $region74: #{_lambda_.3} parent=47 // pred_check_branch
          %788 = sbr.rel (%p786) target = $region76
        $region75: #{_lambda_.3} parent=47 // pred_region
          _
        $region76: #{_lambda_.3} parent=47 // pred_fallthru
          _
        // Predicated region
        $region77: #{_lambda_.3} parent=47 // pred_check
          %p789 = pneg %p276
        $region78: #{_lambda_.3} parent=47 // pred_check_branch
          %791 = sbr.rel (%p789) target = $region80
        $region79: #{_lambda_.3} parent=47 // pred_region
          _
        $region80: #{_lambda_.3} parent=47 // pred_fallthru
          _
        // Predicated region
        $region81: #{_lambda_.3} parent=47 // pred_check
          %p792 = pneg %p302
        $region82: #{_lambda_.3} parent=47 // pred_check_branch
          %794 = sbr.rel (%p792) target = $region84
        $region83: #{_lambda_.3} parent=47 // pred_region
          _
        $region84: #{_lambda_.3} parent=47 // pred_fallthru
          _
      $region48: #{_lambda_.3} parent=5 // pred_fallthru
        _
      %p795 = scmp.le.s32.totalorder 2, %s23
      // Predicated region
      $region85: #{_lambda_.3} parent=5 // pred_check
        %p796 = pneg %p795
      $region86: #{_lambda_.3} parent=5 // pred_check_branch
        %798 = sbr.rel (%p796) target = $region88
      $region87: #{_lambda_.3} parent=5 // pred_region
        %s799 = ssub.s32 %s23, 2
        // Predicated region
        $region89: #{_lambda_.3} parent=87 // pred_check
          %p800 = pneg %p204
        $region90: #{_lambda_.3} parent=87 // pred_check_branch
          %802 = sbr.rel (%p800) target = $region92
        $region91: #{_lambda_.3} parent=87 // pred_region
          %p803 = scmp.lt.s32.totalorder %s29, 1
          %s804 = scalar_select %p803, %s29, 1
          %s805 = smul.addr %s804, 4
          %s806 = scalar_lea.vmem %s7, %s805
        $region92: #{_lambda_.3} parent=87 // pred_fallthru
          _
        // Predicated region
        $region93: #{_lambda_.3} parent=87 // pred_check
          %p807 = pneg %p230
        $region94: #{_lambda_.3} parent=87 // pred_check_branch
          %809 = sbr.rel (%p807) target = $region96
        $region95: #{_lambda_.3} parent=87 // pred_region
          %p810 = scmp.lt.s32.totalorder %s29, 1
          %s811 = scalar_select %p810, %s29, 1
          %s812 = smul.addr %s811, 4
          %s813 = scalar_lea.vmem %s8, %s812
        $region96: #{_lambda_.3} parent=87 // pred_fallthru
          _
        // Predicated region
        $region97: #{_lambda_.3} parent=87 // pred_check
          %p814 = pneg %p256
        $region98: #{_lambda_.3} parent=87 // pred_check_branch
          %816 = sbr.rel (%p814) target = $region100
        $region99: #{_lambda_.3} parent=87 // pred_region
          %p817 = scmp.lt.s32.totalorder %s29, 1
          %s818 = scalar_select %p817, %s29, 1
          %s819 = smul.addr %s818, 4
          %s820 = scalar_lea.vmem %s9, %s819
        $region100: #{_lambda_.3} parent=87 // pred_fallthru
          _
        // Predicated region
        $region101: #{_lambda_.3} parent=87 // pred_check
          %p821 = pneg %p282
        $region102: #{_lambda_.3} parent=87 // pred_check_branch
          %823 = sbr.rel (%p821) target = $region104
        $region103: #{_lambda_.3} parent=87 // pred_region
          %p824 = scmp.lt.s32.totalorder %s29, 1
          %s825 = scalar_select %p824, %s29, 1
          %s826 = smul.addr %s825, 4
          %s827 = scalar_lea.vmem %s10, %s826
        $region104: #{_lambda_.3} parent=87 // pred_fallthru
          _
        // Predicated region
        $region105: #{_lambda_.3} parent=87 // pred_check
          %p828 = pneg %p308
        $region106: #{_lambda_.3} parent=87 // pred_check_branch
          %830 = sbr.rel (%p828) target = $region108
        $region107: #{_lambda_.3} parent=87 // pred_region
          %p831 = scmp.lt.s32.totalorder %s29, 1
          %s832 = scalar_select %p831, %s29, 1
          %s833 = smul.addr %s832, 4
          %s834 = scalar_lea.vmem %s11, %s833
        $region108: #{_lambda_.3} parent=87 // pred_fallthru
          _
      $region88: #{_lambda_.3} parent=5 // pred_fallthru
        _
    $region6: #{_lambda_.3} parent=1 // loop_footer
      %s27 = sadd.s32 1, %s23
    $region7: #{_lambda_.3} parent=1 // loop_footer_branch
      %22 = sbr.rel target = $region3
    $region8: #{_lambda_.3} parent=1 // loop_exit
      _
    %835 = vsyncpa [#allocation3], 1
    %s836 = scalar_lea.sflag [#allocation3], 1
    %837 = vsyncpa %s836, 1
    %838 = vsyncpa [#allocation5], 1
    %839 = vsyncpa [#allocation8], 1

// kernel: _lambda_.4
$region0: #{_lambda_.4}
  #allocation0 [shape = 'u32[]', space=smem, size = 0x4, offset = 0x4, fixed_abs, tag = 'smem constant byte address 0x4 - core index']
  #allocation1 [shape = 'u32[72,128]{1,0:T(1,128)}', space=vmem, size = 0x9000, scoped, tag = 'internal scratch']
  %s0 = inlined_call_operand.vmem [shape: bf16[2,8,128], index: 0, kind: input, shape index: {}]
  %s1 = inlined_call_operand.vmem [shape: bf16[2,8,64], index: 1, kind: input, shape index: {}]
  %s2 = inlined_call_operand.vmem [shape: bf16[2,8,128], index: 2, kind: input, shape index: {}]
  %s3 = inlined_call_operand.vmem [shape: bf16[2,8,16], index: 3, kind: input, shape index: {}]
  %s4 = inlined_call_operand.vmem [shape: bf16[2,8,128], index: 4, kind: input, shape index: {}]
  %s5 = inlined_call_operand.vmem [shape: f32[8,8], index: 5, kind: input, shape index: {}]
  %s6 = inlined_call_operand.vmem [shape: f32[8,8], index: 6, kind: input, shape index: {}]
  %s7 = inlined_call_operand.vmem [shape: f32[16,64], index: 7, kind: input, shape index: {}]
  %s8 = inlined_call_operand.vmem [shape: bf16[128,64], index: 8, kind: input, shape index: {}]
  %s9 = inlined_call_operand.vmem [shape: f32[16,64], index: 9, kind: output, shape index: {}]
  %s10 = sld [smem:[#allocation0]]
  $region69: #{_lambda_.4} parent=0
    _
  %s12 = ssub.s32 1, %s10
  %s13 = scalar_select 0, %s12, %s10
  loop: start=0, step=1, limit=4
  $region2: #{_lambda_.4} parent=0 // loop_pre_header
    _
  $region3: #{_lambda_.4} parent=0 // loop_header
    %s15 = sphi 0, %s19
    %p16 = scmp.ge.s32.totalorder %s15, 4
    %s25 = sphi 0, %s27
    %s28 = sphi 0, %s25
    %s29 = sphi 0, %s28
    %s45 = sphi 0, %s29
    %s51 = sphi 0, %s53
    %s54 = sphi 0, %s51
    %s55 = sphi 0, %s54
    %s71 = sphi 0, %s55
    %s77 = sphi 0, %s79
    %s80 = sphi 0, %s77
    %s81 = sphi 0, %s80
    %s97 = sphi 0, %s81
    %s103 = sphi 0, %s105
    %s106 = sphi 0, %s103
    %s107 = sphi 0, %s106
    %s123 = sphi 0, %s107
    %s129 = sphi 0, %s131
    %s132 = sphi 0, %s129
    %s133 = sphi 0, %s132
    %s149 = sphi 0, %s133
    %s153 = sphi 0, %s153
    %s155 = sphi 0, %s153
    %s156 = sphi 0, %s155
    %s170 = sphi 0, %s156
    %s174 = sphi 0, %s174
    %s176 = sphi 0, %s174
    %s177 = sphi 0, %s176
    %s191 = sphi 0, %s177
    %s197 = sphi 0, %s199
    %s200 = sphi 0, %s197
    %s201 = sphi 0, %s200
    %s217 = sphi 0, %s201
    %s221 = sphi 0, %s221
    %s223 = sphi 0, %s221
    %s224 = sphi 0, %s223
    %s238 = sphi 0, %s224
    %s244 = sphi 0, %s246
    %s247 = sphi 0, %s244
    %s248 = sphi 0, %s247
    %s264 = sphi 0, %s248
  $region4: #{_lambda_.4} parent=0 // loop_header_branch
    %18 = sbr.rel (%p16) target = $region8
  $region5: #{_lambda_.4} parent=0 // loop_body
    %s20 = ssub.s32 %s15, 1
    %s21 = ssub.s32 %s15, 2
    %s22 = sadd.s32 %s15, 1
    %s23 = ssub.s32 %s15, %s22
    %p24 = scmp.eq.s32.totalorder %s23, 0
    %s26 = sadd.s32 %s25, 1
    %s27 = scalar_select %p24, %s25, %s26
    %p30 = pneg %p24
    %p31 = scmp.eq.s32.totalorder %s15, 1
    %p32 = por %p30, %p31
    %p33 = scmp.ne.s32.totalorder %s25, %s28
    %p34 = scmp.eq.s32.totalorder %s15, 0
    %p35 = por %p33, %p34
    %p36 = scmp.ne.s32.totalorder %s25, %s28
    %p37 = scmp.eq.s32.totalorder %s20, 1
    %p38 = por %p36, %p37
    %p39 = scmp.ne.s32.totalorder %s28, %s29
    %p40 = scmp.eq.s32.totalorder %s20, 0
    %p41 = por %p39, %p40
    %p42 = scmp.ne.s32.totalorder %s28, %s29
    %p43 = scmp.eq.s32.totalorder %s21, 1
    %p44 = por %p42, %p43
    %p46 = scmp.ne.s32.totalorder %s29, %s45
    %p47 = scmp.eq.s32.totalorder %s21, 0
    %p48 = por %p46, %p47
    %s49 = ssub.s32 %s15, %s22
    %p50 = scmp.eq.s32.totalorder %s49, 0
    %s52 = sadd.s32 %s51, 1
    %s53 = scalar_select %p50, %s51, %s52
    %p56 = pneg %p50
    %p57 = scmp.eq.s32.totalorder %s15, 1
    %p58 = por %p56, %p57
    %p59 = scmp.ne.s32.totalorder %s51, %s54
    %p60 = scmp.eq.s32.totalorder %s15, 0
    %p61 = por %p59, %p60
    %p62 = scmp.ne.s32.totalorder %s51, %s54
    %p63 = scmp.eq.s32.totalorder %s20, 1
    %p64 = por %p62, %p63
    %p65 = scmp.ne.s32.totalorder %s54, %s55
    %p66 = scmp.eq.s32.totalorder %s20, 0
    %p67 = por %p65, %p66
    %p68 = scmp.ne.s32.totalorder %s54, %s55
    %p69 = scmp.eq.s32.totalorder %s21, 1
    %p70 = por %p68, %p69
    %p72 = scmp.ne.s32.totalorder %s55, %s71
    %p73 = scmp.eq.s32.totalorder %s21, 0
    %p74 = por %p72, %p73
    %s75 = ssub.s32 %s15, %s22
    %p76 = scmp.eq.s32.totalorder %s75, 0
    %s78 = sadd.s32 %s77, 1
    %s79 = scalar_select %p76, %s77, %s78
    %p82 = pneg %p76
    %p83 = scmp.eq.s32.totalorder %s15, 1
    %p84 = por %p82, %p83
    %p85 = scmp.ne.s32.totalorder %s77, %s80
    %p86 = scmp.eq.s32.totalorder %s15, 0
    %p87 = por %p85, %p86
    %p88 = scmp.ne.s32.totalorder %s77, %s80
    %p89 = scmp.eq.s32.totalorder %s20, 1
    %p90 = por %p88, %p89
    %p91 = scmp.ne.s32.totalorder %s80, %s81
    %p92 = scmp.eq.s32.totalorder %s20, 0
    %p93 = por %p91, %p92
    %p94 = scmp.ne.s32.totalorder %s80, %s81
    %p95 = scmp.eq.s32.totalorder %s21, 1
    %p96 = por %p94, %p95
    %p98 = scmp.ne.s32.totalorder %s81, %s97
    %p99 = scmp.eq.s32.totalorder %s21, 0
    %p100 = por %p98, %p99
    %s101 = ssub.s32 %s15, %s22
    %p102 = scmp.eq.s32.totalorder %s101, 0
    %s104 = sadd.s32 %s103, 1
    %s105 = scalar_select %p102, %s103, %s104
    %p108 = pneg %p102
    %p109 = scmp.eq.s32.totalorder %s15, 1
    %p110 = por %p108, %p109
    %p111 = scmp.ne.s32.totalorder %s103, %s106
    %p112 = scmp.eq.s32.totalorder %s15, 0
    %p113 = por %p111, %p112
    %p114 = scmp.ne.s32.totalorder %s103, %s106
    %p115 = scmp.eq.s32.totalorder %s20, 1
    %p116 = por %p114, %p115
    %p117 = scmp.ne.s32.totalorder %s106, %s107
    %p118 = scmp.eq.s32.totalorder %s20, 0
    %p119 = por %p117, %p118
    %p120 = scmp.ne.s32.totalorder %s106, %s107
    %p121 = scmp.eq.s32.totalorder %s21, 1
    %p122 = por %p120, %p121
    %p124 = scmp.ne.s32.totalorder %s107, %s123
    %p125 = scmp.eq.s32.totalorder %s21, 0
    %p126 = por %p124, %p125
    %s127 = ssub.s32 %s15, %s22
    %p128 = scmp.eq.s32.totalorder %s127, 0
    %s130 = sadd.s32 %s129, 1
    %s131 = scalar_select %p128, %s129, %s130
    %p134 = pneg %p128
    %p135 = scmp.eq.s32.totalorder %s15, 1
    %p136 = por %p134, %p135
    %p137 = scmp.ne.s32.totalorder %s129, %s132
    %p138 = scmp.eq.s32.totalorder %s15, 0
    %p139 = por %p137, %p138
    %p140 = scmp.ne.s32.totalorder %s129, %s132
    %p141 = scmp.eq.s32.totalorder %s20, 1
    %p142 = por %p140, %p141
    %p143 = scmp.ne.s32.totalorder %s132, %s133
    %p144 = scmp.eq.s32.totalorder %s20, 0
    %p145 = por %p143, %p144
    %p146 = scmp.ne.s32.totalorder %s132, %s133
    %p147 = scmp.eq.s32.totalorder %s21, 1
    %p148 = por %p146, %p147
    %p150 = scmp.ne.s32.totalorder %s133, %s149
    %p151 = scmp.eq.s32.totalorder %s21, 0
    %p152 = por %p150, %p151
    %s154 = sadd.s32 %s153, 1
    %p157 = scmp.eq.s32.totalorder %s15, 1
    %p158 = scmp.ne.s32.totalorder %s153, %s155
    %p159 = scmp.eq.s32.totalorder %s15, 0
    %p160 = por %p158, %p159
    %p161 = scmp.ne.s32.totalorder %s153, %s155
    %p162 = scmp.eq.s32.totalorder %s20, 1
    %p163 = por %p161, %p162
    %p164 = scmp.ne.s32.totalorder %s155, %s156
    %p165 = scmp.eq.s32.totalorder %s20, 0
    %p166 = por %p164, %p165
    %p167 = scmp.ne.s32.totalorder %s155, %s156
    %p168 = scmp.eq.s32.totalorder %s21, 1
    %p169 = por %p167, %p168
    %p171 = scmp.ne.s32.totalorder %s156, %s170
    %p172 = scmp.eq.s32.totalorder %s21, 0
    %p173 = por %p171, %p172
    %s175 = sadd.s32 %s174, 1
    %p178 = scmp.eq.s32.totalorder %s15, 1
    %p179 = scmp.ne.s32.totalorder %s174, %s176
    %p180 = scmp.eq.s32.totalorder %s15, 0
    %p181 = por %p179, %p180
    %p182 = scmp.ne.s32.totalorder %s174, %s176
    %p183 = scmp.eq.s32.totalorder %s20, 1
    %p184 = por %p182, %p183
    %p185 = scmp.ne.s32.totalorder %s176, %s177
    %p186 = scmp.eq.s32.totalorder %s20, 0
    %p187 = por %p185, %p186
    %p188 = scmp.ne.s32.totalorder %s176, %s177
    %p189 = scmp.eq.s32.totalorder %s21, 1
    %p190 = por %p188, %p189
    %p192 = scmp.ne.s32.totalorder %s177, %s191
    %p193 = scmp.eq.s32.totalorder %s21, 0
    %p194 = por %p192, %p193
    %s195 = ssub.s32 %s15, %s22
    %p196 = scmp.eq.s32.totalorder %s195, 0
    %s198 = sadd.s32 %s197, 1
    %s199 = scalar_select %p196, %s197, %s198
    %p202 = pneg %p196
    %p203 = scmp.eq.s32.totalorder %s15, 1
    %p204 = por %p202, %p203
    %p205 = scmp.ne.s32.totalorder %s197, %s200
    %p206 = scmp.eq.s32.totalorder %s15, 0
    %p207 = por %p205, %p206
    %p208 = scmp.ne.s32.totalorder %s197, %s200
    %p209 = scmp.eq.s32.totalorder %s20, 1
    %p210 = por %p208, %p209
    %p211 = scmp.ne.s32.totalorder %s200, %s201
    %p212 = scmp.eq.s32.totalorder %s20, 0
    %p213 = por %p211, %p212
    %p214 = scmp.ne.s32.totalorder %s200, %s201
    %p215 = scmp.eq.s32.totalorder %s21, 1
    %p216 = por %p214, %p215
    %p218 = scmp.ne.s32.totalorder %s201, %s217
    %p219 = scmp.eq.s32.totalorder %s21, 0
    %p220 = por %p218, %p219
    %s222 = sadd.s32 %s221, 1
    %p225 = scmp.eq.s32.totalorder %s15, 1
    %p226 = scmp.ne.s32.totalorder %s221, %s223
    %p227 = scmp.eq.s32.totalorder %s15, 0
    %p228 = por %p226, %p227
    %p229 = scmp.ne.s32.totalorder %s221, %s223
    %p230 = scmp.eq.s32.totalorder %s20, 1
    %p231 = por %p229, %p230
    %p232 = scmp.ne.s32.totalorder %s223, %s224
    %p233 = scmp.eq.s32.totalorder %s20, 0
    %p234 = por %p232, %p233
    %p235 = scmp.ne.s32.totalorder %s223, %s224
    %p236 = scmp.eq.s32.totalorder %s21, 1
    %p237 = por %p235, %p236
    %p239 = scmp.ne.s32.totalorder %s224, %s238
    %p240 = scmp.eq.s32.totalorder %s21, 0
    %p241 = por %p239, %p240
    %s242 = ssub.s32 %s15, %s22
    %p243 = scmp.eq.s32.totalorder %s242, 0
    %s245 = sadd.s32 %s244, 1
    %s246 = scalar_select %p243, %s244, %s245
    %p249 = pneg %p243
    %p250 = scmp.eq.s32.totalorder %s15, 1
    %p251 = por %p249, %p250
    %p252 = scmp.ne.s32.totalorder %s244, %s247
    %p253 = scmp.eq.s32.totalorder %s15, 0
    %p254 = por %p252, %p253
    %p255 = scmp.ne.s32.totalorder %s244, %s247
    %p256 = scmp.eq.s32.totalorder %s20, 1
    %p257 = por %p255, %p256
    %p258 = scmp.ne.s32.totalorder %s247, %s248
    %p259 = scmp.eq.s32.totalorder %s20, 0
    %p260 = por %p258, %p259
    %p261 = scmp.ne.s32.totalorder %s247, %s248
    %p262 = scmp.eq.s32.totalorder %s21, 1
    %p263 = por %p261, %p262
    %p265 = scmp.ne.s32.totalorder %s248, %s264
    %p266 = scmp.eq.s32.totalorder %s21, 0
    %p267 = por %p265, %p266
    %p268 = scmp.le.s32.totalorder 1, %s15
    %p269 = scmp.lt.s32.totalorder %s15, 3
    %p270 = pnand %p268, %p269
    %p271 = pneg %p270
    // Predicated region
    $region9: #{_lambda_.4} parent=5 // pred_check
      _
    $region10: #{_lambda_.4} parent=5 // pred_check_branch
      %273 = sbr.rel (%p270) target = $region12
    $region11: #{_lambda_.4} parent=5 // pred_region
      %s274 = ssub.s32 %s15, 1
      // Predicated region
      $region13: #{_lambda_.4} parent=11 // pred_check
        %p275 = pneg %p166
      $region14: #{_lambda_.4} parent=11 // pred_check_branch
        %277 = sbr.rel (%p275) target = $region16
      $region15: #{_lambda_.4} parent=11 // pred_region
        _
      $region16: #{_lambda_.4} parent=11 // pred_fallthru
        _
      // Predicated region
      $region17: #{_lambda_.4} parent=11 // pred_check
        %p278 = pneg %p187
      $region18: #{_lambda_.4} parent=11 // pred_check_branch
        %280 = sbr.rel (%p278) target = $region20
      $region19: #{_lambda_.4} parent=11 // pred_region
        _
      $region20: #{_lambda_.4} parent=11 // pred_fallthru
        _
      // Predicated region
      $region21: #{_lambda_.4} parent=11 // pred_check
        %p281 = pneg %p234
      $region22: #{_lambda_.4} parent=11 // pred_check_branch
        %283 = sbr.rel (%p281) target = $region24
      $region23: #{_lambda_.4} parent=11 // pred_region
        _
      $region24: #{_lambda_.4} parent=11 // pred_fallthru
        _
    $region12: #{_lambda_.4} parent=5 // pred_fallthru
      _
    %p284 = scmp.lt.s32.totalorder %s15, 2
    // Predicated region
    $region25: #{_lambda_.4} parent=5 // pred_check
      %p285 = pneg %p284
    $region26: #{_lambda_.4} parent=5 // pred_check_branch
      %287 = sbr.rel (%p285) target = $region28
    $region27: #{_lambda_.4} parent=5 // pred_region
      // Predicated region
      $region29: #{_lambda_.4} parent=27 // pred_check
        %p288 = pneg %p35
      $region30: #{_lambda_.4} parent=27 // pred_check_branch
        %290 = sbr.rel (%p288) target = $region32
      $region31: #{_lambda_.4} parent=27 // pred_region
        %p291 = scmp.lt.s32.totalorder %s15, 1
        %s292 = scalar_select %p291, %s15, 1
        %s293 = smul.addr %s292, 4
        %s294 = scalar_lea.vmem %s0, %s293
      $region32: #{_lambda_.4} parent=27 // pred_fallthru
        _
      // Predicated region
      $region33: #{_lambda_.4} parent=27 // pred_check
        %p295 = pneg %p61
      $region34: #{_lambda_.4} parent=27 // pred_check_branch
        %297 = sbr.rel (%p295) target = $region36
      $region35: #{_lambda_.4} parent=27 // pred_region
        %p298 = scmp.lt.s32.totalorder %s15, 1
        %s299 = scalar_select %p298, %s15, 1
        %s300 = smul.addr %s299, 4
        %s301 = scalar_lea.vmem %s1, %s300
      $region36: #{_lambda_.4} parent=27 // pred_fallthru
        _
      // Predicated region
      $region37: #{_lambda_.4} parent=27 // pred_check
        %p302 = pneg %p87
      $region38: #{_lambda_.4} parent=27 // pred_check_branch
        %304 = sbr.rel (%p302) target = $region40
      $region39: #{_lambda_.4} parent=27 // pred_region
        %p305 = scmp.lt.s32.totalorder %s15, 1
        %s306 = scalar_select %p305, %s15, 1
        %s307 = smul.addr %s306, 4
        %s308 = scalar_lea.vmem %s2, %s307
      $region40: #{_lambda_.4} parent=27 // pred_fallthru
        _
      // Predicated region
      $region41: #{_lambda_.4} parent=27 // pred_check
        %p309 = pneg %p113
      $region42: #{_lambda_.4} parent=27 // pred_check_branch
        %311 = sbr.rel (%p309) target = $region44
      $region43: #{_lambda_.4} parent=27 // pred_region
        %p312 = scmp.lt.s32.totalorder %s15, 1
        %s313 = scalar_select %p312, %s15, 1
        %s314 = smul.addr %s313, 4
        %s315 = scalar_lea.vmem %s3, %s314
      $region44: #{_lambda_.4} parent=27 // pred_fallthru
        _
      // Predicated region
      $region45: #{_lambda_.4} parent=27 // pred_check
        %p316 = pneg %p139
      $region46: #{_lambda_.4} parent=27 // pred_check_branch
        %318 = sbr.rel (%p316) target = $region48
      $region47: #{_lambda_.4} parent=27 // pred_region
        %p319 = scmp.lt.s32.totalorder %s15, 1
        %s320 = scalar_select %p319, %s15, 1
        %s321 = smul.addr %s320, 4
        %s322 = scalar_lea.vmem %s4, %s321
      $region48: #{_lambda_.4} parent=27 // pred_fallthru
        _
      // Predicated region
      $region49: #{_lambda_.4} parent=27 // pred_check
        %p323 = pneg %p207
      $region50: #{_lambda_.4} parent=27 // pred_check_branch
        %325 = sbr.rel (%p323) target = $region52
      $region51: #{_lambda_.4} parent=27 // pred_region
        %p326 = scmp.lt.s32.totalorder %s15, 1
        %s327 = scalar_select %p326, %s15, 1
        %s328 = smul.addr %s327, 8
        %s329 = scalar_lea.vmem %s7, %s328
      $region52: #{_lambda_.4} parent=27 // pred_fallthru
        _
    $region28: #{_lambda_.4} parent=5 // pred_fallthru
      _
    %p330 = scmp.le.s32.totalorder 1, %s15
    %p331 = scmp.lt.s32.totalorder %s15, 3
    %p332 = pnand %p330, %p331
    %p333 = pneg %p332
    // Predicated region
    $region53: #{_lambda_.4} parent=5 // pred_check
      _
    $region54: #{_lambda_.4} parent=5 // pred_check_branch
      %335 = sbr.rel (%p332) target = $region56
    $region55: #{_lambda_.4} parent=5 // pred_region
      %s336 = ssub.s32 %s15, 1
      %p337 = scmp.lt.s32.totalorder %s20, 1
      %s338 = scalar_select %p337, %s20, 1
      %s339 = smul.addr %s338, 4
      %s340 = scalar_lea.vmem %s0, %s339
      %p341 = pneg %p41
      %p342 = pneg %p38
      %p343 = scmp.lt.s32.totalorder %s20, 1
      %s344 = scalar_select %p343, %s20, 1
      %s345 = smul.addr %s344, 4
      %s346 = scalar_lea.vmem %s1, %s345
      %p347 = pneg %p67
      %p348 = pneg %p64
      %p349 = scmp.lt.s32.totalorder %s20, 1
      %s350 = scalar_select %p349, %s20, 1
      %s351 = smul.addr %s350, 4
      %s352 = scalar_lea.vmem %s2, %s351
      %p353 = pneg %p93
      %p354 = pneg %p90
      %p355 = scmp.lt.s32.totalorder %s20, 1
      %s356 = scalar_select %p355, %s20, 1
      %s357 = smul.addr %s356, 4
      %s358 = scalar_lea.vmem %s3, %s357
      %p359 = pneg %p119
      %p360 = pneg %p116
      %p361 = scmp.lt.s32.totalorder %s20, 1
      %s362 = scalar_select %p361, %s20, 1
      %s363 = smul.addr %s362, 4
      %s364 = scalar_lea.vmem %s4, %s363
      %p365 = pneg %p145
      %p366 = pneg %p142
      %p367 = pneg %p166
      %p368 = pneg %p163
      %p369 = pneg %p187
      %p370 = pneg %p184
      %p371 = scmp.lt.s32.totalorder %s20, 1
      %s372 = scalar_select %p371, %s20, 1
      %s373 = smul.addr %s372, 8
      %s374 = scalar_lea.vmem %s7, %s373
      %p375 = pneg %p213
      %p376 = pneg %p210
      %p377 = pneg %p234
      %p378 = pneg %p231
      %p379 = pneg %p260
      %p380 = pneg %p257
      %p381 = scmp.lt.s32.totalorder %s20, 1
      %s382 = scalar_select %p381, %s20, 1
      %s383 = smul.addr %s382, 8
      %s384 = scalar_lea.vmem %s9, %s383
      %p385 = scmp.lt.s32.totalorder %s20, 1
      %s386 = scalar_select %p385, %s20, 1
      %s387 = smul.addr %s386, 4
      %s388 = scalar_lea.vmem %s0, %s387
      %p389 = scmp.lt.s32.totalorder %s20, 1
      %s390 = scalar_select %p389, %s20, 1
      %s391 = smul.addr %s390, 4
      %s392 = scalar_lea.vmem %s1, %s391
      %p393 = scmp.lt.s32.totalorder %s20, 1
      %s394 = scalar_select %p393, %s20, 1
      %s395 = smul.addr %s394, 4
      %s396 = scalar_lea.vmem %s2, %s395
      %p397 = scmp.lt.s32.totalorder %s20, 1
      %s398 = scalar_select %p397, %s20, 1
      %s399 = smul.addr %s398, 4
      %s400 = scalar_lea.vmem %s3, %s399
      %p401 = scmp.lt.s32.totalorder %s20, 1
      %s402 = scalar_select %p401, %s20, 1
      %s403 = smul.addr %s402, 4
      %s404 = scalar_lea.vmem %s4, %s403
      %p405 = scmp.lt.s32.totalorder %s20, 1
      %s406 = scalar_select %p405, %s20, 1
      %s407 = smul.addr %s406, 8
      %s408 = scalar_lea.vmem %s7, %s407
      %p409 = scmp.lt.s32.totalorder %s20, 1
      %s410 = scalar_select %p409, %s20, 1
      %s411 = smul.addr %s410, 8
      %s412 = scalar_lea.vmem %s9, %s411
      %v414 = vld [vmem:[%s5] sm:$0xff]
      %v415 = vld [vmem:[%s6] sm:$0xff]
      %v416 = vld [vmem:[%s400] sm:$0xf]
      %v417 = vunpack.c.l.bf16 %v416
      %v418 = vmul.f32 %v417, %v414
      %420 = vrot.lane.b32.xlu0 %v415, 8
      %v421 = vpop.permute.xlu0 %420
      %v423 = vmul.f32 %v417, %v421
      %425 = vrot.lane.b32.xlu0 %v423, 120
      %v426 = vpop.permute.xlu0 %425
      %v428 = vsub.f32 %v418, %v426
      %v429 = vmul.f32 %v417, %v415
      %431 = vrot.lane.b32.xlu0 %v414, 8
      %v432 = vpop.permute.xlu0 %431
      %v434 = vmul.f32 %v417, %v432
      %436 = vrot.lane.b32.xlu0 %v434, 120
      %v437 = vpop.permute.xlu0 %436
      %v439 = vadd.f32 %v429, %v437
      %441 = vrot.lane.b32.xlu0 %v439, 8
      %v442 = vpop.permute.xlu0 %441
      %vm444 = vcmask 64512
      %v445 = vsel %vm444, %v428, %v442
      %v446 = vpack.c.bf16 %v445, %v445
      %v447 = vlaneseq
      %v448 = vshrl.u32 %v447, 7
      %v449 = vlaneseq
      %v450 = vand.u32 %v449, 127
      %vm451 = vcmp.le.s32.totalorder %v450, %v448
      %v452 = vld [vmem:[%s388] sm:$0xf]
      %v453 = vld [vmem:[%s396] sm:$0xf]
      %v454 = vld [vmem:[%s392] sm:$0xf]
      %v455 = vunpack.c.l.bf16 %v454
      %v456 = vld [vmem:[%s404] sm:$0xf]
      %v457 = vmul.f32 %v455, %v414
      %v458 = vmul.f32 %v455, %v421
      %460 = vrot.lane.b32.xlu0 %v458, 120
      %v461 = vpop.permute.xlu0 %460
      %v463 = vsub.f32 %v457, %v461
      %v464 = vmul.f32 %v455, %v415
      %v465 = vmul.f32 %v455, %v432
      %467 = vrot.lane.b32.xlu0 %v465, 120
      %v468 = vpop.permute.xlu0 %467
      %v470 = vadd.f32 %v464, %v468
      %472 = vrot.lane.b32.xlu0 %v470, 8
      %v473 = vpop.permute.xlu0 %472
      %v475 = vsel %vm444, %v463, %v473
      %v476 = vpack.c.bf16 %v475, %v475
      %vm477 = vcmask 130048
      %v479 = vsel %vm477, %v476, 0
      %v482 = vsel %vm477, %v446, 0
      %484 = vmatpush.bf16.xpose.msra.mxu0 0
      %485 = vmatpush.bf16.xpose.msra.mxu0 0
      %486 = vmatpush.bf16.xpose.msra.mxu0 0
      %487 = vmatpush.bf16.xpose.msra.mxu0 0
      %488 = vmatpush.bf16.xpose.msra.mxu0 0
      %489 = vmatpush.bf16.xpose.msra.mxu0 0
      %490 = vmatpush.bf16.xpose.msra.mxu0 0
      %491 = vmatpush.bf16.xpose.msra.mxu0 %v482
      %492 = vmatmul.bf16.gmra.mxu0 %v479
      %v493 = vpop.f32.mrf.mxu0
      %v494 = vadd.f32 0.0, %v493
      %v495 = vpop.f32.mrf.mxu0
      %496 = vdwg.mxu0
      %vm497 = vcmask 261120
      %v499 = vsel %vm497, %v452, 0
      %v502 = vsel %vm497, %v453, 0
      %504 = vmatpush.bf16.xpose.msra.mxu0 0
      %505 = vmatpush.bf16.xpose.msra.mxu0 0
      %506 = vmatpush.bf16.xpose.msra.mxu0 0
      %507 = vmatpush.bf16.xpose.msra.mxu0 0
      %508 = vmatpush.bf16.xpose.msra.mxu0 0
      %509 = vmatpush.bf16.xpose.msra.mxu0 0
      %510 = vmatpush.bf16.xpose.msra.mxu0 0
      %511 = vmatpush.bf16.xpose.msra.mxu0 %v502
      %512 = vmatmul.bf16.gmra.mxu0 %v499
      %v513 = vpop.f32.mrf.mxu0
      %v514 = vadd.f32 %v494, %v513
      %v515 = vpop.f32.mrf.mxu0
      %516 = vdwg.mxu0
      %v517 = vmul.f32 %v514, 0.14433756
      %v518 = vsel %vm451, %v517, -1e+30
      %v519 = vsel %vm444, %v518, -inf
      %520 = vmax.xlane.f32.xlu0 %v519
      %v521 = vpop.xlane.xlu0 %520
      %v522 = vsub.f32 %v518, %v521
      %v523 = vmul.f32 %v522, 1.442695
      %v524 = vpow.pop %v523
      %v525 = vsel %vm444, %v524, 0.0
      %526 = vadd.xlane.f32.xlu0 %v525
      %v527 = vpop.xlane.xlu0 %526
      %v528 = vrcp.pop %v527
      %v529 = vmul.f32 %v524, %v528
      %v530 = vpack.c.bf16 %v529, %v529
      %v532 = vsel %vm444, %v530, 0
      %vm534 = vcmask 1043456
      %v536 = vsel %vm534, %v456, 0
      %538 = vmatpush.bf16.msra.mxu0 0
      %539 = vmatpush.bf16.msra.mxu0 0
      %540 = vmatpush.bf16.msra.mxu0 0
      %541 = vmatpush.bf16.msra.mxu0 0
      %542 = vmatpush.bf16.msra.mxu0 0
      %543 = vmatpush.bf16.msra.mxu0 0
      %544 = vmatpush.bf16.msra.mxu0 0
      %545 = vmatpush.bf16.msra.mxu0 %v536
      %546 = vmatmul.bf16.gmra.mxu0 %v532
      %v547 = vpop.f32.mrf.mxu0
      %v548 = vadd.f32 0.0, %v547
      %v549 = vpop.f32.mrf.mxu0
      %550 = vdwg.mxu0
      %551 = vrot.lane.b32.xlu0 %v414, 16
      %v552 = vpop.permute.xlu0 %551
      %v554 = vmul.f32 %v455, %v552
      %555 = vrot.lane.b32.xlu0 %v415, 24
      %v556 = vpop.permute.xlu0 %555
      %v558 = vmul.f32 %v455, %v556
      %560 = vrot.lane.b32.xlu0 %v558, 120
      %v561 = vpop.permute.xlu0 %560
      %v563 = vsub.f32 %v554, %v561
      %564 = vrot.lane.b32.xlu0 %v415, 16
      %v565 = vpop.permute.xlu0 %564
      %v567 = vmul.f32 %v455, %v565
      %568 = vrot.lane.b32.xlu0 %v414, 24
      %v569 = vpop.permute.xlu0 %568
      %v571 = vmul.f32 %v455, %v569
      %573 = vrot.lane.b32.xlu0 %v571, 120
      %v574 = vpop.permute.xlu0 %573
      %v576 = vadd.f32 %v567, %v574
      %578 = vrot.lane.b32.xlu0 %v563, 112
      %v579 = vpop.permute.xlu0 %578
      %582 = vrot.lane.b32.xlu0 %v576, 120
      %v583 = vpop.permute.xlu0 %582
      %v585 = vsel %vm444, %v579, %v583
      %v586 = vpack.c.bf16 %v585, %v585
      %v588 = vsel %vm477, %v586, 0
      %590 = vmatpush.bf16.xpose.msra.mxu0 0
      %591 = vmatpush.bf16.xpose.msra.mxu0 0
      %592 = vmatpush.bf16.xpose.msra.mxu0 0
      %593 = vmatpush.bf16.xpose.msra.mxu0 0
      %594 = vmatpush.bf16.xpose.msra.mxu0 0
      %595 = vmatpush.bf16.xpose.msra.mxu0 0
      %596 = vmatpush.bf16.xpose.msra.mxu0 0
      %597 = vmatpush.bf16.xpose.msra.mxu0 %v482
      %598 = vmatmul.bf16.gmra.mxu0 %v588
      %v599 = vpop.f32.mrf.mxu0
      %v600 = vadd.f32 0.0, %v599
      %v601 = vpop.f32.mrf.mxu0
      %602 = vdwg.mxu0
      %v604 = vunpack.c.l.b16 %v452
      %v605 = vpack.c.b16 %v604, %v604
      %606 = vrot.lane.b32.xlu0 %v605, 96
      %v607 = vpop.permute.xlu0 %606
      %v609 = vunpack.c.l.b16 %v453
      %v610 = vpack.c.b16 %v609, %v609
      %611 = vrot.lane.b32.xlu0 %v610, 96
      %v612 = vpop.permute.xlu0 %611
      %v614 = vsel %vm497, %v607, 0
      %v617 = vsel %vm497, %v612, 0
      %619 = vmatpush.bf16.xpose.msra.mxu0 0
      %620 = vmatpush.bf16.xpose.msra.mxu0 0
      %621 = vmatpush.bf16.xpose.msra.mxu0 0
      %622 = vmatpush.bf16.xpose.msra.mxu0 0
      %623 = vmatpush.bf16.xpose.msra.mxu0 0
      %624 = vmatpush.bf16.xpose.msra.mxu0 0
      %625 = vmatpush.bf16.xpose.msra.mxu0 0
      %626 = vmatpush.bf16.xpose.msra.mxu0 %v617
      %627 = vmatmul.bf16.gmra.mxu0 %v614
      %v628 = vpop.f32.mrf.mxu0
      %v629 = vadd.f32 %v600, %v628
      %v630 = vpop.f32.mrf.mxu0
      %631 = vdwg.mxu0
      %v632 = vmul.f32 %v629, 0.14433756
      %v633 = vsel %vm451, %v632, -1e+30
      %v634 = vsel %vm444, %v633, -inf
      %635 = vmax.xlane.f32.xlu0 %v634
      %v636 = vpop.xlane.xlu0 %635
      %v637 = vsub.f32 %v633, %v636
      %v638 = vmul.f32 %v637, 1.442695
      %v639 = vpow.pop %v638
      %v640 = vsel %vm444, %v639, 0.0
      %641 = vadd.xlane.f32.xlu0 %v640
      %v642 = vpop.xlane.xlu0 %641
      %v643 = vrcp.pop %v642
      %v644 = vmul.f32 %v639, %v643
      %v645 = vpack.c.bf16 %v644, %v644
      %v647 = vunpack.c.l.b16 %v456
      %v648 = vpack.c.b16 %v647, %v647
      %649 = vrot.lane.b32.xlu0 %v648, 96
      %v650 = vpop.permute.xlu0 %649
      %v652 = vsel %vm444, %v645, 0
      %v655 = vsel %vm534, %v650, 0
      %657 = vmatpush.bf16.msra.mxu0 0
      %658 = vmatpush.bf16.msra.mxu0 0
      %659 = vmatpush.bf16.msra.mxu0 0
      %660 = vmatpush.bf16.msra.mxu0 0
      %661 = vmatpush.bf16.msra.mxu0 0
      %662 = vmatpush.bf16.msra.mxu0 0
      %663 = vmatpush.bf16.msra.mxu0 0
      %664 = vmatpush.bf16.msra.mxu0 %v655
      %665 = vmatmul.bf16.gmra.mxu0 %v652
      %v666 = vpop.f32.mrf.mxu0
      %v667 = vadd.f32 0.0, %v666
      %v668 = vpop.f32.mrf.mxu0
      %669 = vdwg.mxu0
      %670 = vrot.lane.b32.xlu0 %v414, 32
      %v671 = vpop.permute.xlu0 %670
      %v673 = vmul.f32 %v455, %v671
      %674 = vrot.lane.b32.xlu0 %v415, 40
      %v675 = vpop.permute.xlu0 %674
      %v677 = vmul.f32 %v455, %v675
      %679 = vrot.lane.b32.xlu0 %v677, 120
      %v680 = vpop.permute.xlu0 %679
      %v682 = vsub.f32 %v673, %v680
      %683 = vrot.lane.b32.xlu0 %v415, 32
      %v684 = vpop.permute.xlu0 %683
      %v686 = vmul.f32 %v455, %v684
      %687 = vrot.lane.b32.xlu0 %v414, 40
      %v688 = vpop.permute.xlu0 %687
      %v690 = vmul.f32 %v455, %v688
      %692 = vrot.lane.b32.xlu0 %v690, 120
      %v693 = vpop.permute.xlu0 %692
      %v695 = vadd.f32 %v686, %v693
      %697 = vrot.lane.b32.xlu0 %v682, 96
      %v698 = vpop.permute.xlu0 %697
      %701 = vrot.lane.b32.xlu0 %v695, 104
      %v702 = vpop.permute.xlu0 %701
      %v704 = vsel %vm444, %v698, %v702
      %v705 = vpack.c.bf16 %v704, %v704
      %v707 = vsel %vm477, %v705, 0
      %709 = vmatpush.bf16.xpose.msra.mxu0 0
      %710 = vmatpush.bf16.xpose.msra.mxu0 0
      %711 = vmatpush.bf16.xpose.msra.mxu0 0
      %712 = vmatpush.bf16.xpose.msra.mxu0 0
      %713 = vmatpush.bf16.xpose.msra.mxu0 0
      %714 = vmatpush.bf16.xpose.msra.mxu0 0
      %715 = vmatpush.bf16.xpose.msra.mxu0 0
      %716 = vmatpush.bf16.xpose.msra.mxu0 %v482
      %717 = vmatmul.bf16.gmra.mxu0 %v707
      %v718 = vpop.f32.mrf.mxu0
      %v719 = vadd.f32 0.0, %v718
      %v720 = vpop.f32.mrf.mxu0
      %721 = vdwg.mxu0
      %722 = vrot.lane.b32.xlu0 %v605, 64
      %v723 = vpop.permute.xlu0 %722
      %724 = vrot.lane.b32.xlu0 %v610, 64
      %v725 = vpop.permute.xlu0 %724
      %v727 = vsel %vm497, %v723, 0
      %v730 = vsel %vm497, %v725, 0
      %732 = vmatpush.bf16.xpose.msra.mxu0 0
      %733 = vmatpush.bf16.xpose.msra.mxu0 0
      %734 = vmatpush.bf16.xpose.msra.mxu0 0
      %735 = vmatpush.bf16.xpose.msra.mxu0 0
      %736 = vmatpush.bf16.xpose.msra.mxu0 0
      %737 = vmatpush.bf16.xpose.msra.mxu0 0
      %738 = vmatpush.bf16.xpose.msra.mxu0 0
      %739 = vmatpush.bf16.xpose.msra.mxu0 %v730
      %740 = vmatmul.bf16.gmra.mxu0 %v727
      %v741 = vpop.f32.mrf.mxu0
      %v742 = vadd.f32 %v719, %v741
      %v743 = vpop.f32.mrf.mxu0
      %744 = vdwg.mxu0
      %v745 = vmul.f32 %v742, 0.14433756
      %v746 = vsel %vm451, %v745, -1e+30
      %v747 = vsel %vm444, %v746, -inf
      %748 = vmax.xlane.f32.xlu0 %v747
      %v749 = vpop.xlane.xlu0 %748
      %v750 = vsub.f32 %v746, %v749
      %v751 = vmul.f32 %v750, 1.442695
      %v752 = vpow.pop %v751
      %v753 = vsel %vm444, %v752, 0.0
      %754 = vadd.xlane.f32.xlu0 %v753
      %v755 = vpop.xlane.xlu0 %754
      %v756 = vrcp.pop %v755
      %v757 = vmul.f32 %v752, %v756
      %v758 = vpack.c.bf16 %v757, %v757
      %759 = vrot.lane.b32.xlu0 %v648, 64
      %v760 = vpop.permute.xlu0 %759
      %v762 = vsel %vm444, %v758, 0
      %v765 = vsel %vm534, %v760, 0
      %767 = vmatpush.bf16.msra.mxu0 0
      %768 = vmatpush.bf16.msra.mxu0 0
      %769 = vmatpush.bf16.msra.mxu0 0
      %770 = vmatpush.bf16.msra.mxu0 0
      %771 = vmatpush.bf16.msra.mxu0 0
      %772 = vmatpush.bf16.msra.mxu0 0
      %773 = vmatpush.bf16.msra.mxu0 0
      %774 = vmatpush.bf16.msra.mxu0 %v765
      %775 = vmatmul.bf16.gmra.mxu0 %v762
      %v776 = vpop.f32.mrf.mxu0
      %v777 = vadd.f32 0.0, %v776
      %v778 = vpop.f32.mrf.mxu0
      %779 = vdwg.mxu0
      %780 = vrot.lane.b32.xlu0 %v414, 48
      %v781 = vpop.permute.xlu0 %780
      %v783 = vmul.f32 %v455, %v781
      %784 = vrot.lane.b32.xlu0 %v415, 56
      %v785 = vpop.permute.xlu0 %784
      %v787 = vmul.f32 %v455, %v785
      %789 = vrot.lane.b32.xlu0 %v787, 120
      %v790 = vpop.permute.xlu0 %789
      %v792 = vsub.f32 %v783, %v790
      %793 = vrot.lane.b32.xlu0 %v415, 48
      %v794 = vpop.permute.xlu0 %793
      %v796 = vmul.f32 %v455, %v794
      %797 = vrot.lane.b32.xlu0 %v414, 56
      %v798 = vpop.permute.xlu0 %797
      %v800 = vmul.f32 %v455, %v798
      %802 = vrot.lane.b32.xlu0 %v800, 120
      %v803 = vpop.permute.xlu0 %802
      %v805 = vadd.f32 %v796, %v803
      %807 = vrot.lane.b32.xlu0 %v792, 80
      %v808 = vpop.permute.xlu0 %807
      %811 = vrot.lane.b32.xlu0 %v805, 88
      %v812 = vpop.permute.xlu0 %811
      %v814 = vsel %vm444, %v808, %v812
      %v815 = vpack.c.bf16 %v814, %v814
      %v817 = vsel %vm477, %v815, 0
      %819 = vmatpush.bf16.xpose.msra.mxu0 0
      %820 = vmatpush.bf16.xpose.msra.mxu0 0
      %821 = vmatpush.bf16.xpose.msra.mxu0 0
      %822 = vmatpush.bf16.xpose.msra.mxu0 0
      %823 = vmatpush.bf16.xpose.msra.mxu0 0
      %824 = vmatpush.bf16.xpose.msra.mxu0 0
      %825 = vmatpush.bf16.xpose.msra.mxu0 0
      %826 = vmatpush.bf16.xpose.msra.mxu0 %v482
      %827 = vmatmul.bf16.gmra.mxu0 %v817
      %v828 = vpop.f32.mrf.mxu0
      %v829 = vadd.f32 0.0, %v828
      %v830 = vpop.f32.mrf.mxu0
      %831 = vdwg.mxu0
      %832 = vrot.lane.b32.xlu0 %v605, 32
      %v833 = vpop.permute.xlu0 %832
      %834 = vrot.lane.b32.xlu0 %v610, 32
      %v835 = vpop.permute.xlu0 %834
      %v837 = vsel %vm497, %v833, 0
      %v840 = vsel %vm497, %v835, 0
      %842 = vmatpush.bf16.xpose.msra.mxu0 0
      %843 = vmatpush.bf16.xpose.msra.mxu0 0
      %844 = vmatpush.bf16.xpose.msra.mxu0 0
      %845 = vmatpush.bf16.xpose.msra.mxu0 0
      %846 = vmatpush.bf16.xpose.msra.mxu0 0
      %847 = vmatpush.bf16.xpose.msra.mxu0 0
      %848 = vmatpush.bf16.xpose.msra.mxu0 0
      %849 = vmatpush.bf16.xpose.msra.mxu0 %v840
      %850 = vmatmul.bf16.gmra.mxu0 %v837
      %v851 = vpop.f32.mrf.mxu0
      %v852 = vadd.f32 %v829, %v851
      %v853 = vpop.f32.mrf.mxu0
      %854 = vdwg.mxu0
      %v855 = vmul.f32 %v852, 0.14433756
      %v856 = vsel %vm451, %v855, -1e+30
      %v857 = vsel %vm444, %v856, -inf
      %858 = vmax.xlane.f32.xlu0 %v857
      %v859 = vpop.xlane.xlu0 %858
      %v860 = vsub.f32 %v856, %v859
      %v861 = vmul.f32 %v860, 1.442695
      %v862 = vpow.pop %v861
      %v863 = vsel %vm444, %v862, 0.0
      %864 = vadd.xlane.f32.xlu0 %v863
      %v865 = vpop.xlane.xlu0 %864
      %v866 = vrcp.pop %v865
      %v867 = vmul.f32 %v862, %v866
      %v868 = vpack.c.bf16 %v867, %v867
      %869 = vrot.lane.b32.xlu0 %v648, 32
      %v870 = vpop.permute.xlu0 %869
      %v872 = vsel %vm444, %v868, 0
      %v875 = vsel %vm534, %v870, 0
      %877 = vmatpush.bf16.msra.mxu0 0
      %878 = vmatpush.bf16.msra.mxu0 0
      %879 = vmatpush.bf16.msra.mxu0 0
      %880 = vmatpush.bf16.msra.mxu0 0
      %881 = vmatpush.bf16.msra.mxu0 0
      %882 = vmatpush.bf16.msra.mxu0 0
      %883 = vmatpush.bf16.msra.mxu0 0
      %884 = vmatpush.bf16.msra.mxu0 %v875
      %885 = vmatmul.bf16.gmra.mxu0 %v872
      %v886 = vpop.f32.mrf.mxu0
      %v887 = vadd.f32 0.0, %v886
      %v888 = vpop.f32.mrf.mxu0
      %889 = vdwg.mxu0
      %891 = vrot.lane.b32.xlu0 %v667, 32
      %v892 = vpop.permute.xlu0 %891
      %895 = vrot.lane.b32.xlu0 %v777, 64
      %v896 = vpop.permute.xlu0 %895
      %899 = vrot.lane.b32.xlu0 %v887, 96
      %v900 = vpop.permute.xlu0 %899
      %v902 = vsel %vm497, %v548, %v892
      %vm903 = vcmask 523264
      %v904 = vsel %vm903, %v902, %v896
      %vm905 = vcmask 785408
      %v906 = vsel %vm905, %v904, %v900
      %v907 = vpack.c.bf16 %v906, %v906
      %v908 = vld [vmem:[%s8] sm:$0xf]
      %v909 = vld [vmem:[%s8 + $0x4] sm:$0xf]
      %v910 = vld [vmem:[%s8 + $0x8] sm:$0xf]
      %v911 = vld [vmem:[%s8 + $0xc] sm:$0xf]
      %v912 = vld [vmem:[%s8 + $0x10] sm:$0xf]
      %v913 = vld [vmem:[%s8 + $0x14] sm:$0xf]
      %v914 = vld [vmem:[%s8 + $0x18] sm:$0xf]
      %v915 = vld [vmem:[%s8 + $0x1c] sm:$0xf]
      %v916 = vld [vmem:[%s8 + $0x20] sm:$0xf]
      %v917 = vld [vmem:[%s8 + $0x24] sm:$0xf]
      %v918 = vld [vmem:[%s8 + $0x28] sm:$0xf]
      %v919 = vld [vmem:[%s8 + $0x2c] sm:$0xf]
      %v920 = vld [vmem:[%s8 + $0x30] sm:$0xf]
      %v921 = vld [vmem:[%s8 + $0x34] sm:$0xf]
      %v922 = vld [vmem:[%s8 + $0x38] sm:$0xf]
      %v923 = vld [vmem:[%s8 + $0x3c] sm:$0xf]
      %v940 = vunpack.c.l.b16 %v908
      %v941 = vunpack.c.l.b16 %v909
      %v942 = vunpack.c.l.b16 %v910
      %v943 = vunpack.c.l.b16 %v911
      %v944 = vunpack.c.l.b16 %v912
      %v945 = vunpack.c.l.b16 %v913
      %v946 = vunpack.c.l.b16 %v914
      %v947 = vunpack.c.l.b16 %v915
      %v948 = vunpack.c.l.b16 %v916
      %v949 = vunpack.c.l.b16 %v917
      %v950 = vunpack.c.l.b16 %v918
      %v951 = vunpack.c.l.b16 %v919
      %v952 = vunpack.c.l.b16 %v920
      %v953 = vunpack.c.l.b16 %v921
      %v954 = vunpack.c.l.b16 %v922
      %v955 = vunpack.c.l.b16 %v923
      %v956 = vpack.c.b16 %v941, %v940
      %v957 = vpack.c.b16 %v943, %v942
      %v958 = vpack.c.b16 %v945, %v944
      %v959 = vpack.c.b16 %v947, %v946
      %v960 = vpack.c.b16 %v949, %v948
      %v961 = vpack.c.b16 %v951, %v950
      %v962 = vpack.c.b16 %v953, %v952
      %v963 = vpack.c.b16 %v955, %v954
      %972 = vmatpush.bf16.msra.mxu0 %v963
      %973 = vmatpush.bf16.msra.mxu0 %v962
      %974 = vmatpush.bf16.msra.mxu0 %v961
      %975 = vmatpush.bf16.msra.mxu0 %v960
      %976 = vmatpush.bf16.msra.mxu0 %v959
      %977 = vmatpush.bf16.msra.mxu0 %v958
      %978 = vmatpush.bf16.msra.mxu0 %v957
      %979 = vmatpush.bf16.msra.mxu0 %v956
      %980 = vmatmul.bf16.gmra.mxu0 %v907
      %v981 = vpop.f32.mrf.mxu0
      %v982 = vadd.f32 0.0, %v981
      %v983 = vpop.f32.mrf.mxu0
      %984 = vdwg.mxu0
      %v985 = vld [vmem:[%s408] sm:$0xff]
      %v986 = vadd.f32 %v985, %v982
      %987 = vst.msk [vmem:[%s412] sm:$0xff] %vm903, %v986
      %p988 = scmp.lt.s32.totalorder %s20, 1
      %s989 = scalar_select %p988, %s20, 1
      %s990 = smul.addr %s989, 8
      %s991 = scalar_lea.vmem %s9, %s990
      // Predicated region
      $region57: #{_lambda_.4} parent=55 // pred_check
        %p992 = pneg %p257
      $region58: #{_lambda_.4} parent=55 // pred_check_branch
        %994 = sbr.rel (%p992) target = $region60
      $region59: #{_lambda_.4} parent=55 // pred_region
        _
      $region60: #{_lambda_.4} parent=55 // pred_fallthru
        _
    $region56: #{_lambda_.4} parent=5 // pred_fallthru
      _
    %p995 = scmp.le.s32.totalorder 2, %s15
    // Predicated region
    $region61: #{_lambda_.4} parent=5 // pred_check
      %p996 = pneg %p995
    $region62: #{_lambda_.4} parent=5 // pred_check_branch
      %998 = sbr.rel (%p996) target = $region64
    $region63: #{_lambda_.4} parent=5 // pred_region
      %s999 = ssub.s32 %s15, 2
      // Predicated region
      $region65: #{_lambda_.4} parent=63 // pred_check
        %p1000 = pneg %p263
      $region66: #{_lambda_.4} parent=63 // pred_check_branch
        %1002 = sbr.rel (%p1000) target = $region68
      $region67: #{_lambda_.4} parent=63 // pred_region
        %p1003 = scmp.lt.s32.totalorder %s21, 1
        %s1004 = scalar_select %p1003, %s21, 1
        %s1005 = smul.addr %s1004, 8
        %s1006 = scalar_lea.vmem %s9, %s1005
      $region68: #{_lambda_.4} parent=63 // pred_fallthru
        _
    $region64: #{_lambda_.4} parent=5 // pred_fallthru
      _
  $region6: #{_lambda_.4} parent=0 // loop_footer
    %s19 = sadd.s32 1, %s15
  $region7: #{_lambda_.4} parent=0 // loop_footer_branch
    %14 = sbr.rel target = $region3
  $region8: #{_lambda_.4} parent=0 // loop_exit
    _

</llo_original>
